<compile_context>
chip_gen: v6e
topology: v6e:2x2x1
jax: 0.10.0
libtpu: 0.0.40
codegen_flags: <defaults>
</compile_context>

<pallas_src>
import math

import jax
import jax.numpy as jnp
from jax.experimental import pallas as pl
from jax.experimental.pallas import tpu as pltpu


# ----------------------------------------------------------------------------
# Init-time kernel: synthetic generator.style = Linear(512,512) + leaky_relu.
# TODO(synk): the real StyleGAN mapping net is an 8-layer MLP; a single fused
# layer is used here as a deterministic synthetic stand-in.
# ----------------------------------------------------------------------------
def _style_matmul_kernel(x_ref, w_ref, b_ref, o_ref):
    # K=512 fits one MXU pass -> no reduction axis, no accumulator scratch.
    y = jnp.dot(x_ref[...], w_ref[...], preferred_element_type=jnp.float32)
    y = y + b_ref[...]
    # leaky_relu(0.2), as in StyleGAN's fused_leaky_relu
    o_ref[...] = jnp.where(y > 0, y, 0.2 * y).astype(o_ref.dtype)


def style_forward(x, w, b, *, tm=512):
    M, K = x.shape
    Kw, N = w.shape
    assert K == Kw
    tm = min(tm, M)
    # bf16 operands feed the MXU at full rate on v5e/v6e/v7x; accum stays f32.
    x16 = x.astype(jnp.bfloat16)
    w16 = w.astype(jnp.bfloat16)
    b2d = b.astype(jnp.float32).reshape(1, N)
    return pl.pallas_call(
        _style_matmul_kernel,
        out_shape=jax.ShapeDtypeStruct((M, N), jnp.float32),
        grid_spec=pltpu.PrefetchScalarGridSpec(
            num_scalar_prefetch=0,
            grid=(pl.cdiv(M, tm),),
            in_specs=[
                pl.BlockSpec((tm, K), lambda i: (i, 0)),
                pl.BlockSpec((K, N), lambda i: (0, 0)),   # whole weight resident
                pl.BlockSpec((1, N), lambda i: (0, 0)),
            ],
            out_specs=pl.BlockSpec((tm, N), lambda i: (i, 0)),
        ),
        compiler_params=pltpu.CompilerParams(
            dimension_semantics=("parallel",),
            vmem_limit_bytes=32 * 1024 * 1024,
        ),
    )(x16, w16, b2d)


# ----------------------------------------------------------------------------
# Forward kernel: out = latent + noise * ((latent_std*noise_strength) * ramp)
# ----------------------------------------------------------------------------
def _noiser_kernel(coeff0_ref, ramp_ref, latent_ref, noise_ref, out_ref):
    # Scalar-core math from SMEM: strength = (latent_std*noise_strength) * ramp
    strength = coeff0_ref[0] * ramp_ref[0]
    out_ref[...] = (
        latent_ref[...].astype(jnp.float32)
        + noise_ref[...].astype(jnp.float32) * strength
    ).astype(out_ref.dtype)


def _noiser_forward(latent, key, coeff0, ramp):
    """Draw Gaussian noise + scaled add, fused under one jit dispatch."""
    B, L, D = latent.shape
    M = B * L
    lat2d = latent.reshape(M, D)

    # Gaussian draw (see module-header TODO about moving it on-chip).
    noise2d = jax.random.normal(key, (M, D), dtype=latent.dtype)

    # Row tiling: <=512 rows per step, or the whole array if smaller
    # (full-dim exemption from the (8,128) rule).
    tm = M if M <= 512 else 512
    out2d = pl.pallas_call(
        _noiser_kernel,
        out_shape=jax.ShapeDtypeStruct((M, D), latent.dtype),
        grid_spec=pltpu.PrefetchScalarGridSpec(
            num_scalar_prefetch=0,
            grid=(pl.cdiv(M, tm),),
            in_specs=[
                pl.BlockSpec(memory_space=pltpu.MemorySpace.SMEM),
                pl.BlockSpec(memory_space=pltpu.MemorySpace.SMEM),
                pl.BlockSpec((tm, D), lambda i: (i, 0)),
                pl.BlockSpec((tm, D), lambda i: (i, 0)),
            ],
            out_specs=pl.BlockSpec((tm, D), lambda i: (i, 0)),
        ),
        compiler_params=pltpu.CompilerParams(
            dimension_semantics=("parallel",),
            vmem_limit_bytes=32 * 1024 * 1024,
        ),
    )(coeff0, ramp, lat2d, noise2d)
    return out2d.reshape(B, L, D)


_noiser_forward_jit = jax.jit(_noiser_forward)


class LatentNoiser:
    """JAX/Pallas port of the PyTorch LatentNoiser module."""

    def __init__(
        self,
        style_w,
        style_b,
        noise_ramp: float = 0.75,
        noise_strength: float = 0.05,
        n_mean_latent: int = 2048,
        init_key=None,
    ):
        self.noise_ramp = float(noise_ramp)
        self.noise_strength = float(noise_strength)

        if init_key is None:
            init_key = jax.random.PRNGKey(0)
        dim = style_w.shape[0]
        noise_sample = jax.random.normal(
            init_key, (n_mean_latent, dim), dtype=jnp.float32
        )
        # matmul hot path in Pallas; cheap one-time reductions stay in JAX glue.
        latent_out = style_forward(noise_sample, style_w, style_b)
        latent_mean = latent_out.mean(axis=0)
        latent_std = jnp.sqrt(
            ((latent_out - latent_mean) ** 2).sum() / n_mean_latent
        )
        self.latent_std = latent_std
        # latent_std * noise_strength folded once at init; lives on-device and
        # lands in SMEM every call with no per-call XLA op.
        self._coeff0 = (latent_std * noise_strength).reshape(1).astype(jnp.float32)

    def __call__(self, latent, t: float, key=None, seed: int = 1234):
        if key is None:
            key = jax.random.PRNGKey(seed)
        ramp = max(0.0, 1.0 - t / self.noise_ramp) ** 2
        ramp_arr = jnp.asarray([ramp], dtype=jnp.float32)
        return _noiser_forward_jit(latent, key, self._coeff0, ramp_arr)


if __name__ == "__main__":
    key = jax.random.PRNGKey(0)
    k_w, k_b, k_init, k_lat, k_noise = jax.random.split(key, 5)

    DIM = 512
    # Deterministic synthetic "style" linear layer parameters.
    style_w = jax.random.normal(k_w, (DIM, DIM), jnp.float32) / math.sqrt(DIM)
    style_b = jax.random.normal(k_b, (DIM,), jnp.float32) * 0.01

    noiser = LatentNoiser(
        style_w, style_b, noise_ramp=0.75, noise_strength=0.05,
        n_mean_latent=1024, init_key=k_init,
    )

    # latent: (batch=2, n_latent=8, 512), as in StyleGAN W+ space.
    latent = jax.random.normal(k_lat, (2, 8, DIM), jnp.float32)

    out = noiser(latent, t=0.3, key=k_noise)
    out = jax.block_until_ready(out)

    assert out.shape == latent.shape and out.dtype == latent.dtype
    # Sanity: perturbation magnitude should be on the order of strength.
    ramp = max(0.0, 1.0 - 0.3 / 0.75) ** 2
    strength = float(noiser.latent_std) * 0.05 * ramp
    delta_rms = float(jnp.sqrt(jnp.mean((out - latent) ** 2)))
    assert 0.2 * strength < delta_rms < 5.0 * strength, (delta_rms, strength)

    print("KERNEL_OK")
</pallas_src>

<mosaic_0001>
module attributes {stable_mosaic.version = 11 : i64} {
  func.func @_style_matmul_kernel(%arg0: i32, %arg1: memref<512x512xbf16, #tpu.memory_space<vmem>>, %arg2: memref<512x512xbf16, #tpu.memory_space<vmem>>, %arg3: memref<1x512xf32, #tpu.memory_space<vmem>>, %arg4: memref<512x512xf32, #tpu.memory_space<vmem>>) attributes {dimension_semantics = [#tpu.dimension_semantics<parallel>], iteration_bounds = array<i64: 2>, scalar_prefetch = 0 : i64, scratch_operands = 0 : i64, tpu.core_type = #tpu.core_type<tc>, window_params = [{transform_indices = @transform_0, window_bounds = array<i64: 512, 512>}, {pipeline_mode = #tpu.pipeline_mode<synchronous>, transform_indices = @transform_1, window_bounds = array<i64: 512, 512>}, {pipeline_mode = #tpu.pipeline_mode<synchronous>, transform_indices = @transform_2, window_bounds = array<i64: 1, 512>}, {transform_indices = @transform_3, window_bounds = array<i64: 512, 512>}]} {
    %c0 = arith.constant 0 : index
    %c0_0 = arith.constant 0 : index
    %0 = vector.load %arg1[%c0, %c0_0] : memref<512x512xbf16, #tpu.memory_space<vmem>>, vector<512x512xbf16>
    %c0_1 = arith.constant 0 : index
    %c0_2 = arith.constant 0 : index
    %1 = vector.load %arg2[%c0_1, %c0_2] : memref<512x512xbf16, #tpu.memory_space<vmem>>, vector<512x512xbf16>
    %cst = arith.constant dense<0.000000e+00> : vector<512x512xf32>
    %2 = tpu.matmul %0, %1, %cst {dimension_numbers = #tpu.dot_dimension_numbers<[1], [0], [0], [1], [0, 0, 1, 1], [], []>} : vector<512x512xbf16>, vector<512x512xbf16>, vector<512x512xf32> -> vector<512x512xf32>
    %c0_3 = arith.constant 0 : index
    %c0_4 = arith.constant 0 : index
    %3 = vector.load %arg3[%c0_3, %c0_4] : memref<1x512xf32, #tpu.memory_space<vmem>>, vector<1x512xf32>
    %4 = vector.broadcast %3 : vector<1x512xf32> to vector<512x512xf32>
    %5 = arith.addf %2, %4 : vector<512x512xf32>
    %cst_5 = arith.constant 0.000000e+00 : f32
    %6 = vector.broadcast %cst_5 : f32 to vector<512x512xf32>
    %7 = arith.cmpf ogt, %5, %6 : vector<512x512xf32>
    %cst_6 = arith.constant 2.000000e-01 : f32
    %8 = vector.broadcast %cst_6 : f32 to vector<512x512xf32>
    %9 = arith.mulf %8, %5 : vector<512x512xf32>
    %10 = arith.select %7, %5, %9 : vector<512x512xi1>, vector<512x512xf32>
    %c0_7 = arith.constant 0 : index
    %c0_8 = arith.constant 0 : index
    %11 = vector.load %arg4[%c0_7, %c0_8] : memref<512x512xf32, #tpu.memory_space<vmem>>, vector<512x512xf32>
    tpu.vector_store %arg4[%c0_7, %c0_8], %10 {strides = array<i32>} : memref<512x512xf32, #tpu.memory_space<vmem>>, vector<512x512xf32>,
    return
  }
  func.func @transform_0(%arg0: i32) -> (i32, i32) {
    %c0_i32 = arith.constant 0 : i32
    %c0_i32_0 = arith.constant 0 : i32
    return %arg0, %c0_i32 : i32, i32
  }
  func.func @transform_1(%arg0: i32) -> (i32, i32) {
    %c0_i32 = arith.constant 0 : i32
    %c0_i32_0 = arith.constant 0 : i32
    %c0_i32_1 = arith.constant 0 : i32
    return %c0_i32, %c0_i32_0 : i32, i32
  }
  func.func @transform_2(%arg0: i32) -> (i32, i32) {
    %c0_i32 = arith.constant 0 : i32
    %c0_i32_0 = arith.constant 0 : i32
    %c0_i32_1 = arith.constant 0 : i32
    return %c0_i32, %c0_i32_0 : i32, i32
  }
  func.func @transform_3(%arg0: i32) -> (i32, i32) {
    %c0_i32 = arith.constant 0 : i32
    %c0_i32_0 = arith.constant 0 : i32
    return %arg0, %c0_i32 : i32, i32
  }
}

</mosaic_0001>

<llo_original>
// kernel: tpu_custom_call.1
$region0: #{tpu_custom_call.1}
  #allocation0 [shape = 'u32[]', space=smem, size = 0x4, offset = 0x4, fixed_abs, tag = 'smem constant byte address 0x4 - core index']
  #allocation1 [shape = 'u32[144,128]{1,0:T(1,128)}', space=vmem, size = 0x12000, scoped, tag = 'internal scratch']
  %s0 = inlined_call_operand.hbm [shape: bf16[1024,512], index: 0, kind: input, shape index: {}]
  %s1 = inlined_call_operand.hbm [shape: bf16[512,512], index: 1, kind: input, shape index: {}]
  %s2 = inlined_call_operand.hbm [shape: f32[1,512], index: 2, kind: input, shape index: {}]
  %s3 = inlined_call_operand.hbm [shape: f32[1024,512], index: 3, kind: output, shape index: {}]
  %s4 = sld [smem:[#allocation0]]
  $region57: #{tpu_custom_call.1} parent=0
    _
  %s6 = ssub.s32 1, %s4
  %s7 = scalar_select 0, %s6, %s4
  $region1: #{tpu_custom_call.1} parent=0
    #allocation2 [shape = 'u8[1048576]{0}', space=vmem, size = 0x100000, scoped, tag = 'input window, operand 0']
    #allocation3 [shape = 's32[2]{0}', space=sflag, size = 0x8, scoped, tag = 'scoped memory for tpu_custom_call.1']
    #allocation4 [shape = 's32[2]{0}', space=sflag, size = 0x8, scoped, tag = 'scoped memory for tpu_custom_call.1']
    #allocation5 [shape = 'u8[524288]{0}', space=vmem, size = 0x80000, scoped, tag = 'input window, operand 1, single buffered']
    #allocation6 [shape = 's32[1]{0}', space=sflag, size = 0x4, scoped, tag = 'scoped memory for tpu_custom_call.1']
    #allocation7 [shape = 'u8[2048]{0}', space=vmem, size = 0x800, scoped, tag = 'input window, operand 2, single buffered']
    #allocation8 [shape = 'u8[2097152]{0}', space=vmem, size = 0x200000, scoped, tag = 'output window, operand 0']
    %8 = vsyncpa [#allocation3], 0
    %s9 = scalar_lea.sflag [#allocation3], 1
    %10 = vsyncpa %s9, 0
    %11 = vsyncpa [#allocation6], 0
    %12 = vsyncpa [#allocation4], 0
    %s13 = scalar_lea.sflag [#allocation4], 1
    %14 = vsyncpa %s13, 0
    loop: start=0, step=1, limit=4
    $region2: #{tpu_custom_call.1} parent=1 // loop_pre_header
      _
    $region3: #{tpu_custom_call.1} parent=1 // loop_header
      %s16 = sphi 0, %s20
      %p17 = scmp.ge.s32.totalorder %s16, 4
      %s26 = sphi 0, %s28
      %s29 = sphi 0, %s26
      %s30 = sphi 0, %s29
      %s46 = sphi 0, %s30
      %s50 = sphi 0, %s50
      %s52 = sphi 0, %s50
      %s53 = sphi 0, %s52
      %s67 = sphi 0, %s53
      %s71 = sphi 0, %s71
      %s73 = sphi 0, %s71
      %s74 = sphi 0, %s73
      %s88 = sphi 0, %s74
      %s94 = sphi 0, %s96
      %s97 = sphi 0, %s94
      %s98 = sphi 0, %s97
      %s114 = sphi 0, %s98
    $region4: #{tpu_custom_call.1} parent=1 // loop_header_branch
      %19 = sbr.rel (%p17) target = $region8
    $region5: #{tpu_custom_call.1} parent=1 // loop_body
      %s21 = ssub.s32 %s16, 1
      %s22 = ssub.s32 %s16, 2
      %s23 = sadd.s32 %s16, 1
      %s24 = ssub.s32 %s16, %s23
      %p25 = scmp.eq.s32.totalorder %s24, 0
      %s27 = sadd.s32 %s26, 1
      %s28 = scalar_select %p25, %s26, %s27
      %p31 = pneg %p25
      %p32 = scmp.eq.s32.totalorder %s16, 1
      %p33 = por %p31, %p32
      %p34 = scmp.ne.s32.totalorder %s26, %s29
      %p35 = scmp.eq.s32.totalorder %s16, 0
      %p36 = por %p34, %p35
      %p37 = scmp.ne.s32.totalorder %s26, %s29
      %p38 = scmp.eq.s32.totalorder %s21, 1
      %p39 = por %p37, %p38
      %p40 = scmp.ne.s32.totalorder %s29, %s30
      %p41 = scmp.eq.s32.totalorder %s21, 0
      %p42 = por %p40, %p41
      %p43 = scmp.ne.s32.totalorder %s29, %s30
      %p44 = scmp.eq.s32.totalorder %s22, 1
      %p45 = por %p43, %p44
      %p47 = scmp.ne.s32.totalorder %s30, %s46
      %p48 = scmp.eq.s32.totalorder %s22, 0
      %p49 = por %p47, %p48
      %s51 = sadd.s32 %s50, 1
      %p54 = scmp.eq.s32.totalorder %s16, 1
      %p55 = scmp.ne.s32.totalorder %s50, %s52
      %p56 = scmp.eq.s32.totalorder %s16, 0
      %p57 = por %p55, %p56
      %p58 = scmp.ne.s32.totalorder %s50, %s52
      %p59 = scmp.eq.s32.totalorder %s21, 1
      %p60 = por %p58, %p59
      %p61 = scmp.ne.s32.totalorder %s52, %s53
      %p62 = scmp.eq.s32.totalorder %s21, 0
      %p63 = por %p61, %p62
      %p64 = scmp.ne.s32.totalorder %s52, %s53
      %p65 = scmp.eq.s32.totalorder %s22, 1
      %p66 = por %p64, %p65
      %p68 = scmp.ne.s32.totalorder %s53, %s67
      %p69 = scmp.eq.s32.totalorder %s22, 0
      %p70 = por %p68, %p69
      %s72 = sadd.s32 %s71, 1
      %p75 = scmp.eq.s32.totalorder %s16, 1
      %p76 = scmp.ne.s32.totalorder %s71, %s73
      %p77 = scmp.eq.s32.totalorder %s16, 0
      %p78 = por %p76, %p77
      %p79 = scmp.ne.s32.totalorder %s71, %s73
      %p80 = scmp.eq.s32.totalorder %s21, 1
      %p81 = por %p79, %p80
      %p82 = scmp.ne.s32.totalorder %s73, %s74
      %p83 = scmp.eq.s32.totalorder %s21, 0
      %p84 = por %p82, %p83
      %p85 = scmp.ne.s32.totalorder %s73, %s74
      %p86 = scmp.eq.s32.totalorder %s22, 1
      %p87 = por %p85, %p86
      %p89 = scmp.ne.s32.totalorder %s74, %s88
      %p90 = scmp.eq.s32.totalorder %s22, 0
      %p91 = por %p89, %p90
      %s92 = ssub.s32 %s16, %s23
      %p93 = scmp.eq.s32.totalorder %s92, 0
      %s95 = sadd.s32 %s94, 1
      %s96 = scalar_select %p93, %s94, %s95
      %p99 = pneg %p93
      %p100 = scmp.eq.s32.totalorder %s16, 1
      %p101 = por %p99, %p100
      %p102 = scmp.ne.s32.totalorder %s94, %s97
      %p103 = scmp.eq.s32.totalorder %s16, 0
      %p104 = por %p102, %p103
      %p105 = scmp.ne.s32.totalorder %s94, %s97
      %p106 = scmp.eq.s32.totalorder %s21, 1
      %p107 = por %p105, %p106
      %p108 = scmp.ne.s32.totalorder %s97, %s98
      %p109 = scmp.eq.s32.totalorder %s21, 0
      %p110 = por %p108, %p109
      %p111 = scmp.ne.s32.totalorder %s97, %s98
      %p112 = scmp.eq.s32.totalorder %s22, 1
      %p113 = por %p111, %p112
      %p115 = scmp.ne.s32.totalorder %s98, %s114
      %p116 = scmp.eq.s32.totalorder %s22, 0
      %p117 = por %p115, %p116
      %p118 = scmp.le.s32.totalorder 1, %s16
      %p119 = scmp.lt.s32.totalorder %s16, 3
      %p120 = pnand %p118, %p119
      %p121 = pneg %p120
      // Predicated region
      $region9: #{tpu_custom_call.1} parent=5 // pred_check
        _
      $region10: #{tpu_custom_call.1} parent=5 // pred_check_branch
        %123 = sbr.rel (%p120) target = $region12
      $region11: #{tpu_custom_call.1} parent=5 // pred_region
        %s124 = ssub.s32 %s16, 1
        // Predicated region
        $region13: #{tpu_custom_call.1} parent=11 // pred_check
          %p125 = pneg %p63
        $region14: #{tpu_custom_call.1} parent=11 // pred_check_branch
          %127 = sbr.rel (%p125) target = $region16
        $region15: #{tpu_custom_call.1} parent=11 // pred_region
          %s129 = ssub.s32 16384, 16384
          %130 = vsyncadd [#allocation6], %s129
          %s131 = sshll.u32 [#allocation5], 4
          %s132 = int_to_ptr.vmem [resolvable:$true] %s131
          %137 = dma.hbm_to_vmem [thread:$0]  %s1, 16384, %s132, [#allocation6], 256, 256, 16
        $region16: #{tpu_custom_call.1} parent=11 // pred_fallthru
          _
        // Predicated region
        $region17: #{tpu_custom_call.1} parent=11 // pred_check
          %p138 = pneg %p84
        $region18: #{tpu_custom_call.1} parent=11 // pred_check_branch
          %140 = sbr.rel (%p138) target = $region20
        $region19: #{tpu_custom_call.1} parent=11 // pred_region
          %s142 = ssub.s32 64, 64
          %143 = vsyncadd [#allocation6], %s142
          %s145 = sshll.u32 [#allocation7], 4
          %s146 = int_to_ptr.vmem [resolvable:$true] %s145
          %148 = dma.hbm_to_vmem [thread:$0]  %s2, 64, %s146, [#allocation6]
        $region20: #{tpu_custom_call.1} parent=11 // pred_fallthru
          _
      $region12: #{tpu_custom_call.1} parent=5 // pred_fallthru
        _
      %p149 = scmp.lt.s32.totalorder %s16, 2
      // Predicated region
      $region21: #{tpu_custom_call.1} parent=5 // pred_check
        %p150 = pneg %p149
      $region22: #{tpu_custom_call.1} parent=5 // pred_check_branch
        %152 = sbr.rel (%p150) target = $region24
      $region23: #{tpu_custom_call.1} parent=5 // pred_region
        // Predicated region
        $region25: #{tpu_custom_call.1} parent=23 // pred_check
          %p153 = pneg %p36
        $region26: #{tpu_custom_call.1} parent=23 // pred_check_branch
          %155 = sbr.rel (%p153) target = $region28
        $region27: #{tpu_custom_call.1} parent=23 // pred_region
          %s156 = sand.u32 %s26, 1
          %s157 = scalar_lea.sflag [#allocation3], %s156
          %s158 = sand.u32 %s26, 1
          %s159 = smul.addr %s158, 1024
          %s160 = scalar_lea.vmem [#allocation2], %s159
          %s161 = smul.u32 64, %s16
          %s163 = ssub.s32 16384, 16384
          %164 = vsyncadd %s157, %s163
          %s165 = smul.addr %s161, 4
          %s166 = smul.addr %s165, 64
          %s167 = scalar_lea.hbm %s0, %s166
          %s168 = sshll.u32 %s160, 4
          %s169 = int_to_ptr.vmem [resolvable:$true] %s168
          %174 = dma.hbm_to_vmem [thread:$0]  %s167, 16384, %s169, %s157, 256, 256, 16
        $region28: #{tpu_custom_call.1} parent=23 // pred_fallthru
          _
      $region24: #{tpu_custom_call.1} parent=5 // pred_fallthru
        _
      %p175 = scmp.le.s32.totalorder 1, %s16
      %p176 = scmp.lt.s32.totalorder %s16, 3
      %p177 = pnand %p175, %p176
      %p178 = pneg %p177
      // Predicated region
      $region29: #{tpu_custom_call.1} parent=5 // pred_check
        _
      $region30: #{tpu_custom_call.1} parent=5 // pred_check_branch
        %180 = sbr.rel (%p177) target = $region32
      $region31: #{tpu_custom_call.1} parent=5 // pred_region
        %s181 = ssub.s32 %s16, 1
        %s182 = sand.u32 %s29, 1
        %s183 = scalar_lea.sflag [#allocation3], %s182
        %s184 = sand.u32 %s29, 1
        %s185 = smul.addr %s184, 1024
        %s186 = scalar_lea.vmem [#allocation2], %s185
        // Predicated region
        $region33: #{tpu_custom_call.1} parent=31 // pred_check
          %p187 = pneg %p42
        $region34: #{tpu_custom_call.1} parent=31 // pred_check_branch
          %189 = sbr.rel (%p187) target = $region36
        $region35: #{tpu_custom_call.1} parent=31 // pred_region
          %190 = dma.done %s183, 16384
        $region36: #{tpu_custom_call.1} parent=31 // pred_fallthru
          _
        // Predicated region
        $region37: #{tpu_custom_call.1} parent=31 // pred_check
          %p191 = pneg %p63
        $region38: #{tpu_custom_call.1} parent=31 // pred_check_branch
          %193 = sbr.rel (%p191) target = $region40
        $region39: #{tpu_custom_call.1} parent=31 // pred_region
          %194 = dma.done [#allocation6], 16384
        $region40: #{tpu_custom_call.1} parent=31 // pred_fallthru
          _
        // Predicated region
        $region41: #{tpu_custom_call.1} parent=31 // pred_check
          %p195 = pneg %p84
        $region42: #{tpu_custom_call.1} parent=31 // pred_check_branch
          %197 = sbr.rel (%p195) target = $region44
        $region43: #{tpu_custom_call.1} parent=31 // pred_region
          %198 = dma.done [#allocation6], 64
        $region44: #{tpu_custom_call.1} parent=31 // pred_fallthru
          _
        %s199 = sand.u32 %s29, 1
        %s200 = scalar_lea.sflag [#allocation3], %s199
        %s201 = sand.u32 %s29, 1
        %s202 = smul.addr %s201, 1024
        %s203 = scalar_lea.vmem [#allocation2], %s202
        %p204 = pneg %p42
        %p205 = pneg %p39
        %p206 = pneg %p63
        %p207 = pneg %p60
        %p208 = pneg %p84
        %p209 = pneg %p81
        %p210 = pneg %p110
        %p211 = pneg %p107
        %s212 = sand.u32 %s97, 1
        %s213 = scalar_lea.sflag [#allocation4], %s212
        %s214 = sand.u32 %s97, 1
        %s215 = smul.addr %s214, 2048
        %s216 = scalar_lea.vmem [#allocation8], %s215
        %s217 = smul.u32 64, %s21
        %s218 = smul.u32 64, %s21
        %v219 = vld [vmem:[%s186] sm:$0xff]
        %v220 = vld [vmem:[%s186 + $0x8] sm:$0xff]
        %v221 = vld [vmem:[%s186 + $0x10] sm:$0xff]
        %v222 = vld [vmem:[%s186 + $0x18] sm:$0xff]
        %v223 = vld [vmem:[%s186 + $0x20] sm:$0xff]
        %v224 = vld [vmem:[%s186 + $0x28] sm:$0xff]
        %v225 = vld [vmem:[%s186 + $0x30] sm:$0xff]
        %v226 = vld [vmem:[%s186 + $0x38] sm:$0xff]
        %v227 = vld [vmem:[%s186 + $0x40] sm:$0xff]
        %v228 = vld [vmem:[%s186 + $0x48] sm:$0xff]
        %v229 = vld [vmem:[%s186 + $0x50] sm:$0xff]
        %v230 = vld [vmem:[%s186 + $0x58] sm:$0xff]
        %v231 = vld [vmem:[%s186 + $0x60] sm:$0xff]
        %v232 = vld [vmem:[%s186 + $0x68] sm:$0xff]
        %v233 = vld [vmem:[%s186 + $0x70] sm:$0xff]
        %v234 = vld [vmem:[%s186 + $0x78] sm:$0xff]
        %v235 = vld [vmem:[%s186 + $0x80] sm:$0xff]
        %v236 = vld [vmem:[%s186 + $0x88] sm:$0xff]
        %v237 = vld [vmem:[%s186 + $0x90] sm:$0xff]
        %v238 = vld [vmem:[%s186 + $0x98] sm:$0xff]
        %v239 = vld [vmem:[%s186 + $0xa0] sm:$0xff]
        %v240 = vld [vmem:[%s186 + $0xa8] sm:$0xff]
        %v241 = vld [vmem:[%s186 + $0xb0] sm:$0xff]
        %v242 = vld [vmem:[%s186 + $0xb8] sm:$0xff]
        %v243 = vld [vmem:[%s186 + $0xc0] sm:$0xff]
        %v244 = vld [vmem:[%s186 + $0xc8] sm:$0xff]
        %v245 = vld [vmem:[%s186 + $0xd0] sm:$0xff]
        %v246 = vld [vmem:[%s186 + $0xd8] sm:$0xff]
        %v247 = vld [vmem:[%s186 + $0xe0] sm:$0xff]
        %v248 = vld [vmem:[%s186 + $0xe8] sm:$0xff]
        %v249 = vld [vmem:[%s186 + $0xf0] sm:$0xff]
        %v250 = vld [vmem:[%s186 + $0xf8] sm:$0xff]
        %v251 = vld [vmem:[%s186 + $0x100] sm:$0xff]
        %v252 = vld [vmem:[%s186 + $0x108] sm:$0xff]
        %v253 = vld [vmem:[%s186 + $0x110] sm:$0xff]
        %v254 = vld [vmem:[%s186 + $0x118] sm:$0xff]
        %v255 = vld [vmem:[%s186 + $0x120] sm:$0xff]
        %v256 = vld [vmem:[%s186 + $0x128] sm:$0xff]
        %v257 = vld [vmem:[%s186 + $0x130] sm:$0xff]
        %v258 = vld [vmem:[%s186 + $0x138] sm:$0xff]
        %v259 = vld [vmem:[%s186 + $0x140] sm:$0xff]
        %v260 = vld [vmem:[%s186 + $0x148] sm:$0xff]
        %v261 = vld [vmem:[%s186 + $0x150] sm:$0xff]
        %v262 = vld [vmem:[%s186 + $0x158] sm:$0xff]
        %v263 = vld [vmem:[%s186 + $0x160] sm:$0xff]
        %v264 = vld [vmem:[%s186 + $0x168] sm:$0xff]
        %v265 = vld [vmem:[%s186 + $0x170] sm:$0xff]
        %v266 = vld [vmem:[%s186 + $0x178] sm:$0xff]
        %v267 = vld [vmem:[%s186 + $0x180] sm:$0xff]
        %v268 = vld [vmem:[%s186 + $0x188] sm:$0xff]
        %v269 = vld [vmem:[%s186 + $0x190] sm:$0xff]
        %v270 = vld [vmem:[%s186 + $0x198] sm:$0xff]
        %v271 = vld [vmem:[%s186 + $0x1a0] sm:$0xff]
        %v272 = vld [vmem:[%s186 + $0x1a8] sm:$0xff]
        %v273 = vld [vmem:[%s186 + $0x1b0] sm:$0xff]
        %v274 = vld [vmem:[%s186 + $0x1b8] sm:$0xff]
        %v275 = vld [vmem:[%s186 + $0x1c0] sm:$0xff]
        %v276 = vld [vmem:[%s186 + $0x1c8] sm:$0xff]
        %v277 = vld [vmem:[%s186 + $0x1d0] sm:$0xff]
        %v278 = vld [vmem:[%s186 + $0x1d8] sm:$0xff]
        %v279 = vld [vmem:[%s186 + $0x1e0] sm:$0xff]
        %v280 = vld [vmem:[%s186 + $0x1e8] sm:$0xff]
        %v281 = vld [vmem:[%s186 + $0x1f0] sm:$0xff]
        %v282 = vld [vmem:[%s186 + $0x1f8] sm:$0xff]
        %v283 = vld [vmem:[%s186 + $0x200] sm:$0xff]
        %v284 = vld [vmem:[%s186 + $0x208] sm:$0xff]
        %v285 = vld [vmem:[%s186 + $0x210] sm:$0xff]
        %v286 = vld [vmem:[%s186 + $0x218] sm:$0xff]
        %v287 = vld [vmem:[%s186 + $0x220] sm:$0xff]
        %v288 = vld [vmem:[%s186 + $0x228] sm:$0xff]
        %v289 = vld [vmem:[%s186 + $0x230] sm:$0xff]
        %v290 = vld [vmem:[%s186 + $0x238] sm:$0xff]
        %v291 = vld [vmem:[%s186 + $0x240] sm:$0xff]
        %v292 = vld [vmem:[%s186 + $0x248] sm:$0xff]
        %v293 = vld [vmem:[%s186 + $0x250] sm:$0xff]
        %v294 = vld [vmem:[%s186 + $0x258] sm:$0xff]
        %v295 = vld [vmem:[%s186 + $0x260] sm:$0xff]
        %v296 = vld [vmem:[%s186 + $0x268] sm:$0xff]
        %v297 = vld [vmem:[%s186 + $0x270] sm:$0xff]
        %v298 = vld [vmem:[%s186 + $0x278] sm:$0xff]
        %v299 = vld [vmem:[%s186 + $0x280] sm:$0xff]
        %v300 = vld [vmem:[%s186 + $0x288] sm:$0xff]
        %v301 = vld [vmem:[%s186 + $0x290] sm:$0xff]
        %v302 = vld [vmem:[%s186 + $0x298] sm:$0xff]
        %v303 = vld [vmem:[%s186 + $0x2a0] sm:$0xff]
        %v304 = vld [vmem:[%s186 + $0x2a8] sm:$0xff]
        %v305 = vld [vmem:[%s186 + $0x2b0] sm:$0xff]
        %v306 = vld [vmem:[%s186 + $0x2b8] sm:$0xff]
        %v307 = vld [vmem:[%s186 + $0x2c0] sm:$0xff]
        %v308 = vld [vmem:[%s186 + $0x2c8] sm:$0xff]
        %v309 = vld [vmem:[%s186 + $0x2d0] sm:$0xff]
        %v310 = vld [vmem:[%s186 + $0x2d8] sm:$0xff]
        %v311 = vld [vmem:[%s186 + $0x2e0] sm:$0xff]
        %v312 = vld [vmem:[%s186 + $0x2e8] sm:$0xff]
        %v313 = vld [vmem:[%s186 + $0x2f0] sm:$0xff]
        %v314 = vld [vmem:[%s186 + $0x2f8] sm:$0xff]
        %v315 = vld [vmem:[%s186 + $0x300] sm:$0xff]
        %v316 = vld [vmem:[%s186 + $0x308] sm:$0xff]
        %v317 = vld [vmem:[%s186 + $0x310] sm:$0xff]
        %v318 = vld [vmem:[%s186 + $0x318] sm:$0xff]
        %v319 = vld [vmem:[%s186 + $0x320] sm:$0xff]
        %v320 = vld [vmem:[%s186 + $0x328] sm:$0xff]
        %v321 = vld [vmem:[%s186 + $0x330] sm:$0xff]
        %v322 = vld [vmem:[%s186 + $0x338] sm:$0xff]
        %v323 = vld [vmem:[%s186 + $0x340] sm:$0xff]
        %v324 = vld [vmem:[%s186 + $0x348] sm:$0xff]
        %v325 = vld [vmem:[%s186 + $0x350] sm:$0xff]
        %v326 = vld [vmem:[%s186 + $0x358] sm:$0xff]
        %v327 = vld [vmem:[%s186 + $0x360] sm:$0xff]
        %v328 = vld [vmem:[%s186 + $0x368] sm:$0xff]
        %v329 = vld [vmem:[%s186 + $0x370] sm:$0xff]
        %v330 = vld [vmem:[%s186 + $0x378] sm:$0xff]
        %v331 = vld [vmem:[%s186 + $0x380] sm:$0xff]
        %v332 = vld [vmem:[%s186 + $0x388] sm:$0xff]
        %v333 = vld [vmem:[%s186 + $0x390] sm:$0xff]
        %v334 = vld [vmem:[%s186 + $0x398] sm:$0xff]
        %v335 = vld [vmem:[%s186 + $0x3a0] sm:$0xff]
        %v336 = vld [vmem:[%s186 + $0x3a8] sm:$0xff]
        %v337 = vld [vmem:[%s186 + $0x3b0] sm:$0xff]
        %v338 = vld [vmem:[%s186 + $0x3b8] sm:$0xff]
        %v339 = vld [vmem:[%s186 + $0x3c0] sm:$0xff]
        %v340 = vld [vmem:[%s186 + $0x3c8] sm:$0xff]
        %v341 = vld [vmem:[%s186 + $0x3d0] sm:$0xff]
        %v342 = vld [vmem:[%s186 + $0x3d8] sm:$0xff]
        %v343 = vld [vmem:[%s186 + $0x3e0] sm:$0xff]
        %v344 = vld [vmem:[%s186 + $0x3e8] sm:$0xff]
        %v345 = vld [vmem:[%s186 + $0x3f0] sm:$0xff]
        %v346 = vld [vmem:[%s186 + $0x3f8] sm:$0xff]
        %v347 = vld [vmem:[#allocation5] sm:$0xff]
        %v348 = vld [vmem:[#allocation5 + $0x8] sm:$0xff]
        %v349 = vld [vmem:[#allocation5 + $0x10] sm:$0xff]
        %v350 = vld [vmem:[#allocation5 + $0x18] sm:$0xff]
        %v351 = vld [vmem:[#allocation5 + $0x20] sm:$0xff]
        %v352 = vld [vmem:[#allocation5 + $0x28] sm:$0xff]
        %v353 = vld [vmem:[#allocation5 + $0x30] sm:$0xff]
        %v354 = vld [vmem:[#allocation5 + $0x38] sm:$0xff]
        %v355 = vld [vmem:[#allocation5 + $0x40] sm:$0xff]
        %v356 = vld [vmem:[#allocation5 + $0x48] sm:$0xff]
        %v357 = vld [vmem:[#allocation5 + $0x50] sm:$0xff]
        %v358 = vld [vmem:[#allocation5 + $0x58] sm:$0xff]
        %v359 = vld [vmem:[#allocation5 + $0x60] sm:$0xff]
        %v360 = vld [vmem:[#allocation5 + $0x68] sm:$0xff]
        %v361 = vld [vmem:[#allocation5 + $0x70] sm:$0xff]
        %v362 = vld [vmem:[#allocation5 + $0x78] sm:$0xff]
        %v363 = vld [vmem:[#allocation5 + $0x80] sm:$0xff]
        %v364 = vld [vmem:[#allocation5 + $0x88] sm:$0xff]
        %v365 = vld [vmem:[#allocation5 + $0x90] sm:$0xff]
        %v366 = vld [vmem:[#allocation5 + $0x98] sm:$0xff]
        %v367 = vld [vmem:[#allocation5 + $0xa0] sm:$0xff]
        %v368 = vld [vmem:[#allocation5 + $0xa8] sm:$0xff]
        %v369 = vld [vmem:[#allocation5 + $0xb0] sm:$0xff]
        %v370 = vld [vmem:[#allocation5 + $0xb8] sm:$0xff]
        %v371 = vld [vmem:[#allocation5 + $0xc0] sm:$0xff]
        %v372 = vld [vmem:[#allocation5 + $0xc8] sm:$0xff]
        %v373 = vld [vmem:[#allocation5 + $0xd0] sm:$0xff]
        %v374 = vld [vmem:[#allocation5 + $0xd8] sm:$0xff]
        %v375 = vld [vmem:[#allocation5 + $0xe0] sm:$0xff]
        %v376 = vld [vmem:[#allocation5 + $0xe8] sm:$0xff]
        %v377 = vld [vmem:[#allocation5 + $0xf0] sm:$0xff]
        %v378 = vld [vmem:[#allocation5 + $0xf8] sm:$0xff]
        %v379 = vld [vmem:[#allocation5 + $0x100] sm:$0xff]
        %v380 = vld [vmem:[#allocation5 + $0x108] sm:$0xff]
        %v381 = vld [vmem:[#allocation5 + $0x110] sm:$0xff]
        %v382 = vld [vmem:[#allocation5 + $0x118] sm:$0xff]
        %v383 = vld [vmem:[#allocation5 + $0x120] sm:$0xff]
        %v384 = vld [vmem:[#allocation5 + $0x128] sm:$0xff]
        %v385 = vld [vmem:[#allocation5 + $0x130] sm:$0xff]
        %v386 = vld [vmem:[#allocation5 + $0x138] sm:$0xff]
        %v387 = vld [vmem:[#allocation5 + $0x140] sm:$0xff]
        %v388 = vld [vmem:[#allocation5 + $0x148] sm:$0xff]
        %v389 = vld [vmem:[#allocation5 + $0x150] sm:$0xff]
        %v390 = vld [vmem:[#allocation5 + $0x158] sm:$0xff]
        %v391 = vld [vmem:[#allocation5 + $0x160] sm:$0xff]
        %v392 = vld [vmem:[#allocation5 + $0x168] sm:$0xff]
        %v393 = vld [vmem:[#allocation5 + $0x170] sm:$0xff]
        %v394 = vld [vmem:[#allocation5 + $0x178] sm:$0xff]
        %v395 = vld [vmem:[#allocation5 + $0x180] sm:$0xff]
        %v396 = vld [vmem:[#allocation5 + $0x188] sm:$0xff]
        %v397 = vld [vmem:[#allocation5 + $0x190] sm:$0xff]
        %v398 = vld [vmem:[#allocation5 + $0x198] sm:$0xff]
        %v399 = vld [vmem:[#allocation5 + $0x1a0] sm:$0xff]
        %v400 = vld [vmem:[#allocation5 + $0x1a8] sm:$0xff]
        %v401 = vld [vmem:[#allocation5 + $0x1b0] sm:$0xff]
        %v402 = vld [vmem:[#allocation5 + $0x1b8] sm:$0xff]
        %v403 = vld [vmem:[#allocation5 + $0x1c0] sm:$0xff]
        %v404 = vld [vmem:[#allocation5 + $0x1c8] sm:$0xff]
        %v405 = vld [vmem:[#allocation5 + $0x1d0] sm:$0xff]
        %v406 = vld [vmem:[#allocation5 + $0x1d8] sm:$0xff]
        %v407 = vld [vmem:[#allocation5 + $0x1e0] sm:$0xff]
        %v408 = vld [vmem:[#allocation5 + $0x1e8] sm:$0xff]
        %v409 = vld [vmem:[#allocation5 + $0x1f0] sm:$0xff]
        %v410 = vld [vmem:[#allocation5 + $0x1f8] sm:$0xff]
        %v411 = vld [vmem:[#allocation5 + $0x200] sm:$0xff]
        %v412 = vld [vmem:[#allocation5 + $0x208] sm:$0xff]
        %v413 = vld [vmem:[#allocation5 + $0x210] sm:$0xff]
        %v414 = vld [vmem:[#allocation5 + $0x218] sm:$0xff]
        %v415 = vld [vmem:[#allocation5 + $0x220] sm:$0xff]
        %v416 = vld [vmem:[#allocation5 + $0x228] sm:$0xff]
        %v417 = vld [vmem:[#allocation5 + $0x230] sm:$0xff]
        %v418 = vld [vmem:[#allocation5 + $0x238] sm:$0xff]
        %v419 = vld [vmem:[#allocation5 + $0x240] sm:$0xff]
        %v420 = vld [vmem:[#allocation5 + $0x248] sm:$0xff]
        %v421 = vld [vmem:[#allocation5 + $0x250] sm:$0xff]
        %v422 = vld [vmem:[#allocation5 + $0x258] sm:$0xff]
        %v423 = vld [vmem:[#allocation5 + $0x260] sm:$0xff]
        %v424 = vld [vmem:[#allocation5 + $0x268] sm:$0xff]
        %v425 = vld [vmem:[#allocation5 + $0x270] sm:$0xff]
        %v426 = vld [vmem:[#allocation5 + $0x278] sm:$0xff]
        %v427 = vld [vmem:[#allocation5 + $0x280] sm:$0xff]
        %v428 = vld [vmem:[#allocation5 + $0x288] sm:$0xff]
        %v429 = vld [vmem:[#allocation5 + $0x290] sm:$0xff]
        %v430 = vld [vmem:[#allocation5 + $0x298] sm:$0xff]
        %v431 = vld [vmem:[#allocation5 + $0x2a0] sm:$0xff]
        %v432 = vld [vmem:[#allocation5 + $0x2a8] sm:$0xff]
        %v433 = vld [vmem:[#allocation5 + $0x2b0] sm:$0xff]
        %v434 = vld [vmem:[#allocation5 + $0x2b8] sm:$0xff]
        %v435 = vld [vmem:[#allocation5 + $0x2c0] sm:$0xff]
        %v436 = vld [vmem:[#allocation5 + $0x2c8] sm:$0xff]
        %v437 = vld [vmem:[#allocation5 + $0x2d0] sm:$0xff]
        %v438 = vld [vmem:[#allocation5 + $0x2d8] sm:$0xff]
        %v439 = vld [vmem:[#allocation5 + $0x2e0] sm:$0xff]
        %v440 = vld [vmem:[#allocation5 + $0x2e8] sm:$0xff]
        %v441 = vld [vmem:[#allocation5 + $0x2f0] sm:$0xff]
        %v442 = vld [vmem:[#allocation5 + $0x2f8] sm:$0xff]
        %v443 = vld [vmem:[#allocation5 + $0x300] sm:$0xff]
        %v444 = vld [vmem:[#allocation5 + $0x308] sm:$0xff]
        %v445 = vld [vmem:[#allocation5 + $0x310] sm:$0xff]
        %v446 = vld [vmem:[#allocation5 + $0x318] sm:$0xff]
        %v447 = vld [vmem:[#allocation5 + $0x320] sm:$0xff]
        %v448 = vld [vmem:[#allocation5 + $0x328] sm:$0xff]
        %v449 = vld [vmem:[#allocation5 + $0x330] sm:$0xff]
        %v450 = vld [vmem:[#allocation5 + $0x338] sm:$0xff]
        %v451 = vld [vmem:[#allocation5 + $0x340] sm:$0xff]
        %v452 = vld [vmem:[#allocation5 + $0x348] sm:$0xff]
        %v453 = vld [vmem:[#allocation5 + $0x350] sm:$0xff]
        %v454 = vld [vmem:[#allocation5 + $0x358] sm:$0xff]
        %v455 = vld [vmem:[#allocation5 + $0x360] sm:$0xff]
        %v456 = vld [vmem:[#allocation5 + $0x368] sm:$0xff]
        %v457 = vld [vmem:[#allocation5 + $0x370] sm:$0xff]
        %v458 = vld [vmem:[#allocation5 + $0x378] sm:$0xff]
        %v459 = vld [vmem:[#allocation5 + $0x380] sm:$0xff]
        %v460 = vld [vmem:[#allocation5 + $0x388] sm:$0xff]
        %v461 = vld [vmem:[#allocation5 + $0x390] sm:$0xff]
        %v462 = vld [vmem:[#allocation5 + $0x398] sm:$0xff]
        %v463 = vld [vmem:[#allocation5 + $0x3a0] sm:$0xff]
        %v464 = vld [vmem:[#allocation5 + $0x3a8] sm:$0xff]
        %v465 = vld [vmem:[#allocation5 + $0x3b0] sm:$0xff]
        %v466 = vld [vmem:[#allocation5 + $0x3b8] sm:$0xff]
        %v467 = vld [vmem:[#allocation5 + $0x3c0] sm:$0xff]
        %v468 = vld [vmem:[#allocation5 + $0x3c8] sm:$0xff]
        %v469 = vld [vmem:[#allocation5 + $0x3d0] sm:$0xff]
        %v470 = vld [vmem:[#allocation5 + $0x3d8] sm:$0xff]
        %v471 = vld [vmem:[#allocation5 + $0x3e0] sm:$0xff]
        %v472 = vld [vmem:[#allocation5 + $0x3e8] sm:$0xff]
        %v473 = vld [vmem:[#allocation5 + $0x3f0] sm:$0xff]
        %v474 = vld [vmem:[#allocation5 + $0x3f8] sm:$0xff]
        %v475 = vld [vmem:[#allocation7] sm:$0xf]
        %v477 = vlaneseq
        %v478 = vshrl.u32 %v477, 7
        %v479 = vsub.s32 0, %v478
        %v480 = vrot.slane %v475, %v479
        %v481 = vlaneseq
        %v482 = vshrl.u32 %v481, 7
        %v483 = vsub.s32 1, %v482
        %v484 = vrot.slane %v475, %v483
        %v485 = vlaneseq
        %v486 = vshrl.u32 %v485, 7
        %v487 = vsub.s32 2, %v486
        %v488 = vrot.slane %v475, %v487
        %v489 = vlaneseq
        %v490 = vshrl.u32 %v489, 7
        %v491 = vsub.s32 3, %v490
        %v492 = vrot.slane %v475, %v491
        %v625 = vunpack.c.l.b16 %v219
        %v626 = vunpack.c.h.b16 %v219
        %v627 = vunpack.c.l.b16 %v220
        %v628 = vunpack.c.h.b16 %v220
        %v629 = vunpack.c.l.b16 %v221
        %v630 = vunpack.c.h.b16 %v221
        %v631 = vunpack.c.l.b16 %v222
        %v632 = vunpack.c.h.b16 %v222
        %v633 = vunpack.c.l.b16 %v223
        %v634 = vunpack.c.h.b16 %v223
        %v635 = vunpack.c.l.b16 %v224
        %v636 = vunpack.c.h.b16 %v224
        %v637 = vunpack.c.l.b16 %v225
        %v638 = vunpack.c.h.b16 %v225
        %v639 = vunpack.c.l.b16 %v226
        %v640 = vunpack.c.h.b16 %v226
        %v641 = vunpack.c.l.b16 %v227
        %v642 = vunpack.c.h.b16 %v227
        %v643 = vunpack.c.l.b16 %v228
        %v644 = vunpack.c.h.b16 %v228
        %v645 = vunpack.c.l.b16 %v229
        %v646 = vunpack.c.h.b16 %v229
        %v647 = vunpack.c.l.b16 %v230
        %v648 = vunpack.c.h.b16 %v230
        %v649 = vunpack.c.l.b16 %v231
        %v650 = vunpack.c.h.b16 %v231
        %v651 = vunpack.c.l.b16 %v232
        %v652 = vunpack.c.h.b16 %v232
        %v653 = vunpack.c.l.b16 %v233
        %v654 = vunpack.c.h.b16 %v233
        %v655 = vunpack.c.l.b16 %v234
        %v656 = vunpack.c.h.b16 %v234
        %v657 = vunpack.c.l.b16 %v235
        %v658 = vunpack.c.h.b16 %v235
        %v659 = vunpack.c.l.b16 %v236
        %v660 = vunpack.c.h.b16 %v236
        %v661 = vunpack.c.l.b16 %v237
        %v662 = vunpack.c.h.b16 %v237
        %v663 = vunpack.c.l.b16 %v238
        %v664 = vunpack.c.h.b16 %v238
        %v665 = vunpack.c.l.b16 %v239
        %v666 = vunpack.c.h.b16 %v239
        %v667 = vunpack.c.l.b16 %v240
        %v668 = vunpack.c.h.b16 %v240
        %v669 = vunpack.c.l.b16 %v241
        %v670 = vunpack.c.h.b16 %v241
        %v671 = vunpack.c.l.b16 %v242
        %v672 = vunpack.c.h.b16 %v242
        %v673 = vunpack.c.l.b16 %v243
        %v674 = vunpack.c.h.b16 %v243
        %v675 = vunpack.c.l.b16 %v244
        %v676 = vunpack.c.h.b16 %v244
        %v677 = vunpack.c.l.b16 %v245
        %v678 = vunpack.c.h.b16 %v245
        %v679 = vunpack.c.l.b16 %v246
        %v680 = vunpack.c.h.b16 %v246
        %v681 = vunpack.c.l.b16 %v247
        %v682 = vunpack.c.h.b16 %v247
        %v683 = vunpack.c.l.b16 %v248
        %v684 = vunpack.c.h.b16 %v248
        %v685 = vunpack.c.l.b16 %v249
        %v686 = vunpack.c.h.b16 %v249
        %v687 = vunpack.c.l.b16 %v250
        %v688 = vunpack.c.h.b16 %v250
        %v689 = vunpack.c.l.b16 %v251
        %v690 = vunpack.c.h.b16 %v251
        %v691 = vunpack.c.l.b16 %v252
        %v692 = vunpack.c.h.b16 %v252
        %v693 = vunpack.c.l.b16 %v253
        %v694 = vunpack.c.h.b16 %v253
        %v695 = vunpack.c.l.b16 %v254
        %v696 = vunpack.c.h.b16 %v254
        %v697 = vunpack.c.l.b16 %v255
        %v698 = vunpack.c.h.b16 %v255
        %v699 = vunpack.c.l.b16 %v256
        %v700 = vunpack.c.h.b16 %v256
        %v701 = vunpack.c.l.b16 %v257
        %v702 = vunpack.c.h.b16 %v257
        %v703 = vunpack.c.l.b16 %v258
        %v704 = vunpack.c.h.b16 %v258
        %v705 = vunpack.c.l.b16 %v259
        %v706 = vunpack.c.h.b16 %v259
        %v707 = vunpack.c.l.b16 %v260
        %v708 = vunpack.c.h.b16 %v260
        %v709 = vunpack.c.l.b16 %v261
        %v710 = vunpack.c.h.b16 %v261
        %v711 = vunpack.c.l.b16 %v262
        %v712 = vunpack.c.h.b16 %v262
        %v713 = vunpack.c.l.b16 %v263
        %v714 = vunpack.c.h.b16 %v263
        %v715 = vunpack.c.l.b16 %v264
        %v716 = vunpack.c.h.b16 %v264
        %v717 = vunpack.c.l.b16 %v265
        %v718 = vunpack.c.h.b16 %v265
        %v719 = vunpack.c.l.b16 %v266
        %v720 = vunpack.c.h.b16 %v266
        %v721 = vunpack.c.l.b16 %v267
        %v722 = vunpack.c.h.b16 %v267
        %v723 = vunpack.c.l.b16 %v268
        %v724 = vunpack.c.h.b16 %v268
        %v725 = vunpack.c.l.b16 %v269
        %v726 = vunpack.c.h.b16 %v269
        %v727 = vunpack.c.l.b16 %v270
        %v728 = vunpack.c.h.b16 %v270
        %v729 = vunpack.c.l.b16 %v271
        %v730 = vunpack.c.h.b16 %v271
        %v731 = vunpack.c.l.b16 %v272
        %v732 = vunpack.c.h.b16 %v272
        %v733 = vunpack.c.l.b16 %v273
        %v734 = vunpack.c.h.b16 %v273
        %v735 = vunpack.c.l.b16 %v274
        %v736 = vunpack.c.h.b16 %v274
        %v737 = vunpack.c.l.b16 %v275
        %v738 = vunpack.c.h.b16 %v275
        %v739 = vunpack.c.l.b16 %v276
        %v740 = vunpack.c.h.b16 %v276
        %v741 = vunpack.c.l.b16 %v277
        %v742 = vunpack.c.h.b16 %v277
        %v743 = vunpack.c.l.b16 %v278
        %v744 = vunpack.c.h.b16 %v278
        %v745 = vunpack.c.l.b16 %v279
        %v746 = vunpack.c.h.b16 %v279
        %v747 = vunpack.c.l.b16 %v280
        %v748 = vunpack.c.h.b16 %v280
        %v749 = vunpack.c.l.b16 %v281
        %v750 = vunpack.c.h.b16 %v281
        %v751 = vunpack.c.l.b16 %v282
        %v752 = vunpack.c.h.b16 %v282
        %v753 = vunpack.c.l.b16 %v283
        %v754 = vunpack.c.h.b16 %v283
        %v755 = vunpack.c.l.b16 %v284
        %v756 = vunpack.c.h.b16 %v284
        %v757 = vunpack.c.l.b16 %v285
        %v758 = vunpack.c.h.b16 %v285
        %v759 = vunpack.c.l.b16 %v286
        %v760 = vunpack.c.h.b16 %v286
        %v761 = vunpack.c.l.b16 %v287
        %v762 = vunpack.c.h.b16 %v287
        %v763 = vunpack.c.l.b16 %v288
        %v764 = vunpack.c.h.b16 %v288
        %v765 = vunpack.c.l.b16 %v289
        %v766 = vunpack.c.h.b16 %v289
        %v767 = vunpack.c.l.b16 %v290
        %v768 = vunpack.c.h.b16 %v290
        %v769 = vunpack.c.l.b16 %v291
        %v770 = vunpack.c.h.b16 %v291
        %v771 = vunpack.c.l.b16 %v292
        %v772 = vunpack.c.h.b16 %v292
        %v773 = vunpack.c.l.b16 %v293
        %v774 = vunpack.c.h.b16 %v293
        %v775 = vunpack.c.l.b16 %v294
        %v776 = vunpack.c.h.b16 %v294
        %v777 = vunpack.c.l.b16 %v295
        %v778 = vunpack.c.h.b16 %v295
        %v779 = vunpack.c.l.b16 %v296
        %v780 = vunpack.c.h.b16 %v296
        %v781 = vunpack.c.l.b16 %v297
        %v782 = vunpack.c.h.b16 %v297
        %v783 = vunpack.c.l.b16 %v298
        %v784 = vunpack.c.h.b16 %v298
        %v785 = vunpack.c.l.b16 %v299
        %v786 = vunpack.c.h.b16 %v299
        %v787 = vunpack.c.l.b16 %v300
        %v788 = vunpack.c.h.b16 %v300
        %v789 = vunpack.c.l.b16 %v301
        %v790 = vunpack.c.h.b16 %v301
        %v791 = vunpack.c.l.b16 %v302
        %v792 = vunpack.c.h.b16 %v302
        %v793 = vunpack.c.l.b16 %v303
        %v794 = vunpack.c.h.b16 %v303
        %v795 = vunpack.c.l.b16 %v304
        %v796 = vunpack.c.h.b16 %v304
        %v797 = vunpack.c.l.b16 %v305
        %v798 = vunpack.c.h.b16 %v305
        %v799 = vunpack.c.l.b16 %v306
        %v800 = vunpack.c.h.b16 %v306
        %v801 = vunpack.c.l.b16 %v307
        %v802 = vunpack.c.h.b16 %v307
        %v803 = vunpack.c.l.b16 %v308
        %v804 = vunpack.c.h.b16 %v308
        %v805 = vunpack.c.l.b16 %v309
        %v806 = vunpack.c.h.b16 %v309
        %v807 = vunpack.c.l.b16 %v310
        %v808 = vunpack.c.h.b16 %v310
        %v809 = vunpack.c.l.b16 %v311
        %v810 = vunpack.c.h.b16 %v311
        %v811 = vunpack.c.l.b16 %v312
        %v812 = vunpack.c.h.b16 %v312
        %v813 = vunpack.c.l.b16 %v313
        %v814 = vunpack.c.h.b16 %v313
        %v815 = vunpack.c.l.b16 %v314
        %v816 = vunpack.c.h.b16 %v314
        %v817 = vunpack.c.l.b16 %v315
        %v818 = vunpack.c.h.b16 %v315
        %v819 = vunpack.c.l.b16 %v316
        %v820 = vunpack.c.h.b16 %v316
        %v821 = vunpack.c.l.b16 %v317
        %v822 = vunpack.c.h.b16 %v317
        %v823 = vunpack.c.l.b16 %v318
        %v824 = vunpack.c.h.b16 %v318
        %v825 = vunpack.c.l.b16 %v319
        %v826 = vunpack.c.h.b16 %v319
        %v827 = vunpack.c.l.b16 %v320
        %v828 = vunpack.c.h.b16 %v320
        %v829 = vunpack.c.l.b16 %v321
        %v830 = vunpack.c.h.b16 %v321
        %v831 = vunpack.c.l.b16 %v322
        %v832 = vunpack.c.h.b16 %v322
        %v833 = vunpack.c.l.b16 %v323
        %v834 = vunpack.c.h.b16 %v323
        %v835 = vunpack.c.l.b16 %v324
        %v836 = vunpack.c.h.b16 %v324
        %v837 = vunpack.c.l.b16 %v325
        %v838 = vunpack.c.h.b16 %v325
        %v839 = vunpack.c.l.b16 %v326
        %v840 = vunpack.c.h.b16 %v326
        %v841 = vunpack.c.l.b16 %v327
        %v842 = vunpack.c.h.b16 %v327
        %v843 = vunpack.c.l.b16 %v328
        %v844 = vunpack.c.h.b16 %v328
        %v845 = vunpack.c.l.b16 %v329
        %v846 = vunpack.c.h.b16 %v329
        %v847 = vunpack.c.l.b16 %v330
        %v848 = vunpack.c.h.b16 %v330
        %v849 = vunpack.c.l.b16 %v331
        %v850 = vunpack.c.h.b16 %v331
        %v851 = vunpack.c.l.b16 %v332
        %v852 = vunpack.c.h.b16 %v332
        %v853 = vunpack.c.l.b16 %v333
        %v854 = vunpack.c.h.b16 %v333
        %v855 = vunpack.c.l.b16 %v334
        %v856 = vunpack.c.h.b16 %v334
        %v857 = vunpack.c.l.b16 %v335
        %v858 = vunpack.c.h.b16 %v335
        %v859 = vunpack.c.l.b16 %v336
        %v860 = vunpack.c.h.b16 %v336
        %v861 = vunpack.c.l.b16 %v337
        %v862 = vunpack.c.h.b16 %v337
        %v863 = vunpack.c.l.b16 %v338
        %v864 = vunpack.c.h.b16 %v338
        %v865 = vunpack.c.l.b16 %v339
        %v866 = vunpack.c.h.b16 %v339
        %v867 = vunpack.c.l.b16 %v340
        %v868 = vunpack.c.h.b16 %v340
        %v869 = vunpack.c.l.b16 %v341
        %v870 = vunpack.c.h.b16 %v341
        %v871 = vunpack.c.l.b16 %v342
        %v872 = vunpack.c.h.b16 %v342
        %v873 = vunpack.c.l.b16 %v343
        %v874 = vunpack.c.h.b16 %v343
        %v875 = vunpack.c.l.b16 %v344
        %v876 = vunpack.c.h.b16 %v344
        %v877 = vunpack.c.l.b16 %v345
        %v878 = vunpack.c.h.b16 %v345
        %v879 = vunpack.c.l.b16 %v346
        %v880 = vunpack.c.h.b16 %v346
        %v881 = vpack.c.b16 %v629, %v625
        %v882 = vpack.c.b16 %v630, %v626
        %v883 = vpack.c.b16 %v631, %v627
        %v884 = vpack.c.b16 %v632, %v628
        %v885 = vpack.c.b16 %v637, %v633
        %v886 = vpack.c.b16 %v638, %v634
        %v887 = vpack.c.b16 %v639, %v635
        %v888 = vpack.c.b16 %v640, %v636
        %v889 = vpack.c.b16 %v645, %v641
        %v890 = vpack.c.b16 %v646, %v642
        %v891 = vpack.c.b16 %v647, %v643
        %v892 = vpack.c.b16 %v648, %v644
        %v893 = vpack.c.b16 %v653, %v649
        %v894 = vpack.c.b16 %v654, %v650
        %v895 = vpack.c.b16 %v655, %v651
        %v896 = vpack.c.b16 %v656, %v652
        %v897 = vpack.c.b16 %v661, %v657
        %v898 = vpack.c.b16 %v662, %v658
        %v899 = vpack.c.b16 %v663, %v659
        %v900 = vpack.c.b16 %v664, %v660
        %v901 = vpack.c.b16 %v669, %v665
        %v902 = vpack.c.b16 %v670, %v666
        %v903 = vpack.c.b16 %v671, %v667
        %v904 = vpack.c.b16 %v672, %v668
        %v905 = vpack.c.b16 %v677, %v673
        %v906 = vpack.c.b16 %v678, %v674
        %v907 = vpack.c.b16 %v679, %v675
        %v908 = vpack.c.b16 %v680, %v676
        %v909 = vpack.c.b16 %v685, %v681
        %v910 = vpack.c.b16 %v686, %v682
        %v911 = vpack.c.b16 %v687, %v683
        %v912 = vpack.c.b16 %v688, %v684
        %v913 = vpack.c.b16 %v693, %v689
        %v914 = vpack.c.b16 %v694, %v690
        %v915 = vpack.c.b16 %v695, %v691
        %v916 = vpack.c.b16 %v696, %v692
        %v917 = vpack.c.b16 %v701, %v697
        %v918 = vpack.c.b16 %v702, %v698
        %v919 = vpack.c.b16 %v703, %v699
        %v920 = vpack.c.b16 %v704, %v700
        %v921 = vpack.c.b16 %v709, %v705
        %v922 = vpack.c.b16 %v710, %v706
        %v923 = vpack.c.b16 %v711, %v707
        %v924 = vpack.c.b16 %v712, %v708
        %v925 = vpack.c.b16 %v717, %v713
        %v926 = vpack.c.b16 %v718, %v714
        %v927 = vpack.c.b16 %v719, %v715
        %v928 = vpack.c.b16 %v720, %v716
        %v929 = vpack.c.b16 %v725, %v721
        %v930 = vpack.c.b16 %v726, %v722
        %v931 = vpack.c.b16 %v727, %v723
        %v932 = vpack.c.b16 %v728, %v724
        %v933 = vpack.c.b16 %v733, %v729
        %v934 = vpack.c.b16 %v734, %v730
        %v935 = vpack.c.b16 %v735, %v731
        %v936 = vpack.c.b16 %v736, %v732
        %v937 = vpack.c.b16 %v741, %v737
        %v938 = vpack.c.b16 %v742, %v738
        %v939 = vpack.c.b16 %v743, %v739
        %v940 = vpack.c.b16 %v744, %v740
        %v941 = vpack.c.b16 %v749, %v745
        %v942 = vpack.c.b16 %v750, %v746
        %v943 = vpack.c.b16 %v751, %v747
        %v944 = vpack.c.b16 %v752, %v748
        %v945 = vpack.c.b16 %v757, %v753
        %v946 = vpack.c.b16 %v758, %v754
        %v947 = vpack.c.b16 %v759, %v755
        %v948 = vpack.c.b16 %v760, %v756
        %v949 = vpack.c.b16 %v765, %v761
        %v950 = vpack.c.b16 %v766, %v762
        %v951 = vpack.c.b16 %v767, %v763
        %v952 = vpack.c.b16 %v768, %v764
        %v953 = vpack.c.b16 %v773, %v769
        %v954 = vpack.c.b16 %v774, %v770
        %v955 = vpack.c.b16 %v775, %v771
        %v956 = vpack.c.b16 %v776, %v772
        %v957 = vpack.c.b16 %v781, %v777
        %v958 = vpack.c.b16 %v782, %v778
        %v959 = vpack.c.b16 %v783, %v779
        %v960 = vpack.c.b16 %v784, %v780
        %v961 = vpack.c.b16 %v789, %v785
        %v962 = vpack.c.b16 %v790, %v786
        %v963 = vpack.c.b16 %v791, %v787
        %v964 = vpack.c.b16 %v792, %v788
        %v965 = vpack.c.b16 %v797, %v793
        %v966 = vpack.c.b16 %v798, %v794
        %v967 = vpack.c.b16 %v799, %v795
        %v968 = vpack.c.b16 %v800, %v796
        %v969 = vpack.c.b16 %v805, %v801
        %v970 = vpack.c.b16 %v806, %v802
        %v971 = vpack.c.b16 %v807, %v803
        %v972 = vpack.c.b16 %v808, %v804
        %v973 = vpack.c.b16 %v813, %v809
        %v974 = vpack.c.b16 %v814, %v810
        %v975 = vpack.c.b16 %v815, %v811
        %v976 = vpack.c.b16 %v816, %v812
        %v977 = vpack.c.b16 %v821, %v817
        %v978 = vpack.c.b16 %v822, %v818
        %v979 = vpack.c.b16 %v823, %v819
        %v980 = vpack.c.b16 %v824, %v820
        %v981 = vpack.c.b16 %v829, %v825
        %v982 = vpack.c.b16 %v830, %v826
        %v983 = vpack.c.b16 %v831, %v827
        %v984 = vpack.c.b16 %v832, %v828
        %v985 = vpack.c.b16 %v837, %v833
        %v986 = vpack.c.b16 %v838, %v834
        %v987 = vpack.c.b16 %v839, %v835
        %v988 = vpack.c.b16 %v840, %v836
        %v989 = vpack.c.b16 %v845, %v841
        %v990 = vpack.c.b16 %v846, %v842
        %v991 = vpack.c.b16 %v847, %v843
        %v992 = vpack.c.b16 %v848, %v844
        %v993 = vpack.c.b16 %v853, %v849
        %v994 = vpack.c.b16 %v854, %v850
        %v995 = vpack.c.b16 %v855, %v851
        %v996 = vpack.c.b16 %v856, %v852
        %v997 = vpack.c.b16 %v861, %v857
        %v998 = vpack.c.b16 %v862, %v858
        %v999 = vpack.c.b16 %v863, %v859
        %v1000 = vpack.c.b16 %v864, %v860
        %v1001 = vpack.c.b16 %v869, %v865
        %v1002 = vpack.c.b16 %v870, %v866
        %v1003 = vpack.c.b16 %v871, %v867
        %v1004 = vpack.c.b16 %v872, %v868
        %v1005 = vpack.c.b16 %v877, %v873
        %v1006 = vpack.c.b16 %v878, %v874
        %v1007 = vpack.c.b16 %v879, %v875
        %v1008 = vpack.c.b16 %v880, %v876
        %v1265 = vunpack.c.l.b16 %v347
        %v1266 = vunpack.c.h.b16 %v347
        %v1267 = vunpack.c.l.b16 %v348
        %v1268 = vunpack.c.h.b16 %v348
        %v1269 = vunpack.c.l.b16 %v349
        %v1270 = vunpack.c.h.b16 %v349
        %v1271 = vunpack.c.l.b16 %v350
        %v1272 = vunpack.c.h.b16 %v350
        %v1273 = vunpack.c.l.b16 %v351
        %v1274 = vunpack.c.h.b16 %v351
        %v1275 = vunpack.c.l.b16 %v352
        %v1276 = vunpack.c.h.b16 %v352
        %v1277 = vunpack.c.l.b16 %v353
        %v1278 = vunpack.c.h.b16 %v353
        %v1279 = vunpack.c.l.b16 %v354
        %v1280 = vunpack.c.h.b16 %v354
        %v1281 = vunpack.c.l.b16 %v355
        %v1282 = vunpack.c.h.b16 %v355
        %v1283 = vunpack.c.l.b16 %v356
        %v1284 = vunpack.c.h.b16 %v356
        %v1285 = vunpack.c.l.b16 %v357
        %v1286 = vunpack.c.h.b16 %v357
        %v1287 = vunpack.c.l.b16 %v358
        %v1288 = vunpack.c.h.b16 %v358
        %v1289 = vunpack.c.l.b16 %v359
        %v1290 = vunpack.c.h.b16 %v359
        %v1291 = vunpack.c.l.b16 %v360
        %v1292 = vunpack.c.h.b16 %v360
        %v1293 = vunpack.c.l.b16 %v361
        %v1294 = vunpack.c.h.b16 %v361
        %v1295 = vunpack.c.l.b16 %v362
        %v1296 = vunpack.c.h.b16 %v362
        %v1297 = vunpack.c.l.b16 %v363
        %v1298 = vunpack.c.h.b16 %v363
        %v1299 = vunpack.c.l.b16 %v364
        %v1300 = vunpack.c.h.b16 %v364
        %v1301 = vunpack.c.l.b16 %v365
        %v1302 = vunpack.c.h.b16 %v365
        %v1303 = vunpack.c.l.b16 %v366
        %v1304 = vunpack.c.h.b16 %v366
        %v1305 = vunpack.c.l.b16 %v367
        %v1306 = vunpack.c.h.b16 %v367
        %v1307 = vunpack.c.l.b16 %v368
        %v1308 = vunpack.c.h.b16 %v368
        %v1309 = vunpack.c.l.b16 %v369
        %v1310 = vunpack.c.h.b16 %v369
        %v1311 = vunpack.c.l.b16 %v370
        %v1312 = vunpack.c.h.b16 %v370
        %v1313 = vunpack.c.l.b16 %v371
        %v1314 = vunpack.c.h.b16 %v371
        %v1315 = vunpack.c.l.b16 %v372
        %v1316 = vunpack.c.h.b16 %v372
        %v1317 = vunpack.c.l.b16 %v373
        %v1318 = vunpack.c.h.b16 %v373
        %v1319 = vunpack.c.l.b16 %v374
        %v1320 = vunpack.c.h.b16 %v374
        %v1321 = vunpack.c.l.b16 %v375
        %v1322 = vunpack.c.h.b16 %v375
        %v1323 = vunpack.c.l.b16 %v376
        %v1324 = vunpack.c.h.b16 %v376
        %v1325 = vunpack.c.l.b16 %v377
        %v1326 = vunpack.c.h.b16 %v377
        %v1327 = vunpack.c.l.b16 %v378
        %v1328 = vunpack.c.h.b16 %v378
        %v1329 = vunpack.c.l.b16 %v379
        %v1330 = vunpack.c.h.b16 %v379
        %v1331 = vunpack.c.l.b16 %v380
        %v1332 = vunpack.c.h.b16 %v380
        %v1333 = vunpack.c.l.b16 %v381
        %v1334 = vunpack.c.h.b16 %v381
        %v1335 = vunpack.c.l.b16 %v382
        %v1336 = vunpack.c.h.b16 %v382
        %v1337 = vunpack.c.l.b16 %v383
        %v1338 = vunpack.c.h.b16 %v383
        %v1339 = vunpack.c.l.b16 %v384
        %v1340 = vunpack.c.h.b16 %v384
        %v1341 = vunpack.c.l.b16 %v385
        %v1342 = vunpack.c.h.b16 %v385
        %v1343 = vunpack.c.l.b16 %v386
        %v1344 = vunpack.c.h.b16 %v386
        %v1345 = vunpack.c.l.b16 %v387
        %v1346 = vunpack.c.h.b16 %v387
        %v1347 = vunpack.c.l.b16 %v388
        %v1348 = vunpack.c.h.b16 %v388
        %v1349 = vunpack.c.l.b16 %v389
        %v1350 = vunpack.c.h.b16 %v389
        %v1351 = vunpack.c.l.b16 %v390
        %v1352 = vunpack.c.h.b16 %v390
        %v1353 = vunpack.c.l.b16 %v391
        %v1354 = vunpack.c.h.b16 %v391
        %v1355 = vunpack.c.l.b16 %v392
        %v1356 = vunpack.c.h.b16 %v392
        %v1357 = vunpack.c.l.b16 %v393
        %v1358 = vunpack.c.h.b16 %v393
        %v1359 = vunpack.c.l.b16 %v394
        %v1360 = vunpack.c.h.b16 %v394
        %v1361 = vunpack.c.l.b16 %v395
        %v1362 = vunpack.c.h.b16 %v395
        %v1363 = vunpack.c.l.b16 %v396
        %v1364 = vunpack.c.h.b16 %v396
        %v1365 = vunpack.c.l.b16 %v397
        %v1366 = vunpack.c.h.b16 %v397
        %v1367 = vunpack.c.l.b16 %v398
        %v1368 = vunpack.c.h.b16 %v398
        %v1369 = vunpack.c.l.b16 %v399
        %v1370 = vunpack.c.h.b16 %v399
        %v1371 = vunpack.c.l.b16 %v400
        %v1372 = vunpack.c.h.b16 %v400
        %v1373 = vunpack.c.l.b16 %v401
        %v1374 = vunpack.c.h.b16 %v401
        %v1375 = vunpack.c.l.b16 %v402
        %v1376 = vunpack.c.h.b16 %v402
        %v1377 = vunpack.c.l.b16 %v403
        %v1378 = vunpack.c.h.b16 %v403
        %v1379 = vunpack.c.l.b16 %v404
        %v1380 = vunpack.c.h.b16 %v404
        %v1381 = vunpack.c.l.b16 %v405
        %v1382 = vunpack.c.h.b16 %v405
        %v1383 = vunpack.c.l.b16 %v406
        %v1384 = vunpack.c.h.b16 %v406
        %v1385 = vunpack.c.l.b16 %v407
        %v1386 = vunpack.c.h.b16 %v407
        %v1387 = vunpack.c.l.b16 %v408
        %v1388 = vunpack.c.h.b16 %v408
        %v1389 = vunpack.c.l.b16 %v409
        %v1390 = vunpack.c.h.b16 %v409
        %v1391 = vunpack.c.l.b16 %v410
        %v1392 = vunpack.c.h.b16 %v410
        %v1393 = vunpack.c.l.b16 %v411
        %v1394 = vunpack.c.h.b16 %v411
        %v1395 = vunpack.c.l.b16 %v412
        %v1396 = vunpack.c.h.b16 %v412
        %v1397 = vunpack.c.l.b16 %v413
        %v1398 = vunpack.c.h.b16 %v413
        %v1399 = vunpack.c.l.b16 %v414
        %v1400 = vunpack.c.h.b16 %v414
        %v1401 = vunpack.c.l.b16 %v415
        %v1402 = vunpack.c.h.b16 %v415
        %v1403 = vunpack.c.l.b16 %v416
        %v1404 = vunpack.c.h.b16 %v416
        %v1405 = vunpack.c.l.b16 %v417
        %v1406 = vunpack.c.h.b16 %v417
        %v1407 = vunpack.c.l.b16 %v418
        %v1408 = vunpack.c.h.b16 %v418
        %v1409 = vunpack.c.l.b16 %v419
        %v1410 = vunpack.c.h.b16 %v419
        %v1411 = vunpack.c.l.b16 %v420
        %v1412 = vunpack.c.h.b16 %v420
        %v1413 = vunpack.c.l.b16 %v421
        %v1414 = vunpack.c.h.b16 %v421
        %v1415 = vunpack.c.l.b16 %v422
        %v1416 = vunpack.c.h.b16 %v422
        %v1417 = vunpack.c.l.b16 %v423
        %v1418 = vunpack.c.h.b16 %v423
        %v1419 = vunpack.c.l.b16 %v424
        %v1420 = vunpack.c.h.b16 %v424
        %v1421 = vunpack.c.l.b16 %v425
        %v1422 = vunpack.c.h.b16 %v425
        %v1423 = vunpack.c.l.b16 %v426
        %v1424 = vunpack.c.h.b16 %v426
        %v1425 = vunpack.c.l.b16 %v427
        %v1426 = vunpack.c.h.b16 %v427
        %v1427 = vunpack.c.l.b16 %v428
        %v1428 = vunpack.c.h.b16 %v428
        %v1429 = vunpack.c.l.b16 %v429
        %v1430 = vunpack.c.h.b16 %v429
        %v1431 = vunpack.c.l.b16 %v430
        %v1432 = vunpack.c.h.b16 %v430
        %v1433 = vunpack.c.l.b16 %v431
        %v1434 = vunpack.c.h.b16 %v431
        %v1435 = vunpack.c.l.b16 %v432
        %v1436 = vunpack.c.h.b16 %v432
        %v1437 = vunpack.c.l.b16 %v433
        %v1438 = vunpack.c.h.b16 %v433
        %v1439 = vunpack.c.l.b16 %v434
        %v1440 = vunpack.c.h.b16 %v434
        %v1441 = vunpack.c.l.b16 %v435
        %v1442 = vunpack.c.h.b16 %v435
        %v1443 = vunpack.c.l.b16 %v436
        %v1444 = vunpack.c.h.b16 %v436
        %v1445 = vunpack.c.l.b16 %v437
        %v1446 = vunpack.c.h.b16 %v437
        %v1447 = vunpack.c.l.b16 %v438
        %v1448 = vunpack.c.h.b16 %v438
        %v1449 = vunpack.c.l.b16 %v439
        %v1450 = vunpack.c.h.b16 %v439
        %v1451 = vunpack.c.l.b16 %v440
        %v1452 = vunpack.c.h.b16 %v440
        %v1453 = vunpack.c.l.b16 %v441
        %v1454 = vunpack.c.h.b16 %v441
        %v1455 = vunpack.c.l.b16 %v442
        %v1456 = vunpack.c.h.b16 %v442
        %v1457 = vunpack.c.l.b16 %v443
        %v1458 = vunpack.c.h.b16 %v443
        %v1459 = vunpack.c.l.b16 %v444
        %v1460 = vunpack.c.h.b16 %v444
        %v1461 = vunpack.c.l.b16 %v445
        %v1462 = vunpack.c.h.b16 %v445
        %v1463 = vunpack.c.l.b16 %v446
        %v1464 = vunpack.c.h.b16 %v446
        %v1465 = vunpack.c.l.b16 %v447
        %v1466 = vunpack.c.h.b16 %v447
        %v1467 = vunpack.c.l.b16 %v448
        %v1468 = vunpack.c.h.b16 %v448
        %v1469 = vunpack.c.l.b16 %v449
        %v1470 = vunpack.c.h.b16 %v449
        %v1471 = vunpack.c.l.b16 %v450
        %v1472 = vunpack.c.h.b16 %v450
        %v1473 = vunpack.c.l.b16 %v451
        %v1474 = vunpack.c.h.b16 %v451
        %v1475 = vunpack.c.l.b16 %v452
        %v1476 = vunpack.c.h.b16 %v452
        %v1477 = vunpack.c.l.b16 %v453
        %v1478 = vunpack.c.h.b16 %v453
        %v1479 = vunpack.c.l.b16 %v454
        %v1480 = vunpack.c.h.b16 %v454
        %v1481 = vunpack.c.l.b16 %v455
        %v1482 = vunpack.c.h.b16 %v455
        %v1483 = vunpack.c.l.b16 %v456
        %v1484 = vunpack.c.h.b16 %v456
        %v1485 = vunpack.c.l.b16 %v457
        %v1486 = vunpack.c.h.b16 %v457
        %v1487 = vunpack.c.l.b16 %v458
        %v1488 = vunpack.c.h.b16 %v458
        %v1489 = vunpack.c.l.b16 %v459
        %v1490 = vunpack.c.h.b16 %v459
        %v1491 = vunpack.c.l.b16 %v460
        %v1492 = vunpack.c.h.b16 %v460
        %v1493 = vunpack.c.l.b16 %v461
        %v1494 = vunpack.c.h.b16 %v461
        %v1495 = vunpack.c.l.b16 %v462
        %v1496 = vunpack.c.h.b16 %v462
        %v1497 = vunpack.c.l.b16 %v463
        %v1498 = vunpack.c.h.b16 %v463
        %v1499 = vunpack.c.l.b16 %v464
        %v1500 = vunpack.c.h.b16 %v464
        %v1501 = vunpack.c.l.b16 %v465
        %v1502 = vunpack.c.h.b16 %v465
        %v1503 = vunpack.c.l.b16 %v466
        %v1504 = vunpack.c.h.b16 %v466
        %v1505 = vunpack.c.l.b16 %v467
        %v1506 = vunpack.c.h.b16 %v467
        %v1507 = vunpack.c.l.b16 %v468
        %v1508 = vunpack.c.h.b16 %v468
        %v1509 = vunpack.c.l.b16 %v469
        %v1510 = vunpack.c.h.b16 %v469
        %v1511 = vunpack.c.l.b16 %v470
        %v1512 = vunpack.c.h.b16 %v470
        %v1513 = vunpack.c.l.b16 %v471
        %v1514 = vunpack.c.h.b16 %v471
        %v1515 = vunpack.c.l.b16 %v472
        %v1516 = vunpack.c.h.b16 %v472
        %v1517 = vunpack.c.l.b16 %v473
        %v1518 = vunpack.c.h.b16 %v473
        %v1519 = vunpack.c.l.b16 %v474
        %v1520 = vunpack.c.h.b16 %v474
        %v1521 = vpack.c.b16 %v1269, %v1265
        %v1522 = vpack.c.b16 %v1270, %v1266
        %v1523 = vpack.c.b16 %v1271, %v1267
        %v1524 = vpack.c.b16 %v1272, %v1268
        %v1525 = vpack.c.b16 %v1277, %v1273
        %v1526 = vpack.c.b16 %v1278, %v1274
        %v1527 = vpack.c.b16 %v1279, %v1275
        %v1528 = vpack.c.b16 %v1280, %v1276
        %v1529 = vpack.c.b16 %v1285, %v1281
        %v1530 = vpack.c.b16 %v1286, %v1282
        %v1531 = vpack.c.b16 %v1287, %v1283
        %v1532 = vpack.c.b16 %v1288, %v1284
        %v1533 = vpack.c.b16 %v1293, %v1289
        %v1534 = vpack.c.b16 %v1294, %v1290
        %v1535 = vpack.c.b16 %v1295, %v1291
        %v1536 = vpack.c.b16 %v1296, %v1292
        %v1537 = vpack.c.b16 %v1301, %v1297
        %v1538 = vpack.c.b16 %v1302, %v1298
        %v1539 = vpack.c.b16 %v1303, %v1299
        %v1540 = vpack.c.b16 %v1304, %v1300
        %v1541 = vpack.c.b16 %v1309, %v1305
        %v1542 = vpack.c.b16 %v1310, %v1306
        %v1543 = vpack.c.b16 %v1311, %v1307
        %v1544 = vpack.c.b16 %v1312, %v1308
        %v1545 = vpack.c.b16 %v1317, %v1313
        %v1546 = vpack.c.b16 %v1318, %v1314
        %v1547 = vpack.c.b16 %v1319, %v1315
        %v1548 = vpack.c.b16 %v1320, %v1316
        %v1549 = vpack.c.b16 %v1325, %v1321
        %v1550 = vpack.c.b16 %v1326, %v1322
        %v1551 = vpack.c.b16 %v1327, %v1323
        %v1552 = vpack.c.b16 %v1328, %v1324
        %v1553 = vpack.c.b16 %v1333, %v1329
        %v1554 = vpack.c.b16 %v1334, %v1330
        %v1555 = vpack.c.b16 %v1335, %v1331
        %v1556 = vpack.c.b16 %v1336, %v1332
        %v1557 = vpack.c.b16 %v1341, %v1337
        %v1558 = vpack.c.b16 %v1342, %v1338
        %v1559 = vpack.c.b16 %v1343, %v1339
        %v1560 = vpack.c.b16 %v1344, %v1340
        %v1561 = vpack.c.b16 %v1349, %v1345
        %v1562 = vpack.c.b16 %v1350, %v1346
        %v1563 = vpack.c.b16 %v1351, %v1347
        %v1564 = vpack.c.b16 %v1352, %v1348
        %v1565 = vpack.c.b16 %v1357, %v1353
        %v1566 = vpack.c.b16 %v1358, %v1354
        %v1567 = vpack.c.b16 %v1359, %v1355
        %v1568 = vpack.c.b16 %v1360, %v1356
        %v1569 = vpack.c.b16 %v1365, %v1361
        %v1570 = vpack.c.b16 %v1366, %v1362
        %v1571 = vpack.c.b16 %v1367, %v1363
        %v1572 = vpack.c.b16 %v1368, %v1364
        %v1573 = vpack.c.b16 %v1373, %v1369
        %v1574 = vpack.c.b16 %v1374, %v1370
        %v1575 = vpack.c.b16 %v1375, %v1371
        %v1576 = vpack.c.b16 %v1376, %v1372
        %v1577 = vpack.c.b16 %v1381, %v1377
        %v1578 = vpack.c.b16 %v1382, %v1378
        %v1579 = vpack.c.b16 %v1383, %v1379
        %v1580 = vpack.c.b16 %v1384, %v1380
        %v1581 = vpack.c.b16 %v1389, %v1385
        %v1582 = vpack.c.b16 %v1390, %v1386
        %v1583 = vpack.c.b16 %v1391, %v1387
        %v1584 = vpack.c.b16 %v1392, %v1388
        %v1585 = vpack.c.b16 %v1397, %v1393
        %v1586 = vpack.c.b16 %v1398, %v1394
        %v1587 = vpack.c.b16 %v1399, %v1395
        %v1588 = vpack.c.b16 %v1400, %v1396
        %v1589 = vpack.c.b16 %v1405, %v1401
        %v1590 = vpack.c.b16 %v1406, %v1402
        %v1591 = vpack.c.b16 %v1407, %v1403
        %v1592 = vpack.c.b16 %v1408, %v1404
        %v1593 = vpack.c.b16 %v1413, %v1409
        %v1594 = vpack.c.b16 %v1414, %v1410
        %v1595 = vpack.c.b16 %v1415, %v1411
        %v1596 = vpack.c.b16 %v1416, %v1412
        %v1597 = vpack.c.b16 %v1421, %v1417
        %v1598 = vpack.c.b16 %v1422, %v1418
        %v1599 = vpack.c.b16 %v1423, %v1419
        %v1600 = vpack.c.b16 %v1424, %v1420
        %v1601 = vpack.c.b16 %v1429, %v1425
        %v1602 = vpack.c.b16 %v1430, %v1426
        %v1603 = vpack.c.b16 %v1431, %v1427
        %v1604 = vpack.c.b16 %v1432, %v1428
        %v1605 = vpack.c.b16 %v1437, %v1433
        %v1606 = vpack.c.b16 %v1438, %v1434
        %v1607 = vpack.c.b16 %v1439, %v1435
        %v1608 = vpack.c.b16 %v1440, %v1436
        %v1609 = vpack.c.b16 %v1445, %v1441
        %v1610 = vpack.c.b16 %v1446, %v1442
        %v1611 = vpack.c.b16 %v1447, %v1443
        %v1612 = vpack.c.b16 %v1448, %v1444
        %v1613 = vpack.c.b16 %v1453, %v1449
        %v1614 = vpack.c.b16 %v1454, %v1450
        %v1615 = vpack.c.b16 %v1455, %v1451
        %v1616 = vpack.c.b16 %v1456, %v1452
        %v1617 = vpack.c.b16 %v1461, %v1457
        %v1618 = vpack.c.b16 %v1462, %v1458
        %v1619 = vpack.c.b16 %v1463, %v1459
        %v1620 = vpack.c.b16 %v1464, %v1460
        %v1621 = vpack.c.b16 %v1469, %v1465
        %v1622 = vpack.c.b16 %v1470, %v1466
        %v1623 = vpack.c.b16 %v1471, %v1467
        %v1624 = vpack.c.b16 %v1472, %v1468
        %v1625 = vpack.c.b16 %v1477, %v1473
        %v1626 = vpack.c.b16 %v1478, %v1474
        %v1627 = vpack.c.b16 %v1479, %v1475
        %v1628 = vpack.c.b16 %v1480, %v1476
        %v1629 = vpack.c.b16 %v1485, %v1481
        %v1630 = vpack.c.b16 %v1486, %v1482
        %v1631 = vpack.c.b16 %v1487, %v1483
        %v1632 = vpack.c.b16 %v1488, %v1484
        %v1633 = vpack.c.b16 %v1493, %v1489
        %v1634 = vpack.c.b16 %v1494, %v1490
        %v1635 = vpack.c.b16 %v1495, %v1491
        %v1636 = vpack.c.b16 %v1496, %v1492
        %v1637 = vpack.c.b16 %v1501, %v1497
        %v1638 = vpack.c.b16 %v1502, %v1498
        %v1639 = vpack.c.b16 %v1503, %v1499
        %v1640 = vpack.c.b16 %v1504, %v1500
        %v1641 = vpack.c.b16 %v1509, %v1505
        %v1642 = vpack.c.b16 %v1510, %v1506
        %v1643 = vpack.c.b16 %v1511, %v1507
        %v1644 = vpack.c.b16 %v1512, %v1508
        %v1645 = vpack.c.b16 %v1517, %v1513
        %v1646 = vpack.c.b16 %v1518, %v1514
        %v1647 = vpack.c.b16 %v1519, %v1515
        %v1648 = vpack.c.b16 %v1520, %v1516
        %1777 = vmatprep.subr.bf16.mxu0 %v1550
        %1778 = vmatpush1.bf16.msra.mxu0 %v1549
        %1779 = vmatprep.subr.bf16.mxu0 %v1546
        %1780 = vmatpush1.bf16.msra.mxu0 %v1545
        %1781 = vmatprep.subr.bf16.mxu0 %v1542
        %1782 = vmatpush1.bf16.msra.mxu0 %v1541
        %1783 = vmatprep.subr.bf16.mxu0 %v1538
        %1784 = vmatpush1.bf16.msra.mxu0 %v1537
        %1785 = vmatprep.subr.bf16.mxu0 %v1534
        %1786 = vmatpush1.bf16.msra.mxu0 %v1533
        %1787 = vmatprep.subr.bf16.mxu0 %v1530
        %1788 = vmatpush1.bf16.msra.mxu0 %v1529
        %1789 = vmatprep.subr.bf16.mxu0 %v1526
        %1790 = vmatpush1.bf16.msra.mxu0 %v1525
        %1791 = vmatprep.subr.bf16.mxu0 %v1522
        %1792 = vmatpush1.bf16.msra.mxu0 %v1521
        %1793 = vmatprep.subr.bf16.mxu0 %v1582
        %1794 = vmatpush2.bf16.msra.mxu0 %v1581
        %1795 = vmatprep.subr.bf16.mxu0 %v1578
        %1796 = vmatpush2.bf16.msra.mxu0 %v1577
        %1797 = vmatprep.subr.bf16.mxu0 %v1574
        %1798 = vmatpush2.bf16.msra.mxu0 %v1573
        %1799 = vmatprep.subr.bf16.mxu0 %v1570
        %1800 = vmatpush2.bf16.msra.mxu0 %v1569
        %1801 = vmatprep.subr.bf16.mxu0 %v1566
        %1802 = vmatpush2.bf16.msra.mxu0 %v1565
        %1803 = vmatprep.subr.bf16.mxu0 %v1562
        %1804 = vmatpush2.bf16.msra.mxu0 %v1561
        %1805 = vmatprep.subr.bf16.mxu0 %v1558
        %1806 = vmatpush2.bf16.msra.mxu0 %v1557
        %1807 = vmatprep.subr.bf16.mxu0 %v1554
        %1808 = vmatpush2.bf16.msra.mxu0 %v1553
        %1809 = vmatprep.mubr.bf16.mxu0 %v882
        %1810 = vmatmul.mubr.bf16.gmra.mxu0 %v881
        %v1811 = vpop.f32.mrf.mxu0
        %v1812 = vadd.f32 %v480, %v1811
        %v1813 = vpop.f32.mrf.mxu0
        %v1814 = vadd.f32 %v484, %v1813
        %v1815 = vpop.f32.mrf.mxu0
        %v1816 = vadd.f32 %v480, %v1815
        %v1817 = vpop.f32.mrf.mxu0
        %v1818 = vadd.f32 %v484, %v1817
        %1819 = vmatprep.mubr.bf16.mxu0 %v886
        %1820 = vmatmul.mubr.bf16.gmra.mxu0 %v885
        %v1821 = vpop.f32.mrf.mxu0
        %v1822 = vadd.f32 %v480, %v1821
        %v1823 = vpop.f32.mrf.mxu0
        %v1824 = vadd.f32 %v484, %v1823
        %v1825 = vpop.f32.mrf.mxu0
        %v1826 = vadd.f32 %v480, %v1825
        %v1827 = vpop.f32.mrf.mxu0
        %v1828 = vadd.f32 %v484, %v1827
        %1829 = vmatprep.mubr.bf16.mxu0 %v890
        %1830 = vmatmul.mubr.bf16.gmra.mxu0 %v889
        %v1831 = vpop.f32.mrf.mxu0
        %v1832 = vadd.f32 %v480, %v1831
        %v1833 = vpop.f32.mrf.mxu0
        %v1834 = vadd.f32 %v484, %v1833
        %v1835 = vpop.f32.mrf.mxu0
        %v1836 = vadd.f32 %v480, %v1835
        %v1837 = vpop.f32.mrf.mxu0
        %v1838 = vadd.f32 %v484, %v1837
        %1839 = vmatprep.mubr.bf16.mxu0 %v894
        %1840 = vmatmul.mubr.bf16.gmra.mxu0 %v893
        %v1841 = vpop.f32.mrf.mxu0
        %v1842 = vadd.f32 %v480, %v1841
        %v1843 = vpop.f32.mrf.mxu0
        %v1844 = vadd.f32 %v484, %v1843
        %v1845 = vpop.f32.mrf.mxu0
        %v1846 = vadd.f32 %v480, %v1845
        %v1847 = vpop.f32.mrf.mxu0
        %v1848 = vadd.f32 %v484, %v1847
        %1849 = vmatprep.mubr.bf16.mxu0 %v898
        %1850 = vmatmul.mubr.bf16.gmra.mxu0 %v897
        %v1851 = vpop.f32.mrf.mxu0
        %v1852 = vadd.f32 %v480, %v1851
        %v1853 = vpop.f32.mrf.mxu0
        %v1854 = vadd.f32 %v484, %v1853
        %v1855 = vpop.f32.mrf.mxu0
        %v1856 = vadd.f32 %v480, %v1855
        %v1857 = vpop.f32.mrf.mxu0
        %v1858 = vadd.f32 %v484, %v1857
        %1859 = vmatprep.mubr.bf16.mxu0 %v902
        %1860 = vmatmul.mubr.bf16.gmra.mxu0 %v901
        %v1861 = vpop.f32.mrf.mxu0
        %v1862 = vadd.f32 %v480, %v1861
        %v1863 = vpop.f32.mrf.mxu0
        %v1864 = vadd.f32 %v484, %v1863
        %v1865 = vpop.f32.mrf.mxu0
        %v1866 = vadd.f32 %v480, %v1865
        %v1867 = vpop.f32.mrf.mxu0
        %v1868 = vadd.f32 %v484, %v1867
        %1869 = vmatprep.mubr.bf16.mxu0 %v906
        %1870 = vmatmul.mubr.bf16.gmra.mxu0 %v905
        %v1871 = vpop.f32.mrf.mxu0
        %v1872 = vadd.f32 %v480, %v1871
        %v1873 = vpop.f32.mrf.mxu0
        %v1874 = vadd.f32 %v484, %v1873
        %v1875 = vpop.f32.mrf.mxu0
        %v1876 = vadd.f32 %v480, %v1875
        %v1877 = vpop.f32.mrf.mxu0
        %v1878 = vadd.f32 %v484, %v1877
        %1879 = vmatprep.mubr.bf16.mxu0 %v910
        %1880 = vmatmul.mubr.bf16.gmra.mxu0 %v909
        %v1881 = vpop.f32.mrf.mxu0
        %v1882 = vadd.f32 %v480, %v1881
        %v1883 = vpop.f32.mrf.mxu0
        %v1884 = vadd.f32 %v484, %v1883
        %v1885 = vpop.f32.mrf.mxu0
        %v1886 = vadd.f32 %v480, %v1885
        %v1887 = vpop.f32.mrf.mxu0
        %v1888 = vadd.f32 %v484, %v1887
        %1889 = vmatprep.mubr.bf16.mxu0 %v914
        %1890 = vmatmul.mubr.bf16.gmra.mxu0 %v913
        %v1891 = vpop.f32.mrf.mxu0
        %v1892 = vadd.f32 %v480, %v1891
        %v1893 = vpop.f32.mrf.mxu0
        %v1894 = vadd.f32 %v484, %v1893
        %v1895 = vpop.f32.mrf.mxu0
        %v1896 = vadd.f32 %v480, %v1895
        %v1897 = vpop.f32.mrf.mxu0
        %v1898 = vadd.f32 %v484, %v1897
        %1899 = vmatprep.mubr.bf16.mxu0 %v918
        %1900 = vmatmul.mubr.bf16.gmra.mxu0 %v917
        %v1901 = vpop.f32.mrf.mxu0
        %v1902 = vadd.f32 %v480, %v1901
        %v1903 = vpop.f32.mrf.mxu0
        %v1904 = vadd.f32 %v484, %v1903
        %v1905 = vpop.f32.mrf.mxu0
        %v1906 = vadd.f32 %v480, %v1905
        %v1907 = vpop.f32.mrf.mxu0
        %v1908 = vadd.f32 %v484, %v1907
        %1909 = vmatprep.mubr.bf16.mxu0 %v922
        %1910 = vmatmul.mubr.bf16.gmra.mxu0 %v921
        %v1911 = vpop.f32.mrf.mxu0
        %v1912 = vadd.f32 %v480, %v1911
        %v1913 = vpop.f32.mrf.mxu0
        %v1914 = vadd.f32 %v484, %v1913
        %v1915 = vpop.f32.mrf.mxu0
        %v1916 = vadd.f32 %v480, %v1915
        %v1917 = vpop.f32.mrf.mxu0
        %v1918 = vadd.f32 %v484, %v1917
        %1919 = vmatprep.mubr.bf16.mxu0 %v926
        %1920 = vmatmul.mubr.bf16.gmra.mxu0 %v925
        %v1921 = vpop.f32.mrf.mxu0
        %v1922 = vadd.f32 %v480, %v1921
        %v1923 = vpop.f32.mrf.mxu0
        %v1924 = vadd.f32 %v484, %v1923
        %v1925 = vpop.f32.mrf.mxu0
        %v1926 = vadd.f32 %v480, %v1925
        %v1927 = vpop.f32.mrf.mxu0
        %v1928 = vadd.f32 %v484, %v1927
        %1929 = vmatprep.mubr.bf16.mxu0 %v930
        %1930 = vmatmul.mubr.bf16.gmra.mxu0 %v929
        %v1931 = vpop.f32.mrf.mxu0
        %v1932 = vadd.f32 %v480, %v1931
        %v1933 = vpop.f32.mrf.mxu0
        %v1934 = vadd.f32 %v484, %v1933
        %v1935 = vpop.f32.mrf.mxu0
        %v1936 = vadd.f32 %v480, %v1935
        %v1937 = vpop.f32.mrf.mxu0
        %v1938 = vadd.f32 %v484, %v1937
        %1939 = vmatprep.mubr.bf16.mxu0 %v934
        %1940 = vmatmul.mubr.bf16.gmra.mxu0 %v933
        %v1941 = vpop.f32.mrf.mxu0
        %v1942 = vadd.f32 %v480, %v1941
        %v1943 = vpop.f32.mrf.mxu0
        %v1944 = vadd.f32 %v484, %v1943
        %v1945 = vpop.f32.mrf.mxu0
        %v1946 = vadd.f32 %v480, %v1945
        %v1947 = vpop.f32.mrf.mxu0
        %v1948 = vadd.f32 %v484, %v1947
        %1949 = vmatprep.mubr.bf16.mxu0 %v938
        %1950 = vmatmul.mubr.bf16.gmra.mxu0 %v937
        %v1951 = vpop.f32.mrf.mxu0
        %v1952 = vadd.f32 %v480, %v1951
        %v1953 = vpop.f32.mrf.mxu0
        %v1954 = vadd.f32 %v484, %v1953
        %v1955 = vpop.f32.mrf.mxu0
        %v1956 = vadd.f32 %v480, %v1955
        %v1957 = vpop.f32.mrf.mxu0
        %v1958 = vadd.f32 %v484, %v1957
        %1959 = vmatprep.mubr.bf16.mxu0 %v942
        %1960 = vmatmul.mubr.bf16.gmra.mxu0 %v941
        %v1961 = vpop.f32.mrf.mxu0
        %v1962 = vadd.f32 %v480, %v1961
        %v1963 = vpop.f32.mrf.mxu0
        %v1964 = vadd.f32 %v484, %v1963
        %v1965 = vpop.f32.mrf.mxu0
        %v1966 = vadd.f32 %v480, %v1965
        %v1967 = vpop.f32.mrf.mxu0
        %v1968 = vadd.f32 %v484, %v1967
        %1969 = vmatprep.mubr.bf16.mxu0 %v946
        %1970 = vmatmul.mubr.bf16.gmra.mxu0 %v945
        %v1971 = vpop.f32.mrf.mxu0
        %v1972 = vadd.f32 %v480, %v1971
        %v1973 = vpop.f32.mrf.mxu0
        %v1974 = vadd.f32 %v484, %v1973
        %v1975 = vpop.f32.mrf.mxu0
        %v1976 = vadd.f32 %v480, %v1975
        %v1977 = vpop.f32.mrf.mxu0
        %v1978 = vadd.f32 %v484, %v1977
        %1979 = vmatprep.mubr.bf16.mxu0 %v950
        %1980 = vmatmul.mubr.bf16.gmra.mxu0 %v949
        %v1981 = vpop.f32.mrf.mxu0
        %v1982 = vadd.f32 %v480, %v1981
        %v1983 = vpop.f32.mrf.mxu0
        %v1984 = vadd.f32 %v484, %v1983
        %v1985 = vpop.f32.mrf.mxu0
        %v1986 = vadd.f32 %v480, %v1985
        %v1987 = vpop.f32.mrf.mxu0
        %v1988 = vadd.f32 %v484, %v1987
        %1989 = vmatprep.mubr.bf16.mxu0 %v954
        %1990 = vmatmul.mubr.bf16.gmra.mxu0 %v953
        %v1991 = vpop.f32.mrf.mxu0
        %v1992 = vadd.f32 %v480, %v1991
        %v1993 = vpop.f32.mrf.mxu0
        %v1994 = vadd.f32 %v484, %v1993
        %v1995 = vpop.f32.mrf.mxu0
        %v1996 = vadd.f32 %v480, %v1995
        %v1997 = vpop.f32.mrf.mxu0
        %v1998 = vadd.f32 %v484, %v1997
        %1999 = vmatprep.mubr.bf16.mxu0 %v958
        %2000 = vmatmul.mubr.bf16.gmra.mxu0 %v957
        %v2001 = vpop.f32.mrf.mxu0
        %v2002 = vadd.f32 %v480, %v2001
        %v2003 = vpop.f32.mrf.mxu0
        %v2004 = vadd.f32 %v484, %v2003
        %v2005 = vpop.f32.mrf.mxu0
        %v2006 = vadd.f32 %v480, %v2005
        %v2007 = vpop.f32.mrf.mxu0
        %v2008 = vadd.f32 %v484, %v2007
        %2009 = vmatprep.mubr.bf16.mxu0 %v962
        %2010 = vmatmul.mubr.bf16.gmra.mxu0 %v961
        %v2011 = vpop.f32.mrf.mxu0
        %v2012 = vadd.f32 %v480, %v2011
        %v2013 = vpop.f32.mrf.mxu0
        %v2014 = vadd.f32 %v484, %v2013
        %v2015 = vpop.f32.mrf.mxu0
        %v2016 = vadd.f32 %v480, %v2015
        %v2017 = vpop.f32.mrf.mxu0
        %v2018 = vadd.f32 %v484, %v2017
        %2019 = vmatprep.mubr.bf16.mxu0 %v966
        %2020 = vmatmul.mubr.bf16.gmra.mxu0 %v965
        %v2021 = vpop.f32.mrf.mxu0
        %v2022 = vadd.f32 %v480, %v2021
        %v2023 = vpop.f32.mrf.mxu0
        %v2024 = vadd.f32 %v484, %v2023
        %v2025 = vpop.f32.mrf.mxu0
        %v2026 = vadd.f32 %v480, %v2025
        %v2027 = vpop.f32.mrf.mxu0
        %v2028 = vadd.f32 %v484, %v2027
        %2029 = vmatprep.mubr.bf16.mxu0 %v970
        %2030 = vmatmul.mubr.bf16.gmra.mxu0 %v969
        %v2031 = vpop.f32.mrf.mxu0
        %v2032 = vadd.f32 %v480, %v2031
        %v2033 = vpop.f32.mrf.mxu0
        %v2034 = vadd.f32 %v484, %v2033
        %v2035 = vpop.f32.mrf.mxu0
        %v2036 = vadd.f32 %v480, %v2035
        %v2037 = vpop.f32.mrf.mxu0
        %v2038 = vadd.f32 %v484, %v2037
        %2039 = vmatprep.mubr.bf16.mxu0 %v974
        %2040 = vmatmul.mubr.bf16.gmra.mxu0 %v973
        %v2041 = vpop.f32.mrf.mxu0
        %v2042 = vadd.f32 %v480, %v2041
        %v2043 = vpop.f32.mrf.mxu0
        %v2044 = vadd.f32 %v484, %v2043
        %v2045 = vpop.f32.mrf.mxu0
        %v2046 = vadd.f32 %v480, %v2045
        %v2047 = vpop.f32.mrf.mxu0
        %v2048 = vadd.f32 %v484, %v2047
        %2049 = vmatprep.mubr.bf16.mxu0 %v978
        %2050 = vmatmul.mubr.bf16.gmra.mxu0 %v977
        %v2051 = vpop.f32.mrf.mxu0
        %v2052 = vadd.f32 %v480, %v2051
        %v2053 = vpop.f32.mrf.mxu0
        %v2054 = vadd.f32 %v484, %v2053
        %v2055 = vpop.f32.mrf.mxu0
        %v2056 = vadd.f32 %v480, %v2055
        %v2057 = vpop.f32.mrf.mxu0
        %v2058 = vadd.f32 %v484, %v2057
        %2059 = vmatprep.mubr.bf16.mxu0 %v982
        %2060 = vmatmul.mubr.bf16.gmra.mxu0 %v981
        %v2061 = vpop.f32.mrf.mxu0
        %v2062 = vadd.f32 %v480, %v2061
        %v2063 = vpop.f32.mrf.mxu0
        %v2064 = vadd.f32 %v484, %v2063
        %v2065 = vpop.f32.mrf.mxu0
        %v2066 = vadd.f32 %v480, %v2065
        %v2067 = vpop.f32.mrf.mxu0
        %v2068 = vadd.f32 %v484, %v2067
        %2069 = vmatprep.mubr.bf16.mxu0 %v986
        %2070 = vmatmul.mubr.bf16.gmra.mxu0 %v985
        %v2071 = vpop.f32.mrf.mxu0
        %v2072 = vadd.f32 %v480, %v2071
        %v2073 = vpop.f32.mrf.mxu0
        %v2074 = vadd.f32 %v484, %v2073
        %v2075 = vpop.f32.mrf.mxu0
        %v2076 = vadd.f32 %v480, %v2075
        %v2077 = vpop.f32.mrf.mxu0
        %v2078 = vadd.f32 %v484, %v2077
        %2079 = vmatprep.mubr.bf16.mxu0 %v990
        %2080 = vmatmul.mubr.bf16.gmra.mxu0 %v989
        %v2081 = vpop.f32.mrf.mxu0
        %v2082 = vadd.f32 %v480, %v2081
        %v2083 = vpop.f32.mrf.mxu0
        %v2084 = vadd.f32 %v484, %v2083
        %v2085 = vpop.f32.mrf.mxu0
        %v2086 = vadd.f32 %v480, %v2085
        %v2087 = vpop.f32.mrf.mxu0
        %v2088 = vadd.f32 %v484, %v2087
        %2089 = vmatprep.mubr.bf16.mxu0 %v994
        %2090 = vmatmul.mubr.bf16.gmra.mxu0 %v993
        %v2091 = vpop.f32.mrf.mxu0
        %v2092 = vadd.f32 %v480, %v2091
        %v2093 = vpop.f32.mrf.mxu0
        %v2094 = vadd.f32 %v484, %v2093
        %v2095 = vpop.f32.mrf.mxu0
        %v2096 = vadd.f32 %v480, %v2095
        %v2097 = vpop.f32.mrf.mxu0
        %v2098 = vadd.f32 %v484, %v2097
        %2099 = vmatprep.mubr.bf16.mxu0 %v998
        %2100 = vmatmul.mubr.bf16.gmra.mxu0 %v997
        %v2101 = vpop.f32.mrf.mxu0
        %v2102 = vadd.f32 %v480, %v2101
        %v2103 = vpop.f32.mrf.mxu0
        %v2104 = vadd.f32 %v484, %v2103
        %v2105 = vpop.f32.mrf.mxu0
        %v2106 = vadd.f32 %v480, %v2105
        %v2107 = vpop.f32.mrf.mxu0
        %v2108 = vadd.f32 %v484, %v2107
        %2109 = vmatprep.mubr.bf16.mxu0 %v1002
        %2110 = vmatmul.mubr.bf16.gmra.mxu0 %v1001
        %v2111 = vpop.f32.mrf.mxu0
        %v2112 = vadd.f32 %v480, %v2111
        %v2113 = vpop.f32.mrf.mxu0
        %v2114 = vadd.f32 %v484, %v2113
        %v2115 = vpop.f32.mrf.mxu0
        %v2116 = vadd.f32 %v480, %v2115
        %v2117 = vpop.f32.mrf.mxu0
        %v2118 = vadd.f32 %v484, %v2117
        %2119 = vmatprep.mubr.bf16.mxu0 %v1006
        %2120 = vmatmul.mubr.bf16.gmra.mxu0 %v1005
        %v2121 = vpop.f32.mrf.mxu0
        %v2122 = vadd.f32 %v480, %v2121
        %v2123 = vpop.f32.mrf.mxu0
        %v2124 = vadd.f32 %v484, %v2123
        %v2125 = vpop.f32.mrf.mxu0
        %v2126 = vadd.f32 %v480, %v2125
        %v2127 = vpop.f32.mrf.mxu0
        %v2128 = vadd.f32 %v484, %v2127
        %2129 = vdwg.mxu0
        %2130 = vmatprep.subr.bf16.mxu0 %v1614
        %2131 = vmatpush1.bf16.msra.mxu0 %v1613
        %2132 = vmatprep.subr.bf16.mxu0 %v1610
        %2133 = vmatpush1.bf16.msra.mxu0 %v1609
        %2134 = vmatprep.subr.bf16.mxu0 %v1606
        %2135 = vmatpush1.bf16.msra.mxu0 %v1605
        %2136 = vmatprep.subr.bf16.mxu0 %v1602
        %2137 = vmatpush1.bf16.msra.mxu0 %v1601
        %2138 = vmatprep.subr.bf16.mxu0 %v1598
        %2139 = vmatpush1.bf16.msra.mxu0 %v1597
        %2140 = vmatprep.subr.bf16.mxu0 %v1594
        %2141 = vmatpush1.bf16.msra.mxu0 %v1593
        %2142 = vmatprep.subr.bf16.mxu0 %v1590
        %2143 = vmatpush1.bf16.msra.mxu0 %v1589
        %2144 = vmatprep.subr.bf16.mxu0 %v1586
        %2145 = vmatpush1.bf16.msra.mxu0 %v1585
        %2146 = vmatprep.subr.bf16.mxu0 %v1646
        %2147 = vmatpush2.bf16.msra.mxu0 %v1645
        %2148 = vmatprep.subr.bf16.mxu0 %v1642
        %2149 = vmatpush2.bf16.msra.mxu0 %v1641
        %2150 = vmatprep.subr.bf16.mxu0 %v1638
        %2151 = vmatpush2.bf16.msra.mxu0 %v1637
        %2152 = vmatprep.subr.bf16.mxu0 %v1634
        %2153 = vmatpush2.bf16.msra.mxu0 %v1633
        %2154 = vmatprep.subr.bf16.mxu0 %v1630
        %2155 = vmatpush2.bf16.msra.mxu0 %v1629
        %2156 = vmatprep.subr.bf16.mxu0 %v1626
        %2157 = vmatpush2.bf16.msra.mxu0 %v1625
        %2158 = vmatprep.subr.bf16.mxu0 %v1622
        %2159 = vmatpush2.bf16.msra.mxu0 %v1621
        %2160 = vmatprep.subr.bf16.mxu0 %v1618
        %2161 = vmatpush2.bf16.msra.mxu0 %v1617
        %2162 = vmatprep.mubr.bf16.mxu0 %v884
        %2163 = vmatmul.mubr.bf16.gmra.mxu0 %v883
        %v2164 = vpop.f32.mrf.mxu0
        %v2165 = vadd.f32 %v1812, %v2164
        %v2166 = vpop.f32.mrf.mxu0
        %v2167 = vadd.f32 %v1814, %v2166
        %v2168 = vpop.f32.mrf.mxu0
        %v2169 = vadd.f32 %v1816, %v2168
        %v2170 = vpop.f32.mrf.mxu0
        %v2171 = vadd.f32 %v1818, %v2170
        %2172 = vmatprep.mubr.bf16.mxu0 %v888
        %2173 = vmatmul.mubr.bf16.gmra.mxu0 %v887
        %v2174 = vpop.f32.mrf.mxu0
        %v2175 = vadd.f32 %v1822, %v2174
        %v2176 = vpop.f32.mrf.mxu0
        %v2177 = vadd.f32 %v1824, %v2176
        %v2178 = vpop.f32.mrf.mxu0
        %v2179 = vadd.f32 %v1826, %v2178
        %v2180 = vpop.f32.mrf.mxu0
        %v2181 = vadd.f32 %v1828, %v2180
        %2182 = vmatprep.mubr.bf16.mxu0 %v892
        %2183 = vmatmul.mubr.bf16.gmra.mxu0 %v891
        %v2184 = vpop.f32.mrf.mxu0
        %v2185 = vadd.f32 %v1832, %v2184
        %v2186 = vpop.f32.mrf.mxu0
        %v2187 = vadd.f32 %v1834, %v2186
        %v2188 = vpop.f32.mrf.mxu0
        %v2189 = vadd.f32 %v1836, %v2188
        %v2190 = vpop.f32.mrf.mxu0
        %v2191 = vadd.f32 %v1838, %v2190
        %2192 = vmatprep.mubr.bf16.mxu0 %v896
        %2193 = vmatmul.mubr.bf16.gmra.mxu0 %v895
        %v2194 = vpop.f32.mrf.mxu0
        %v2195 = vadd.f32 %v1842, %v2194
        %v2196 = vpop.f32.mrf.mxu0
        %v2197 = vadd.f32 %v1844, %v2196
        %v2198 = vpop.f32.mrf.mxu0
        %v2199 = vadd.f32 %v1846, %v2198
        %v2200 = vpop.f32.mrf.mxu0
        %v2201 = vadd.f32 %v1848, %v2200
        %2202 = vmatprep.mubr.bf16.mxu0 %v900
        %2203 = vmatmul.mubr.bf16.gmra.mxu0 %v899
        %v2204 = vpop.f32.mrf.mxu0
        %v2205 = vadd.f32 %v1852, %v2204
        %v2206 = vpop.f32.mrf.mxu0
        %v2207 = vadd.f32 %v1854, %v2206
        %v2208 = vpop.f32.mrf.mxu0
        %v2209 = vadd.f32 %v1856, %v2208
        %v2210 = vpop.f32.mrf.mxu0
        %v2211 = vadd.f32 %v1858, %v2210
        %2212 = vmatprep.mubr.bf16.mxu0 %v904
        %2213 = vmatmul.mubr.bf16.gmra.mxu0 %v903
        %v2214 = vpop.f32.mrf.mxu0
        %v2215 = vadd.f32 %v1862, %v2214
        %v2216 = vpop.f32.mrf.mxu0
        %v2217 = vadd.f32 %v1864, %v2216
        %v2218 = vpop.f32.mrf.mxu0
        %v2219 = vadd.f32 %v1866, %v2218
        %v2220 = vpop.f32.mrf.mxu0
        %v2221 = vadd.f32 %v1868, %v2220
        %2222 = vmatprep.mubr.bf16.mxu0 %v908
        %2223 = vmatmul.mubr.bf16.gmra.mxu0 %v907
        %v2224 = vpop.f32.mrf.mxu0
        %v2225 = vadd.f32 %v1872, %v2224
        %v2226 = vpop.f32.mrf.mxu0
        %v2227 = vadd.f32 %v1874, %v2226
        %v2228 = vpop.f32.mrf.mxu0
        %v2229 = vadd.f32 %v1876, %v2228
        %v2230 = vpop.f32.mrf.mxu0
        %v2231 = vadd.f32 %v1878, %v2230
        %2232 = vmatprep.mubr.bf16.mxu0 %v912
        %2233 = vmatmul.mubr.bf16.gmra.mxu0 %v911
        %v2234 = vpop.f32.mrf.mxu0
        %v2235 = vadd.f32 %v1882, %v2234
        %v2236 = vpop.f32.mrf.mxu0
        %v2237 = vadd.f32 %v1884, %v2236
        %v2238 = vpop.f32.mrf.mxu0
        %v2239 = vadd.f32 %v1886, %v2238
        %v2240 = vpop.f32.mrf.mxu0
        %v2241 = vadd.f32 %v1888, %v2240
        %2242 = vmatprep.mubr.bf16.mxu0 %v916
        %2243 = vmatmul.mubr.bf16.gmra.mxu0 %v915
        %v2244 = vpop.f32.mrf.mxu0
        %v2245 = vadd.f32 %v1892, %v2244
        %v2246 = vpop.f32.mrf.mxu0
        %v2247 = vadd.f32 %v1894, %v2246
        %v2248 = vpop.f32.mrf.mxu0
        %v2249 = vadd.f32 %v1896, %v2248
        %v2250 = vpop.f32.mrf.mxu0
        %v2251 = vadd.f32 %v1898, %v2250
        %2252 = vmatprep.mubr.bf16.mxu0 %v920
        %2253 = vmatmul.mubr.bf16.gmra.mxu0 %v919
        %v2254 = vpop.f32.mrf.mxu0
        %v2255 = vadd.f32 %v1902, %v2254
        %v2256 = vpop.f32.mrf.mxu0
        %v2257 = vadd.f32 %v1904, %v2256
        %v2258 = vpop.f32.mrf.mxu0
        %v2259 = vadd.f32 %v1906, %v2258
        %v2260 = vpop.f32.mrf.mxu0
        %v2261 = vadd.f32 %v1908, %v2260
        %2262 = vmatprep.mubr.bf16.mxu0 %v924
        %2263 = vmatmul.mubr.bf16.gmra.mxu0 %v923
        %v2264 = vpop.f32.mrf.mxu0
        %v2265 = vadd.f32 %v1912, %v2264
        %v2266 = vpop.f32.mrf.mxu0
        %v2267 = vadd.f32 %v1914, %v2266
        %v2268 = vpop.f32.mrf.mxu0
        %v2269 = vadd.f32 %v1916, %v2268
        %v2270 = vpop.f32.mrf.mxu0
        %v2271 = vadd.f32 %v1918, %v2270
        %2272 = vmatprep.mubr.bf16.mxu0 %v928
        %2273 = vmatmul.mubr.bf16.gmra.mxu0 %v927
        %v2274 = vpop.f32.mrf.mxu0
        %v2275 = vadd.f32 %v1922, %v2274
        %v2276 = vpop.f32.mrf.mxu0
        %v2277 = vadd.f32 %v1924, %v2276
        %v2278 = vpop.f32.mrf.mxu0
        %v2279 = vadd.f32 %v1926, %v2278
        %v2280 = vpop.f32.mrf.mxu0
        %v2281 = vadd.f32 %v1928, %v2280
        %2282 = vmatprep.mubr.bf16.mxu0 %v932
        %2283 = vmatmul.mubr.bf16.gmra.mxu0 %v931
        %v2284 = vpop.f32.mrf.mxu0
        %v2285 = vadd.f32 %v1932, %v2284
        %v2286 = vpop.f32.mrf.mxu0
        %v2287 = vadd.f32 %v1934, %v2286
        %v2288 = vpop.f32.mrf.mxu0
        %v2289 = vadd.f32 %v1936, %v2288
        %v2290 = vpop.f32.mrf.mxu0
        %v2291 = vadd.f32 %v1938, %v2290
        %2292 = vmatprep.mubr.bf16.mxu0 %v936
        %2293 = vmatmul.mubr.bf16.gmra.mxu0 %v935
        %v2294 = vpop.f32.mrf.mxu0
        %v2295 = vadd.f32 %v1942, %v2294
        %v2296 = vpop.f32.mrf.mxu0
        %v2297 = vadd.f32 %v1944, %v2296
        %v2298 = vpop.f32.mrf.mxu0
        %v2299 = vadd.f32 %v1946, %v2298
        %v2300 = vpop.f32.mrf.mxu0
        %v2301 = vadd.f32 %v1948, %v2300
        %2302 = vmatprep.mubr.bf16.mxu0 %v940
        %2303 = vmatmul.mubr.bf16.gmra.mxu0 %v939
        %v2304 = vpop.f32.mrf.mxu0
        %v2305 = vadd.f32 %v1952, %v2304
        %v2306 = vpop.f32.mrf.mxu0
        %v2307 = vadd.f32 %v1954, %v2306
        %v2308 = vpop.f32.mrf.mxu0
        %v2309 = vadd.f32 %v1956, %v2308
        %v2310 = vpop.f32.mrf.mxu0
        %v2311 = vadd.f32 %v1958, %v2310
        %2312 = vmatprep.mubr.bf16.mxu0 %v944
        %2313 = vmatmul.mubr.bf16.gmra.mxu0 %v943
        %v2314 = vpop.f32.mrf.mxu0
        %v2315 = vadd.f32 %v1962, %v2314
        %v2316 = vpop.f32.mrf.mxu0
        %v2317 = vadd.f32 %v1964, %v2316
        %v2318 = vpop.f32.mrf.mxu0
        %v2319 = vadd.f32 %v1966, %v2318
        %v2320 = vpop.f32.mrf.mxu0
        %v2321 = vadd.f32 %v1968, %v2320
        %2322 = vmatprep.mubr.bf16.mxu0 %v948
        %2323 = vmatmul.mubr.bf16.gmra.mxu0 %v947
        %v2324 = vpop.f32.mrf.mxu0
        %v2325 = vadd.f32 %v1972, %v2324
        %v2326 = vpop.f32.mrf.mxu0
        %v2327 = vadd.f32 %v1974, %v2326
        %v2328 = vpop.f32.mrf.mxu0
        %v2329 = vadd.f32 %v1976, %v2328
        %v2330 = vpop.f32.mrf.mxu0
        %v2331 = vadd.f32 %v1978, %v2330
        %2332 = vmatprep.mubr.bf16.mxu0 %v952
        %2333 = vmatmul.mubr.bf16.gmra.mxu0 %v951
        %v2334 = vpop.f32.mrf.mxu0
        %v2335 = vadd.f32 %v1982, %v2334
        %v2336 = vpop.f32.mrf.mxu0
        %v2337 = vadd.f32 %v1984, %v2336
        %v2338 = vpop.f32.mrf.mxu0
        %v2339 = vadd.f32 %v1986, %v2338
        %v2340 = vpop.f32.mrf.mxu0
        %v2341 = vadd.f32 %v1988, %v2340
        %2342 = vmatprep.mubr.bf16.mxu0 %v956
        %2343 = vmatmul.mubr.bf16.gmra.mxu0 %v955
        %v2344 = vpop.f32.mrf.mxu0
        %v2345 = vadd.f32 %v1992, %v2344
        %v2346 = vpop.f32.mrf.mxu0
        %v2347 = vadd.f32 %v1994, %v2346
        %v2348 = vpop.f32.mrf.mxu0
        %v2349 = vadd.f32 %v1996, %v2348
        %v2350 = vpop.f32.mrf.mxu0
        %v2351 = vadd.f32 %v1998, %v2350
        %2352 = vmatprep.mubr.bf16.mxu0 %v960
        %2353 = vmatmul.mubr.bf16.gmra.mxu0 %v959
        %v2354 = vpop.f32.mrf.mxu0
        %v2355 = vadd.f32 %v2002, %v2354
        %v2356 = vpop.f32.mrf.mxu0
        %v2357 = vadd.f32 %v2004, %v2356
        %v2358 = vpop.f32.mrf.mxu0
        %v2359 = vadd.f32 %v2006, %v2358
        %v2360 = vpop.f32.mrf.mxu0
        %v2361 = vadd.f32 %v2008, %v2360
        %2362 = vmatprep.mubr.bf16.mxu0 %v964
        %2363 = vmatmul.mubr.bf16.gmra.mxu0 %v963
        %v2364 = vpop.f32.mrf.mxu0
        %v2365 = vadd.f32 %v2012, %v2364
        %v2366 = vpop.f32.mrf.mxu0
        %v2367 = vadd.f32 %v2014, %v2366
        %v2368 = vpop.f32.mrf.mxu0
        %v2369 = vadd.f32 %v2016, %v2368
        %v2370 = vpop.f32.mrf.mxu0
        %v2371 = vadd.f32 %v2018, %v2370
        %2372 = vmatprep.mubr.bf16.mxu0 %v968
        %2373 = vmatmul.mubr.bf16.gmra.mxu0 %v967
        %v2374 = vpop.f32.mrf.mxu0
        %v2375 = vadd.f32 %v2022, %v2374
        %v2376 = vpop.f32.mrf.mxu0
        %v2377 = vadd.f32 %v2024, %v2376
        %v2378 = vpop.f32.mrf.mxu0
        %v2379 = vadd.f32 %v2026, %v2378
        %v2380 = vpop.f32.mrf.mxu0
        %v2381 = vadd.f32 %v2028, %v2380
        %2382 = vmatprep.mubr.bf16.mxu0 %v972
        %2383 = vmatmul.mubr.bf16.gmra.mxu0 %v971
        %v2384 = vpop.f32.mrf.mxu0
        %v2385 = vadd.f32 %v2032, %v2384
        %v2386 = vpop.f32.mrf.mxu0
        %v2387 = vadd.f32 %v2034, %v2386
        %v2388 = vpop.f32.mrf.mxu0
        %v2389 = vadd.f32 %v2036, %v2388
        %v2390 = vpop.f32.mrf.mxu0
        %v2391 = vadd.f32 %v2038, %v2390
        %2392 = vmatprep.mubr.bf16.mxu0 %v976
        %2393 = vmatmul.mubr.bf16.gmra.mxu0 %v975
        %v2394 = vpop.f32.mrf.mxu0
        %v2395 = vadd.f32 %v2042, %v2394
        %v2396 = vpop.f32.mrf.mxu0
        %v2397 = vadd.f32 %v2044, %v2396
        %v2398 = vpop.f32.mrf.mxu0
        %v2399 = vadd.f32 %v2046, %v2398
        %v2400 = vpop.f32.mrf.mxu0
        %v2401 = vadd.f32 %v2048, %v2400
        %2402 = vmatprep.mubr.bf16.mxu0 %v980
        %2403 = vmatmul.mubr.bf16.gmra.mxu0 %v979
        %v2404 = vpop.f32.mrf.mxu0
        %v2405 = vadd.f32 %v2052, %v2404
        %v2406 = vpop.f32.mrf.mxu0
        %v2407 = vadd.f32 %v2054, %v2406
        %v2408 = vpop.f32.mrf.mxu0
        %v2409 = vadd.f32 %v2056, %v2408
        %v2410 = vpop.f32.mrf.mxu0
        %v2411 = vadd.f32 %v2058, %v2410
        %2412 = vmatprep.mubr.bf16.mxu0 %v984
        %2413 = vmatmul.mubr.bf16.gmra.mxu0 %v983
        %v2414 = vpop.f32.mrf.mxu0
        %v2415 = vadd.f32 %v2062, %v2414
        %v2416 = vpop.f32.mrf.mxu0
        %v2417 = vadd.f32 %v2064, %v2416
        %v2418 = vpop.f32.mrf.mxu0
        %v2419 = vadd.f32 %v2066, %v2418
        %v2420 = vpop.f32.mrf.mxu0
        %v2421 = vadd.f32 %v2068, %v2420
        %2422 = vmatprep.mubr.bf16.mxu0 %v988
        %2423 = vmatmul.mubr.bf16.gmra.mxu0 %v987
        %v2424 = vpop.f32.mrf.mxu0
        %v2425 = vadd.f32 %v2072, %v2424
        %v2426 = vpop.f32.mrf.mxu0
        %v2427 = vadd.f32 %v2074, %v2426
        %v2428 = vpop.f32.mrf.mxu0
        %v2429 = vadd.f32 %v2076, %v2428
        %v2430 = vpop.f32.mrf.mxu0
        %v2431 = vadd.f32 %v2078, %v2430
        %2432 = vmatprep.mubr.bf16.mxu0 %v992
        %2433 = vmatmul.mubr.bf16.gmra.mxu0 %v991
        %v2434 = vpop.f32.mrf.mxu0
        %v2435 = vadd.f32 %v2082, %v2434
        %v2436 = vpop.f32.mrf.mxu0
        %v2437 = vadd.f32 %v2084, %v2436
        %v2438 = vpop.f32.mrf.mxu0
        %v2439 = vadd.f32 %v2086, %v2438
        %v2440 = vpop.f32.mrf.mxu0
        %v2441 = vadd.f32 %v2088, %v2440
        %2442 = vmatprep.mubr.bf16.mxu0 %v996
        %2443 = vmatmul.mubr.bf16.gmra.mxu0 %v995
        %v2444 = vpop.f32.mrf.mxu0
        %v2445 = vadd.f32 %v2092, %v2444
        %v2446 = vpop.f32.mrf.mxu0
        %v2447 = vadd.f32 %v2094, %v2446
        %v2448 = vpop.f32.mrf.mxu0
        %v2449 = vadd.f32 %v2096, %v2448
        %v2450 = vpop.f32.mrf.mxu0
        %v2451 = vadd.f32 %v2098, %v2450
        %2452 = vmatprep.mubr.bf16.mxu0 %v1000
        %2453 = vmatmul.mubr.bf16.gmra.mxu0 %v999
        %v2454 = vpop.f32.mrf.mxu0
        %v2455 = vadd.f32 %v2102, %v2454
        %v2456 = vpop.f32.mrf.mxu0
        %v2457 = vadd.f32 %v2104, %v2456
        %v2458 = vpop.f32.mrf.mxu0
        %v2459 = vadd.f32 %v2106, %v2458
        %v2460 = vpop.f32.mrf.mxu0
        %v2461 = vadd.f32 %v2108, %v2460
        %2462 = vmatprep.mubr.bf16.mxu0 %v1004
        %2463 = vmatmul.mubr.bf16.gmra.mxu0 %v1003
        %v2464 = vpop.f32.mrf.mxu0
        %v2465 = vadd.f32 %v2112, %v2464
        %v2466 = vpop.f32.mrf.mxu0
        %v2467 = vadd.f32 %v2114, %v2466
        %v2468 = vpop.f32.mrf.mxu0
        %v2469 = vadd.f32 %v2116, %v2468
        %v2470 = vpop.f32.mrf.mxu0
        %v2471 = vadd.f32 %v2118, %v2470
        %2472 = vmatprep.mubr.bf16.mxu0 %v1008
        %2473 = vmatmul.mubr.bf16.gmra.mxu0 %v1007
        %v2474 = vpop.f32.mrf.mxu0
        %v2475 = vadd.f32 %v2122, %v2474
        %v2476 = vpop.f32.mrf.mxu0
        %v2477 = vadd.f32 %v2124, %v2476
        %v2478 = vpop.f32.mrf.mxu0
        %v2479 = vadd.f32 %v2126, %v2478
        %v2480 = vpop.f32.mrf.mxu0
        %v2481 = vadd.f32 %v2128, %v2480
        %2482 = vdwg.mxu0
        %2483 = vmatprep.subr.bf16.mxu0 %v1552
        %2484 = vmatpush1.bf16.msra.mxu0 %v1551
        %2485 = vmatprep.subr.bf16.mxu0 %v1548
        %2486 = vmatpush1.bf16.msra.mxu0 %v1547
        %2487 = vmatprep.subr.bf16.mxu0 %v1544
        %2488 = vmatpush1.bf16.msra.mxu0 %v1543
        %2489 = vmatprep.subr.bf16.mxu0 %v1540
        %2490 = vmatpush1.bf16.msra.mxu0 %v1539
        %2491 = vmatprep.subr.bf16.mxu0 %v1536
        %2492 = vmatpush1.bf16.msra.mxu0 %v1535
        %2493 = vmatprep.subr.bf16.mxu0 %v1532
        %2494 = vmatpush1.bf16.msra.mxu0 %v1531
        %2495 = vmatprep.subr.bf16.mxu0 %v1528
        %2496 = vmatpush1.bf16.msra.mxu0 %v1527
        %2497 = vmatprep.subr.bf16.mxu0 %v1524
        %2498 = vmatpush1.bf16.msra.mxu0 %v1523
        %2499 = vmatprep.subr.bf16.mxu0 %v1584
        %2500 = vmatpush2.bf16.msra.mxu0 %v1583
        %2501 = vmatprep.subr.bf16.mxu0 %v1580
        %2502 = vmatpush2.bf16.msra.mxu0 %v1579
        %2503 = vmatprep.subr.bf16.mxu0 %v1576
        %2504 = vmatpush2.bf16.msra.mxu0 %v1575
        %2505 = vmatprep.subr.bf16.mxu0 %v1572
        %2506 = vmatpush2.bf16.msra.mxu0 %v1571
        %2507 = vmatprep.subr.bf16.mxu0 %v1568
        %2508 = vmatpush2.bf16.msra.mxu0 %v1567
        %2509 = vmatprep.subr.bf16.mxu0 %v1564
        %2510 = vmatpush2.bf16.msra.mxu0 %v1563
        %2511 = vmatprep.subr.bf16.mxu0 %v1560
        %2512 = vmatpush2.bf16.msra.mxu0 %v1559
        %2513 = vmatprep.subr.bf16.mxu0 %v1556
        %2514 = vmatpush2.bf16.msra.mxu0 %v1555
        %2515 = vmatprep.mubr.bf16.mxu0 %v882
        %2516 = vmatmul.mubr.bf16.gmra.mxu0 %v881
        %v2517 = vpop.f32.mrf.mxu0
        %v2518 = vadd.f32 %v488, %v2517
        %v2519 = vpop.f32.mrf.mxu0
        %v2520 = vadd.f32 %v492, %v2519
        %v2521 = vpop.f32.mrf.mxu0
        %v2522 = vadd.f32 %v488, %v2521
        %v2523 = vpop.f32.mrf.mxu0
        %v2524 = vadd.f32 %v492, %v2523
        %2525 = vmatprep.mubr.bf16.mxu0 %v886
        %2526 = vmatmul.mubr.bf16.gmra.mxu0 %v885
        %v2527 = vpop.f32.mrf.mxu0
        %v2528 = vadd.f32 %v488, %v2527
        %v2529 = vpop.f32.mrf.mxu0
        %v2530 = vadd.f32 %v492, %v2529
        %v2531 = vpop.f32.mrf.mxu0
        %v2532 = vadd.f32 %v488, %v2531
        %v2533 = vpop.f32.mrf.mxu0
        %v2534 = vadd.f32 %v492, %v2533
        %2535 = vmatprep.mubr.bf16.mxu0 %v890
        %2536 = vmatmul.mubr.bf16.gmra.mxu0 %v889
        %v2537 = vpop.f32.mrf.mxu0
        %v2538 = vadd.f32 %v488, %v2537
        %v2539 = vpop.f32.mrf.mxu0
        %v2540 = vadd.f32 %v492, %v2539
        %v2541 = vpop.f32.mrf.mxu0
        %v2542 = vadd.f32 %v488, %v2541
        %v2543 = vpop.f32.mrf.mxu0
        %v2544 = vadd.f32 %v492, %v2543
        %2545 = vmatprep.mubr.bf16.mxu0 %v894
        %2546 = vmatmul.mubr.bf16.gmra.mxu0 %v893
        %v2547 = vpop.f32.mrf.mxu0
        %v2548 = vadd.f32 %v488, %v2547
        %v2549 = vpop.f32.mrf.mxu0
        %v2550 = vadd.f32 %v492, %v2549
        %v2551 = vpop.f32.mrf.mxu0
        %v2552 = vadd.f32 %v488, %v2551
        %v2553 = vpop.f32.mrf.mxu0
        %v2554 = vadd.f32 %v492, %v2553
        %2555 = vmatprep.mubr.bf16.mxu0 %v898
        %2556 = vmatmul.mubr.bf16.gmra.mxu0 %v897
        %v2557 = vpop.f32.mrf.mxu0
        %v2558 = vadd.f32 %v488, %v2557
        %v2559 = vpop.f32.mrf.mxu0
        %v2560 = vadd.f32 %v492, %v2559
        %v2561 = vpop.f32.mrf.mxu0
        %v2562 = vadd.f32 %v488, %v2561
        %v2563 = vpop.f32.mrf.mxu0
        %v2564 = vadd.f32 %v492, %v2563
        %2565 = vmatprep.mubr.bf16.mxu0 %v902
        %2566 = vmatmul.mubr.bf16.gmra.mxu0 %v901
        %v2567 = vpop.f32.mrf.mxu0
        %v2568 = vadd.f32 %v488, %v2567
        %v2569 = vpop.f32.mrf.mxu0
        %v2570 = vadd.f32 %v492, %v2569
        %v2571 = vpop.f32.mrf.mxu0
        %v2572 = vadd.f32 %v488, %v2571
        %v2573 = vpop.f32.mrf.mxu0
        %v2574 = vadd.f32 %v492, %v2573
        %2575 = vmatprep.mubr.bf16.mxu0 %v906
        %2576 = vmatmul.mubr.bf16.gmra.mxu0 %v905
        %v2577 = vpop.f32.mrf.mxu0
        %v2578 = vadd.f32 %v488, %v2577
        %v2579 = vpop.f32.mrf.mxu0
        %v2580 = vadd.f32 %v492, %v2579
        %v2581 = vpop.f32.mrf.mxu0
        %v2582 = vadd.f32 %v488, %v2581
        %v2583 = vpop.f32.mrf.mxu0
        %v2584 = vadd.f32 %v492, %v2583
        %2585 = vmatprep.mubr.bf16.mxu0 %v910
        %2586 = vmatmul.mubr.bf16.gmra.mxu0 %v909
        %v2587 = vpop.f32.mrf.mxu0
        %v2588 = vadd.f32 %v488, %v2587
        %v2589 = vpop.f32.mrf.mxu0
        %v2590 = vadd.f32 %v492, %v2589
        %v2591 = vpop.f32.mrf.mxu0
        %v2592 = vadd.f32 %v488, %v2591
        %v2593 = vpop.f32.mrf.mxu0
        %v2594 = vadd.f32 %v492, %v2593
        %2595 = vmatprep.mubr.bf16.mxu0 %v914
        %2596 = vmatmul.mubr.bf16.gmra.mxu0 %v913
        %v2597 = vpop.f32.mrf.mxu0
        %v2598 = vadd.f32 %v488, %v2597
        %v2599 = vpop.f32.mrf.mxu0
        %v2600 = vadd.f32 %v492, %v2599
        %v2601 = vpop.f32.mrf.mxu0
        %v2602 = vadd.f32 %v488, %v2601
        %v2603 = vpop.f32.mrf.mxu0
        %v2604 = vadd.f32 %v492, %v2603
        %2605 = vmatprep.mubr.bf16.mxu0 %v918
        %2606 = vmatmul.mubr.bf16.gmra.mxu0 %v917
        %v2607 = vpop.f32.mrf.mxu0
        %v2608 = vadd.f32 %v488, %v2607
        %v2609 = vpop.f32.mrf.mxu0
        %v2610 = vadd.f32 %v492, %v2609
        %v2611 = vpop.f32.mrf.mxu0
        %v2612 = vadd.f32 %v488, %v2611
        %v2613 = vpop.f32.mrf.mxu0
        %v2614 = vadd.f32 %v492, %v2613
        %2615 = vmatprep.mubr.bf16.mxu0 %v922
        %2616 = vmatmul.mubr.bf16.gmra.mxu0 %v921
        %v2617 = vpop.f32.mrf.mxu0
        %v2618 = vadd.f32 %v488, %v2617
        %v2619 = vpop.f32.mrf.mxu0
        %v2620 = vadd.f32 %v492, %v2619
        %v2621 = vpop.f32.mrf.mxu0
        %v2622 = vadd.f32 %v488, %v2621
        %v2623 = vpop.f32.mrf.mxu0
        %v2624 = vadd.f32 %v492, %v2623
        %2625 = vmatprep.mubr.bf16.mxu0 %v926
        %2626 = vmatmul.mubr.bf16.gmra.mxu0 %v925
        %v2627 = vpop.f32.mrf.mxu0
        %v2628 = vadd.f32 %v488, %v2627
        %v2629 = vpop.f32.mrf.mxu0
        %v2630 = vadd.f32 %v492, %v2629
        %v2631 = vpop.f32.mrf.mxu0
        %v2632 = vadd.f32 %v488, %v2631
        %v2633 = vpop.f32.mrf.mxu0
        %v2634 = vadd.f32 %v492, %v2633
        %2635 = vmatprep.mubr.bf16.mxu0 %v930
        %2636 = vmatmul.mubr.bf16.gmra.mxu0 %v929
        %v2637 = vpop.f32.mrf.mxu0
        %v2638 = vadd.f32 %v488, %v2637
        %v2639 = vpop.f32.mrf.mxu0
        %v2640 = vadd.f32 %v492, %v2639
        %v2641 = vpop.f32.mrf.mxu0
        %v2642 = vadd.f32 %v488, %v2641
        %v2643 = vpop.f32.mrf.mxu0
        %v2644 = vadd.f32 %v492, %v2643
        %2645 = vmatprep.mubr.bf16.mxu0 %v934
        %2646 = vmatmul.mubr.bf16.gmra.mxu0 %v933
        %v2647 = vpop.f32.mrf.mxu0
        %v2648 = vadd.f32 %v488, %v2647
        %v2649 = vpop.f32.mrf.mxu0
        %v2650 = vadd.f32 %v492, %v2649
        %v2651 = vpop.f32.mrf.mxu0
        %v2652 = vadd.f32 %v488, %v2651
        %v2653 = vpop.f32.mrf.mxu0
        %v2654 = vadd.f32 %v492, %v2653
        %2655 = vmatprep.mubr.bf16.mxu0 %v938
        %2656 = vmatmul.mubr.bf16.gmra.mxu0 %v937
        %v2657 = vpop.f32.mrf.mxu0
        %v2658 = vadd.f32 %v488, %v2657
        %v2659 = vpop.f32.mrf.mxu0
        %v2660 = vadd.f32 %v492, %v2659
        %v2661 = vpop.f32.mrf.mxu0
        %v2662 = vadd.f32 %v488, %v2661
        %v2663 = vpop.f32.mrf.mxu0
        %v2664 = vadd.f32 %v492, %v2663
        %2665 = vmatprep.mubr.bf16.mxu0 %v942
        %2666 = vmatmul.mubr.bf16.gmra.mxu0 %v941
        %v2667 = vpop.f32.mrf.mxu0
        %v2668 = vadd.f32 %v488, %v2667
        %v2669 = vpop.f32.mrf.mxu0
        %v2670 = vadd.f32 %v492, %v2669
        %v2671 = vpop.f32.mrf.mxu0
        %v2672 = vadd.f32 %v488, %v2671
        %v2673 = vpop.f32.mrf.mxu0
        %v2674 = vadd.f32 %v492, %v2673
        %2675 = vmatprep.mubr.bf16.mxu0 %v946
        %2676 = vmatmul.mubr.bf16.gmra.mxu0 %v945
        %v2677 = vpop.f32.mrf.mxu0
        %v2678 = vadd.f32 %v488, %v2677
        %v2679 = vpop.f32.mrf.mxu0
        %v2680 = vadd.f32 %v492, %v2679
        %v2681 = vpop.f32.mrf.mxu0
        %v2682 = vadd.f32 %v488, %v2681
        %v2683 = vpop.f32.mrf.mxu0
        %v2684 = vadd.f32 %v492, %v2683
        %2685 = vmatprep.mubr.bf16.mxu0 %v950
        %2686 = vmatmul.mubr.bf16.gmra.mxu0 %v949
        %v2687 = vpop.f32.mrf.mxu0
        %v2688 = vadd.f32 %v488, %v2687
        %v2689 = vpop.f32.mrf.mxu0
        %v2690 = vadd.f32 %v492, %v2689
        %v2691 = vpop.f32.mrf.mxu0
        %v2692 = vadd.f32 %v488, %v2691
        %v2693 = vpop.f32.mrf.mxu0
        %v2694 = vadd.f32 %v492, %v2693
        %2695 = vmatprep.mubr.bf16.mxu0 %v954
        %2696 = vmatmul.mubr.bf16.gmra.mxu0 %v953
        %v2697 = vpop.f32.mrf.mxu0
        %v2698 = vadd.f32 %v488, %v2697
        %v2699 = vpop.f32.mrf.mxu0
        %v2700 = vadd.f32 %v492, %v2699
        %v2701 = vpop.f32.mrf.mxu0
        %v2702 = vadd.f32 %v488, %v2701
        %v2703 = vpop.f32.mrf.mxu0
        %v2704 = vadd.f32 %v492, %v2703
        %2705 = vmatprep.mubr.bf16.mxu0 %v958
        %2706 = vmatmul.mubr.bf16.gmra.mxu0 %v957
        %v2707 = vpop.f32.mrf.mxu0
        %v2708 = vadd.f32 %v488, %v2707
        %v2709 = vpop.f32.mrf.mxu0
        %v2710 = vadd.f32 %v492, %v2709
        %v2711 = vpop.f32.mrf.mxu0
        %v2712 = vadd.f32 %v488, %v2711
        %v2713 = vpop.f32.mrf.mxu0
        %v2714 = vadd.f32 %v492, %v2713
        %2715 = vmatprep.mubr.bf16.mxu0 %v962
        %2716 = vmatmul.mubr.bf16.gmra.mxu0 %v961
        %v2717 = vpop.f32.mrf.mxu0
        %v2718 = vadd.f32 %v488, %v2717
        %v2719 = vpop.f32.mrf.mxu0
        %v2720 = vadd.f32 %v492, %v2719
        %v2721 = vpop.f32.mrf.mxu0
        %v2722 = vadd.f32 %v488, %v2721
        %v2723 = vpop.f32.mrf.mxu0
        %v2724 = vadd.f32 %v492, %v2723
        %2725 = vmatprep.mubr.bf16.mxu0 %v966
        %2726 = vmatmul.mubr.bf16.gmra.mxu0 %v965
        %v2727 = vpop.f32.mrf.mxu0
        %v2728 = vadd.f32 %v488, %v2727
        %v2729 = vpop.f32.mrf.mxu0
        %v2730 = vadd.f32 %v492, %v2729
        %v2731 = vpop.f32.mrf.mxu0
        %v2732 = vadd.f32 %v488, %v2731
        %v2733 = vpop.f32.mrf.mxu0
        %v2734 = vadd.f32 %v492, %v2733
        %2735 = vmatprep.mubr.bf16.mxu0 %v970
        %2736 = vmatmul.mubr.bf16.gmra.mxu0 %v969
        %v2737 = vpop.f32.mrf.mxu0
        %v2738 = vadd.f32 %v488, %v2737
        %v2739 = vpop.f32.mrf.mxu0
        %v2740 = vadd.f32 %v492, %v2739
        %v2741 = vpop.f32.mrf.mxu0
        %v2742 = vadd.f32 %v488, %v2741
        %v2743 = vpop.f32.mrf.mxu0
        %v2744 = vadd.f32 %v492, %v2743
        %2745 = vmatprep.mubr.bf16.mxu0 %v974
        %2746 = vmatmul.mubr.bf16.gmra.mxu0 %v973
        %v2747 = vpop.f32.mrf.mxu0
        %v2748 = vadd.f32 %v488, %v2747
        %v2749 = vpop.f32.mrf.mxu0
        %v2750 = vadd.f32 %v492, %v2749
        %v2751 = vpop.f32.mrf.mxu0
        %v2752 = vadd.f32 %v488, %v2751
        %v2753 = vpop.f32.mrf.mxu0
        %v2754 = vadd.f32 %v492, %v2753
        %2755 = vmatprep.mubr.bf16.mxu0 %v978
        %2756 = vmatmul.mubr.bf16.gmra.mxu0 %v977
        %v2757 = vpop.f32.mrf.mxu0
        %v2758 = vadd.f32 %v488, %v2757
        %v2759 = vpop.f32.mrf.mxu0
        %v2760 = vadd.f32 %v492, %v2759
        %v2761 = vpop.f32.mrf.mxu0
        %v2762 = vadd.f32 %v488, %v2761
        %v2763 = vpop.f32.mrf.mxu0
        %v2764 = vadd.f32 %v492, %v2763
        %2765 = vmatprep.mubr.bf16.mxu0 %v982
        %2766 = vmatmul.mubr.bf16.gmra.mxu0 %v981
        %v2767 = vpop.f32.mrf.mxu0
        %v2768 = vadd.f32 %v488, %v2767
        %v2769 = vpop.f32.mrf.mxu0
        %v2770 = vadd.f32 %v492, %v2769
        %v2771 = vpop.f32.mrf.mxu0
        %v2772 = vadd.f32 %v488, %v2771
        %v2773 = vpop.f32.mrf.mxu0
        %v2774 = vadd.f32 %v492, %v2773
        %2775 = vmatprep.mubr.bf16.mxu0 %v986
        %2776 = vmatmul.mubr.bf16.gmra.mxu0 %v985
        %v2777 = vpop.f32.mrf.mxu0
        %v2778 = vadd.f32 %v488, %v2777
        %v2779 = vpop.f32.mrf.mxu0
        %v2780 = vadd.f32 %v492, %v2779
        %v2781 = vpop.f32.mrf.mxu0
        %v2782 = vadd.f32 %v488, %v2781
        %v2783 = vpop.f32.mrf.mxu0
        %v2784 = vadd.f32 %v492, %v2783
        %2785 = vmatprep.mubr.bf16.mxu0 %v990
        %2786 = vmatmul.mubr.bf16.gmra.mxu0 %v989
        %v2787 = vpop.f32.mrf.mxu0
        %v2788 = vadd.f32 %v488, %v2787
        %v2789 = vpop.f32.mrf.mxu0
        %v2790 = vadd.f32 %v492, %v2789
        %v2791 = vpop.f32.mrf.mxu0
        %v2792 = vadd.f32 %v488, %v2791
        %v2793 = vpop.f32.mrf.mxu0
        %v2794 = vadd.f32 %v492, %v2793
        %2795 = vmatprep.mubr.bf16.mxu0 %v994
        %2796 = vmatmul.mubr.bf16.gmra.mxu0 %v993
        %v2797 = vpop.f32.mrf.mxu0
        %v2798 = vadd.f32 %v488, %v2797
        %v2799 = vpop.f32.mrf.mxu0
        %v2800 = vadd.f32 %v492, %v2799
        %v2801 = vpop.f32.mrf.mxu0
        %v2802 = vadd.f32 %v488, %v2801
        %v2803 = vpop.f32.mrf.mxu0
        %v2804 = vadd.f32 %v492, %v2803
        %2805 = vmatprep.mubr.bf16.mxu0 %v998
        %2806 = vmatmul.mubr.bf16.gmra.mxu0 %v997
        %v2807 = vpop.f32.mrf.mxu0
        %v2808 = vadd.f32 %v488, %v2807
        %v2809 = vpop.f32.mrf.mxu0
        %v2810 = vadd.f32 %v492, %v2809
        %v2811 = vpop.f32.mrf.mxu0
        %v2812 = vadd.f32 %v488, %v2811
        %v2813 = vpop.f32.mrf.mxu0
        %v2814 = vadd.f32 %v492, %v2813
        %2815 = vmatprep.mubr.bf16.mxu0 %v1002
        %2816 = vmatmul.mubr.bf16.gmra.mxu0 %v1001
        %v2817 = vpop.f32.mrf.mxu0
        %v2818 = vadd.f32 %v488, %v2817
        %v2819 = vpop.f32.mrf.mxu0
        %v2820 = vadd.f32 %v492, %v2819
        %v2821 = vpop.f32.mrf.mxu0
        %v2822 = vadd.f32 %v488, %v2821
        %v2823 = vpop.f32.mrf.mxu0
        %v2824 = vadd.f32 %v492, %v2823
        %2825 = vmatprep.mubr.bf16.mxu0 %v1006
        %2826 = vmatmul.mubr.bf16.gmra.mxu0 %v1005
        %v2827 = vpop.f32.mrf.mxu0
        %v2828 = vadd.f32 %v488, %v2827
        %v2829 = vpop.f32.mrf.mxu0
        %v2830 = vadd.f32 %v492, %v2829
        %v2831 = vpop.f32.mrf.mxu0
        %v2832 = vadd.f32 %v488, %v2831
        %v2833 = vpop.f32.mrf.mxu0
        %v2834 = vadd.f32 %v492, %v2833
        %2835 = vdwg.mxu0
        %2836 = vmatprep.subr.bf16.mxu0 %v1616
        %2837 = vmatpush1.bf16.msra.mxu0 %v1615
        %2838 = vmatprep.subr.bf16.mxu0 %v1612
        %2839 = vmatpush1.bf16.msra.mxu0 %v1611
        %2840 = vmatprep.subr.bf16.mxu0 %v1608
        %2841 = vmatpush1.bf16.msra.mxu0 %v1607
        %2842 = vmatprep.subr.bf16.mxu0 %v1604
        %2843 = vmatpush1.bf16.msra.mxu0 %v1603
        %2844 = vmatprep.subr.bf16.mxu0 %v1600
        %2845 = vmatpush1.bf16.msra.mxu0 %v1599
        %2846 = vmatprep.subr.bf16.mxu0 %v1596
        %2847 = vmatpush1.bf16.msra.mxu0 %v1595
        %2848 = vmatprep.subr.bf16.mxu0 %v1592
        %2849 = vmatpush1.bf16.msra.mxu0 %v1591
        %2850 = vmatprep.subr.bf16.mxu0 %v1588
        %2851 = vmatpush1.bf16.msra.mxu0 %v1587
        %2852 = vmatprep.subr.bf16.mxu0 %v1648
        %2853 = vmatpush2.bf16.msra.mxu0 %v1647
        %2854 = vmatprep.subr.bf16.mxu0 %v1644
        %2855 = vmatpush2.bf16.msra.mxu0 %v1643
        %2856 = vmatprep.subr.bf16.mxu0 %v1640
        %2857 = vmatpush2.bf16.msra.mxu0 %v1639
        %2858 = vmatprep.subr.bf16.mxu0 %v1636
        %2859 = vmatpush2.bf16.msra.mxu0 %v1635
        %2860 = vmatprep.subr.bf16.mxu0 %v1632
        %2861 = vmatpush2.bf16.msra.mxu0 %v1631
        %2862 = vmatprep.subr.bf16.mxu0 %v1628
        %2863 = vmatpush2.bf16.msra.mxu0 %v1627
        %2864 = vmatprep.subr.bf16.mxu0 %v1624
        %2865 = vmatpush2.bf16.msra.mxu0 %v1623
        %2866 = vmatprep.subr.bf16.mxu0 %v1620
        %2867 = vmatpush2.bf16.msra.mxu0 %v1619
        %2868 = vmatprep.mubr.bf16.mxu0 %v884
        %2869 = vmatmul.mubr.bf16.gmra.mxu0 %v883
        %v2870 = vpop.f32.mrf.mxu0
        %v2871 = vadd.f32 %v2518, %v2870
        %v2872 = vpop.f32.mrf.mxu0
        %v2873 = vadd.f32 %v2520, %v2872
        %v2874 = vpop.f32.mrf.mxu0
        %v2875 = vadd.f32 %v2522, %v2874
        %v2876 = vpop.f32.mrf.mxu0
        %v2877 = vadd.f32 %v2524, %v2876
        %2878 = vmatprep.mubr.bf16.mxu0 %v888
        %2879 = vmatmul.mubr.bf16.gmra.mxu0 %v887
        %v2880 = vpop.f32.mrf.mxu0
        %v2881 = vadd.f32 %v2528, %v2880
        %v2882 = vpop.f32.mrf.mxu0
        %v2883 = vadd.f32 %v2530, %v2882
        %v2884 = vpop.f32.mrf.mxu0
        %v2885 = vadd.f32 %v2532, %v2884
        %v2886 = vpop.f32.mrf.mxu0
        %v2887 = vadd.f32 %v2534, %v2886
        %2888 = vmatprep.mubr.bf16.mxu0 %v892
        %2889 = vmatmul.mubr.bf16.gmra.mxu0 %v891
        %v2890 = vpop.f32.mrf.mxu0
        %v2891 = vadd.f32 %v2538, %v2890
        %v2892 = vpop.f32.mrf.mxu0
        %v2893 = vadd.f32 %v2540, %v2892
        %v2894 = vpop.f32.mrf.mxu0
        %v2895 = vadd.f32 %v2542, %v2894
        %v2896 = vpop.f32.mrf.mxu0
        %v2897 = vadd.f32 %v2544, %v2896
        %2898 = vmatprep.mubr.bf16.mxu0 %v896
        %2899 = vmatmul.mubr.bf16.gmra.mxu0 %v895
        %v2900 = vpop.f32.mrf.mxu0
        %v2901 = vadd.f32 %v2548, %v2900
        %v2902 = vpop.f32.mrf.mxu0
        %v2903 = vadd.f32 %v2550, %v2902
        %v2904 = vpop.f32.mrf.mxu0
        %v2905 = vadd.f32 %v2552, %v2904
        %v2906 = vpop.f32.mrf.mxu0
        %v2907 = vadd.f32 %v2554, %v2906
        %2908 = vmatprep.mubr.bf16.mxu0 %v900
        %2909 = vmatmul.mubr.bf16.gmra.mxu0 %v899
        %v2910 = vpop.f32.mrf.mxu0
        %v2911 = vadd.f32 %v2558, %v2910
        %v2912 = vpop.f32.mrf.mxu0
        %v2913 = vadd.f32 %v2560, %v2912
        %v2914 = vpop.f32.mrf.mxu0
        %v2915 = vadd.f32 %v2562, %v2914
        %v2916 = vpop.f32.mrf.mxu0
        %v2917 = vadd.f32 %v2564, %v2916
        %2918 = vmatprep.mubr.bf16.mxu0 %v904
        %2919 = vmatmul.mubr.bf16.gmra.mxu0 %v903
        %v2920 = vpop.f32.mrf.mxu0
        %v2921 = vadd.f32 %v2568, %v2920
        %v2922 = vpop.f32.mrf.mxu0
        %v2923 = vadd.f32 %v2570, %v2922
        %v2924 = vpop.f32.mrf.mxu0
        %v2925 = vadd.f32 %v2572, %v2924
        %v2926 = vpop.f32.mrf.mxu0
        %v2927 = vadd.f32 %v2574, %v2926
        %2928 = vmatprep.mubr.bf16.mxu0 %v908
        %2929 = vmatmul.mubr.bf16.gmra.mxu0 %v907
        %v2930 = vpop.f32.mrf.mxu0
        %v2931 = vadd.f32 %v2578, %v2930
        %v2932 = vpop.f32.mrf.mxu0
        %v2933 = vadd.f32 %v2580, %v2932
        %v2934 = vpop.f32.mrf.mxu0
        %v2935 = vadd.f32 %v2582, %v2934
        %v2936 = vpop.f32.mrf.mxu0
        %v2937 = vadd.f32 %v2584, %v2936
        %2938 = vmatprep.mubr.bf16.mxu0 %v912
        %2939 = vmatmul.mubr.bf16.gmra.mxu0 %v911
        %v2940 = vpop.f32.mrf.mxu0
        %v2941 = vadd.f32 %v2588, %v2940
        %v2942 = vpop.f32.mrf.mxu0
        %v2943 = vadd.f32 %v2590, %v2942
        %v2944 = vpop.f32.mrf.mxu0
        %v2945 = vadd.f32 %v2592, %v2944
        %v2946 = vpop.f32.mrf.mxu0
        %v2947 = vadd.f32 %v2594, %v2946
        %2948 = vmatprep.mubr.bf16.mxu0 %v916
        %2949 = vmatmul.mubr.bf16.gmra.mxu0 %v915
        %v2950 = vpop.f32.mrf.mxu0
        %v2951 = vadd.f32 %v2598, %v2950
        %v2952 = vpop.f32.mrf.mxu0
        %v2953 = vadd.f32 %v2600, %v2952
        %v2954 = vpop.f32.mrf.mxu0
        %v2955 = vadd.f32 %v2602, %v2954
        %v2956 = vpop.f32.mrf.mxu0
        %v2957 = vadd.f32 %v2604, %v2956
        %2958 = vmatprep.mubr.bf16.mxu0 %v920
        %2959 = vmatmul.mubr.bf16.gmra.mxu0 %v919
        %v2960 = vpop.f32.mrf.mxu0
        %v2961 = vadd.f32 %v2608, %v2960
        %v2962 = vpop.f32.mrf.mxu0
        %v2963 = vadd.f32 %v2610, %v2962
        %v2964 = vpop.f32.mrf.mxu0
        %v2965 = vadd.f32 %v2612, %v2964
        %v2966 = vpop.f32.mrf.mxu0
        %v2967 = vadd.f32 %v2614, %v2966
        %2968 = vmatprep.mubr.bf16.mxu0 %v924
        %2969 = vmatmul.mubr.bf16.gmra.mxu0 %v923
        %v2970 = vpop.f32.mrf.mxu0
        %v2971 = vadd.f32 %v2618, %v2970
        %v2972 = vpop.f32.mrf.mxu0
        %v2973 = vadd.f32 %v2620, %v2972
        %v2974 = vpop.f32.mrf.mxu0
        %v2975 = vadd.f32 %v2622, %v2974
        %v2976 = vpop.f32.mrf.mxu0
        %v2977 = vadd.f32 %v2624, %v2976
        %2978 = vmatprep.mubr.bf16.mxu0 %v928
        %2979 = vmatmul.mubr.bf16.gmra.mxu0 %v927
        %v2980 = vpop.f32.mrf.mxu0
        %v2981 = vadd.f32 %v2628, %v2980
        %v2982 = vpop.f32.mrf.mxu0
        %v2983 = vadd.f32 %v2630, %v2982
        %v2984 = vpop.f32.mrf.mxu0
        %v2985 = vadd.f32 %v2632, %v2984
        %v2986 = vpop.f32.mrf.mxu0
        %v2987 = vadd.f32 %v2634, %v2986
        %2988 = vmatprep.mubr.bf16.mxu0 %v932
        %2989 = vmatmul.mubr.bf16.gmra.mxu0 %v931
        %v2990 = vpop.f32.mrf.mxu0
        %v2991 = vadd.f32 %v2638, %v2990
        %v2992 = vpop.f32.mrf.mxu0
        %v2993 = vadd.f32 %v2640, %v2992
        %v2994 = vpop.f32.mrf.mxu0
        %v2995 = vadd.f32 %v2642, %v2994
        %v2996 = vpop.f32.mrf.mxu0
        %v2997 = vadd.f32 %v2644, %v2996
        %2998 = vmatprep.mubr.bf16.mxu0 %v936
        %2999 = vmatmul.mubr.bf16.gmra.mxu0 %v935
        %v3000 = vpop.f32.mrf.mxu0
        %v3001 = vadd.f32 %v2648, %v3000
        %v3002 = vpop.f32.mrf.mxu0
        %v3003 = vadd.f32 %v2650, %v3002
        %v3004 = vpop.f32.mrf.mxu0
        %v3005 = vadd.f32 %v2652, %v3004
        %v3006 = vpop.f32.mrf.mxu0
        %v3007 = vadd.f32 %v2654, %v3006
        %3008 = vmatprep.mubr.bf16.mxu0 %v940
        %3009 = vmatmul.mubr.bf16.gmra.mxu0 %v939
        %v3010 = vpop.f32.mrf.mxu0
        %v3011 = vadd.f32 %v2658, %v3010
        %v3012 = vpop.f32.mrf.mxu0
        %v3013 = vadd.f32 %v2660, %v3012
        %v3014 = vpop.f32.mrf.mxu0
        %v3015 = vadd.f32 %v2662, %v3014
        %v3016 = vpop.f32.mrf.mxu0
        %v3017 = vadd.f32 %v2664, %v3016
        %3018 = vmatprep.mubr.bf16.mxu0 %v944
        %3019 = vmatmul.mubr.bf16.gmra.mxu0 %v943
        %v3020 = vpop.f32.mrf.mxu0
        %v3021 = vadd.f32 %v2668, %v3020
        %v3022 = vpop.f32.mrf.mxu0
        %v3023 = vadd.f32 %v2670, %v3022
        %v3024 = vpop.f32.mrf.mxu0
        %v3025 = vadd.f32 %v2672, %v3024
        %v3026 = vpop.f32.mrf.mxu0
        %v3027 = vadd.f32 %v2674, %v3026
        %3028 = vmatprep.mubr.bf16.mxu0 %v948
        %3029 = vmatmul.mubr.bf16.gmra.mxu0 %v947
        %v3030 = vpop.f32.mrf.mxu0
        %v3031 = vadd.f32 %v2678, %v3030
        %v3032 = vpop.f32.mrf.mxu0
        %v3033 = vadd.f32 %v2680, %v3032
        %v3034 = vpop.f32.mrf.mxu0
        %v3035 = vadd.f32 %v2682, %v3034
        %v3036 = vpop.f32.mrf.mxu0
        %v3037 = vadd.f32 %v2684, %v3036
        %3038 = vmatprep.mubr.bf16.mxu0 %v952
        %3039 = vmatmul.mubr.bf16.gmra.mxu0 %v951
        %v3040 = vpop.f32.mrf.mxu0
        %v3041 = vadd.f32 %v2688, %v3040
        %v3042 = vpop.f32.mrf.mxu0
        %v3043 = vadd.f32 %v2690, %v3042
        %v3044 = vpop.f32.mrf.mxu0
        %v3045 = vadd.f32 %v2692, %v3044
        %v3046 = vpop.f32.mrf.mxu0
        %v3047 = vadd.f32 %v2694, %v3046
        %3048 = vmatprep.mubr.bf16.mxu0 %v956
        %3049 = vmatmul.mubr.bf16.gmra.mxu0 %v955
        %v3050 = vpop.f32.mrf.mxu0
        %v3051 = vadd.f32 %v2698, %v3050
        %v3052 = vpop.f32.mrf.mxu0
        %v3053 = vadd.f32 %v2700, %v3052
        %v3054 = vpop.f32.mrf.mxu0
        %v3055 = vadd.f32 %v2702, %v3054
        %v3056 = vpop.f32.mrf.mxu0
        %v3057 = vadd.f32 %v2704, %v3056
        %3058 = vmatprep.mubr.bf16.mxu0 %v960
        %3059 = vmatmul.mubr.bf16.gmra.mxu0 %v959
        %v3060 = vpop.f32.mrf.mxu0
        %v3061 = vadd.f32 %v2708, %v3060
        %v3062 = vpop.f32.mrf.mxu0
        %v3063 = vadd.f32 %v2710, %v3062
        %v3064 = vpop.f32.mrf.mxu0
        %v3065 = vadd.f32 %v2712, %v3064
        %v3066 = vpop.f32.mrf.mxu0
        %v3067 = vadd.f32 %v2714, %v3066
        %3068 = vmatprep.mubr.bf16.mxu0 %v964
        %3069 = vmatmul.mubr.bf16.gmra.mxu0 %v963
        %v3070 = vpop.f32.mrf.mxu0
        %v3071 = vadd.f32 %v2718, %v3070
        %v3072 = vpop.f32.mrf.mxu0
        %v3073 = vadd.f32 %v2720, %v3072
        %v3074 = vpop.f32.mrf.mxu0
        %v3075 = vadd.f32 %v2722, %v3074
        %v3076 = vpop.f32.mrf.mxu0
        %v3077 = vadd.f32 %v2724, %v3076
        %3078 = vmatprep.mubr.bf16.mxu0 %v968
        %3079 = vmatmul.mubr.bf16.gmra.mxu0 %v967
        %v3080 = vpop.f32.mrf.mxu0
        %v3081 = vadd.f32 %v2728, %v3080
        %v3082 = vpop.f32.mrf.mxu0
        %v3083 = vadd.f32 %v2730, %v3082
        %v3084 = vpop.f32.mrf.mxu0
        %v3085 = vadd.f32 %v2732, %v3084
        %v3086 = vpop.f32.mrf.mxu0
        %v3087 = vadd.f32 %v2734, %v3086
        %3088 = vmatprep.mubr.bf16.mxu0 %v972
        %3089 = vmatmul.mubr.bf16.gmra.mxu0 %v971
        %v3090 = vpop.f32.mrf.mxu0
        %v3091 = vadd.f32 %v2738, %v3090
        %v3092 = vpop.f32.mrf.mxu0
        %v3093 = vadd.f32 %v2740, %v3092
        %v3094 = vpop.f32.mrf.mxu0
        %v3095 = vadd.f32 %v2742, %v3094
        %v3096 = vpop.f32.mrf.mxu0
        %v3097 = vadd.f32 %v2744, %v3096
        %3098 = vmatprep.mubr.bf16.mxu0 %v976
        %3099 = vmatmul.mubr.bf16.gmra.mxu0 %v975
        %v3100 = vpop.f32.mrf.mxu0
        %v3101 = vadd.f32 %v2748, %v3100
        %v3102 = vpop.f32.mrf.mxu0
        %v3103 = vadd.f32 %v2750, %v3102
        %v3104 = vpop.f32.mrf.mxu0
        %v3105 = vadd.f32 %v2752, %v3104
        %v3106 = vpop.f32.mrf.mxu0
        %v3107 = vadd.f32 %v2754, %v3106
        %3108 = vmatprep.mubr.bf16.mxu0 %v980
        %3109 = vmatmul.mubr.bf16.gmra.mxu0 %v979
        %v3110 = vpop.f32.mrf.mxu0
        %v3111 = vadd.f32 %v2758, %v3110
        %v3112 = vpop.f32.mrf.mxu0
        %v3113 = vadd.f32 %v2760, %v3112
        %v3114 = vpop.f32.mrf.mxu0
        %v3115 = vadd.f32 %v2762, %v3114
        %v3116 = vpop.f32.mrf.mxu0
        %v3117 = vadd.f32 %v2764, %v3116
        %3118 = vmatprep.mubr.bf16.mxu0 %v984
        %3119 = vmatmul.mubr.bf16.gmra.mxu0 %v983
        %v3120 = vpop.f32.mrf.mxu0
        %v3121 = vadd.f32 %v2768, %v3120
        %v3122 = vpop.f32.mrf.mxu0
        %v3123 = vadd.f32 %v2770, %v3122
        %v3124 = vpop.f32.mrf.mxu0
        %v3125 = vadd.f32 %v2772, %v3124
        %v3126 = vpop.f32.mrf.mxu0
        %v3127 = vadd.f32 %v2774, %v3126
        %3128 = vmatprep.mubr.bf16.mxu0 %v988
        %3129 = vmatmul.mubr.bf16.gmra.mxu0 %v987
        %v3130 = vpop.f32.mrf.mxu0
        %v3131 = vadd.f32 %v2778, %v3130
        %v3132 = vpop.f32.mrf.mxu0
        %v3133 = vadd.f32 %v2780, %v3132
        %v3134 = vpop.f32.mrf.mxu0
        %v3135 = vadd.f32 %v2782, %v3134
        %v3136 = vpop.f32.mrf.mxu0
        %v3137 = vadd.f32 %v2784, %v3136
        %3138 = vmatprep.mubr.bf16.mxu0 %v992
        %3139 = vmatmul.mubr.bf16.gmra.mxu0 %v991
        %v3140 = vpop.f32.mrf.mxu0
        %v3141 = vadd.f32 %v2788, %v3140
        %v3142 = vpop.f32.mrf.mxu0
        %v3143 = vadd.f32 %v2790, %v3142
        %v3144 = vpop.f32.mrf.mxu0
        %v3145 = vadd.f32 %v2792, %v3144
        %v3146 = vpop.f32.mrf.mxu0
        %v3147 = vadd.f32 %v2794, %v3146
        %3148 = vmatprep.mubr.bf16.mxu0 %v996
        %3149 = vmatmul.mubr.bf16.gmra.mxu0 %v995
        %v3150 = vpop.f32.mrf.mxu0
        %v3151 = vadd.f32 %v2798, %v3150
        %v3152 = vpop.f32.mrf.mxu0
        %v3153 = vadd.f32 %v2800, %v3152
        %v3154 = vpop.f32.mrf.mxu0
        %v3155 = vadd.f32 %v2802, %v3154
        %v3156 = vpop.f32.mrf.mxu0
        %v3157 = vadd.f32 %v2804, %v3156
        %3158 = vmatprep.mubr.bf16.mxu0 %v1000
        %3159 = vmatmul.mubr.bf16.gmra.mxu0 %v999
        %v3160 = vpop.f32.mrf.mxu0
        %v3161 = vadd.f32 %v2808, %v3160
        %v3162 = vpop.f32.mrf.mxu0
        %v3163 = vadd.f32 %v2810, %v3162
        %v3164 = vpop.f32.mrf.mxu0
        %v3165 = vadd.f32 %v2812, %v3164
        %v3166 = vpop.f32.mrf.mxu0
        %v3167 = vadd.f32 %v2814, %v3166
        %3168 = vmatprep.mubr.bf16.mxu0 %v1004
        %3169 = vmatmul.mubr.bf16.gmra.mxu0 %v1003
        %v3170 = vpop.f32.mrf.mxu0
        %v3171 = vadd.f32 %v2818, %v3170
        %v3172 = vpop.f32.mrf.mxu0
        %v3173 = vadd.f32 %v2820, %v3172
        %v3174 = vpop.f32.mrf.mxu0
        %v3175 = vadd.f32 %v2822, %v3174
        %v3176 = vpop.f32.mrf.mxu0
        %v3177 = vadd.f32 %v2824, %v3176
        %3178 = vmatprep.mubr.bf16.mxu0 %v1008
        %3179 = vmatmul.mubr.bf16.gmra.mxu0 %v1007
        %v3180 = vpop.f32.mrf.mxu0
        %v3181 = vadd.f32 %v2828, %v3180
        %v3182 = vpop.f32.mrf.mxu0
        %v3183 = vadd.f32 %v2830, %v3182
        %v3184 = vpop.f32.mrf.mxu0
        %v3185 = vadd.f32 %v2832, %v3184
        %v3186 = vpop.f32.mrf.mxu0
        %v3187 = vadd.f32 %v2834, %v3186
        %3188 = vdwg.mxu0
        %vm3189 = vcmp.gt.f32.partialorder %v2165, 0.0
        %vm3190 = vcmp.gt.f32.partialorder %v2167, 0.0
        %vm3191 = vcmp.gt.f32.partialorder %v2871, 0.0
        %vm3192 = vcmp.gt.f32.partialorder %v2873, 0.0
        %vm3193 = vcmp.gt.f32.partialorder %v2169, 0.0
        %vm3194 = vcmp.gt.f32.partialorder %v2171, 0.0
        %vm3195 = vcmp.gt.f32.partialorder %v2875, 0.0
        %vm3196 = vcmp.gt.f32.partialorder %v2877, 0.0
        %vm3197 = vcmp.gt.f32.partialorder %v2175, 0.0
        %vm3198 = vcmp.gt.f32.partialorder %v2177, 0.0
        %vm3199 = vcmp.gt.f32.partialorder %v2881, 0.0
        %vm3200 = vcmp.gt.f32.partialorder %v2883, 0.0
        %vm3201 = vcmp.gt.f32.partialorder %v2179, 0.0
        %vm3202 = vcmp.gt.f32.partialorder %v2181, 0.0
        %vm3203 = vcmp.gt.f32.partialorder %v2885, 0.0
        %vm3204 = vcmp.gt.f32.partialorder %v2887, 0.0
        %vm3205 = vcmp.gt.f32.partialorder %v2185, 0.0
        %vm3206 = vcmp.gt.f32.partialorder %v2187, 0.0
        %vm3207 = vcmp.gt.f32.partialorder %v2891, 0.0
        %vm3208 = vcmp.gt.f32.partialorder %v2893, 0.0
        %vm3209 = vcmp.gt.f32.partialorder %v2189, 0.0
        %vm3210 = vcmp.gt.f32.partialorder %v2191, 0.0
        %vm3211 = vcmp.gt.f32.partialorder %v2895, 0.0
        %vm3212 = vcmp.gt.f32.partialorder %v2897, 0.0
        %vm3213 = vcmp.gt.f32.partialorder %v2195, 0.0
        %vm3214 = vcmp.gt.f32.partialorder %v2197, 0.0
        %vm3215 = vcmp.gt.f32.partialorder %v2901, 0.0
        %vm3216 = vcmp.gt.f32.partialorder %v2903, 0.0
        %vm3217 = vcmp.gt.f32.partialorder %v2199, 0.0
        %vm3218 = vcmp.gt.f32.partialorder %v2201, 0.0
        %vm3219 = vcmp.gt.f32.partialorder %v2905, 0.0
        %vm3220 = vcmp.gt.f32.partialorder %v2907, 0.0
        %vm3221 = vcmp.gt.f32.partialorder %v2205, 0.0
        %vm3222 = vcmp.gt.f32.partialorder %v2207, 0.0
        %vm3223 = vcmp.gt.f32.partialorder %v2911, 0.0
        %vm3224 = vcmp.gt.f32.partialorder %v2913, 0.0
        %vm3225 = vcmp.gt.f32.partialorder %v2209, 0.0
        %vm3226 = vcmp.gt.f32.partialorder %v2211, 0.0
        %vm3227 = vcmp.gt.f32.partialorder %v2915, 0.0
        %vm3228 = vcmp.gt.f32.partialorder %v2917, 0.0
        %vm3229 = vcmp.gt.f32.partialorder %v2215, 0.0
        %vm3230 = vcmp.gt.f32.partialorder %v2217, 0.0
        %vm3231 = vcmp.gt.f32.partialorder %v2921, 0.0
        %vm3232 = vcmp.gt.f32.partialorder %v2923, 0.0
        %vm3233 = vcmp.gt.f32.partialorder %v2219, 0.0
        %vm3234 = vcmp.gt.f32.partialorder %v2221, 0.0
        %vm3235 = vcmp.gt.f32.partialorder %v2925, 0.0
        %vm3236 = vcmp.gt.f32.partialorder %v2927, 0.0
        %vm3237 = vcmp.gt.f32.partialorder %v2225, 0.0
        %vm3238 = vcmp.gt.f32.partialorder %v2227, 0.0
        %vm3239 = vcmp.gt.f32.partialorder %v2931, 0.0
        %vm3240 = vcmp.gt.f32.partialorder %v2933, 0.0
        %vm3241 = vcmp.gt.f32.partialorder %v2229, 0.0
        %vm3242 = vcmp.gt.f32.partialorder %v2231, 0.0
        %vm3243 = vcmp.gt.f32.partialorder %v2935, 0.0
        %vm3244 = vcmp.gt.f32.partialorder %v2937, 0.0
        %vm3245 = vcmp.gt.f32.partialorder %v2235, 0.0
        %vm3246 = vcmp.gt.f32.partialorder %v2237, 0.0
        %vm3247 = vcmp.gt.f32.partialorder %v2941, 0.0
        %vm3248 = vcmp.gt.f32.partialorder %v2943, 0.0
        %vm3249 = vcmp.gt.f32.partialorder %v2239, 0.0
        %vm3250 = vcmp.gt.f32.partialorder %v2241, 0.0
        %vm3251 = vcmp.gt.f32.partialorder %v2945, 0.0
        %vm3252 = vcmp.gt.f32.partialorder %v2947, 0.0
        %vm3253 = vcmp.gt.f32.partialorder %v2245, 0.0
        %vm3254 = vcmp.gt.f32.partialorder %v2247, 0.0
        %vm3255 = vcmp.gt.f32.partialorder %v2951, 0.0
        %vm3256 = vcmp.gt.f32.partialorder %v2953, 0.0
        %vm3257 = vcmp.gt.f32.partialorder %v2249, 0.0
        %vm3258 = vcmp.gt.f32.partialorder %v2251, 0.0
        %vm3259 = vcmp.gt.f32.partialorder %v2955, 0.0
        %vm3260 = vcmp.gt.f32.partialorder %v2957, 0.0
        %vm3261 = vcmp.gt.f32.partialorder %v2255, 0.0
        %vm3262 = vcmp.gt.f32.partialorder %v2257, 0.0
        %vm3263 = vcmp.gt.f32.partialorder %v2961, 0.0
        %vm3264 = vcmp.gt.f32.partialorder %v2963, 0.0
        %vm3265 = vcmp.gt.f32.partialorder %v2259, 0.0
        %vm3266 = vcmp.gt.f32.partialorder %v2261, 0.0
        %vm3267 = vcmp.gt.f32.partialorder %v2965, 0.0
        %vm3268 = vcmp.gt.f32.partialorder %v2967, 0.0
        %vm3269 = vcmp.gt.f32.partialorder %v2265, 0.0
        %vm3270 = vcmp.gt.f32.partialorder %v2267, 0.0
        %vm3271 = vcmp.gt.f32.partialorder %v2971, 0.0
        %vm3272 = vcmp.gt.f32.partialorder %v2973, 0.0
        %vm3273 = vcmp.gt.f32.partialorder %v2269, 0.0
        %vm3274 = vcmp.gt.f32.partialorder %v2271, 0.0
        %vm3275 = vcmp.gt.f32.partialorder %v2975, 0.0
        %vm3276 = vcmp.gt.f32.partialorder %v2977, 0.0
        %vm3277 = vcmp.gt.f32.partialorder %v2275, 0.0
        %vm3278 = vcmp.gt.f32.partialorder %v2277, 0.0
        %vm3279 = vcmp.gt.f32.partialorder %v2981, 0.0
        %vm3280 = vcmp.gt.f32.partialorder %v2983, 0.0
        %vm3281 = vcmp.gt.f32.partialorder %v2279, 0.0
        %vm3282 = vcmp.gt.f32.partialorder %v2281, 0.0
        %vm3283 = vcmp.gt.f32.partialorder %v2985, 0.0
        %vm3284 = vcmp.gt.f32.partialorder %v2987, 0.0
        %vm3285 = vcmp.gt.f32.partialorder %v2285, 0.0
        %vm3286 = vcmp.gt.f32.partialorder %v2287, 0.0
        %vm3287 = vcmp.gt.f32.partialorder %v2991, 0.0
        %vm3288 = vcmp.gt.f32.partialorder %v2993, 0.0
        %vm3289 = vcmp.gt.f32.partialorder %v2289, 0.0
        %vm3290 = vcmp.gt.f32.partialorder %v2291, 0.0
        %vm3291 = vcmp.gt.f32.partialorder %v2995, 0.0
        %vm3292 = vcmp.gt.f32.partialorder %v2997, 0.0
        %vm3293 = vcmp.gt.f32.partialorder %v2295, 0.0
        %vm3294 = vcmp.gt.f32.partialorder %v2297, 0.0
        %vm3295 = vcmp.gt.f32.partialorder %v3001, 0.0
        %vm3296 = vcmp.gt.f32.partialorder %v3003, 0.0
        %vm3297 = vcmp.gt.f32.partialorder %v2299, 0.0
        %vm3298 = vcmp.gt.f32.partialorder %v2301, 0.0
        %vm3299 = vcmp.gt.f32.partialorder %v3005, 0.0
        %vm3300 = vcmp.gt.f32.partialorder %v3007, 0.0
        %vm3301 = vcmp.gt.f32.partialorder %v2305, 0.0
        %vm3302 = vcmp.gt.f32.partialorder %v2307, 0.0
        %vm3303 = vcmp.gt.f32.partialorder %v3011, 0.0
        %vm3304 = vcmp.gt.f32.partialorder %v3013, 0.0
        %vm3305 = vcmp.gt.f32.partialorder %v2309, 0.0
        %vm3306 = vcmp.gt.f32.partialorder %v2311, 0.0
        %vm3307 = vcmp.gt.f32.partialorder %v3015, 0.0
        %vm3308 = vcmp.gt.f32.partialorder %v3017, 0.0
        %vm3309 = vcmp.gt.f32.partialorder %v2315, 0.0
        %vm3310 = vcmp.gt.f32.partialorder %v2317, 0.0
        %vm3311 = vcmp.gt.f32.partialorder %v3021, 0.0
        %vm3312 = vcmp.gt.f32.partialorder %v3023, 0.0
        %vm3313 = vcmp.gt.f32.partialorder %v2319, 0.0
        %vm3314 = vcmp.gt.f32.partialorder %v2321, 0.0
        %vm3315 = vcmp.gt.f32.partialorder %v3025, 0.0
        %vm3316 = vcmp.gt.f32.partialorder %v3027, 0.0
        %vm3317 = vcmp.gt.f32.partialorder %v2325, 0.0
        %vm3318 = vcmp.gt.f32.partialorder %v2327, 0.0
        %vm3319 = vcmp.gt.f32.partialorder %v3031, 0.0
        %vm3320 = vcmp.gt.f32.partialorder %v3033, 0.0
        %vm3321 = vcmp.gt.f32.partialorder %v2329, 0.0
        %vm3322 = vcmp.gt.f32.partialorder %v2331, 0.0
        %vm3323 = vcmp.gt.f32.partialorder %v3035, 0.0
        %vm3324 = vcmp.gt.f32.partialorder %v3037, 0.0
        %vm3325 = vcmp.gt.f32.partialorder %v2335, 0.0
        %vm3326 = vcmp.gt.f32.partialorder %v2337, 0.0
        %vm3327 = vcmp.gt.f32.partialorder %v3041, 0.0
        %vm3328 = vcmp.gt.f32.partialorder %v3043, 0.0
        %vm3329 = vcmp.gt.f32.partialorder %v2339, 0.0
        %vm3330 = vcmp.gt.f32.partialorder %v2341, 0.0
        %vm3331 = vcmp.gt.f32.partialorder %v3045, 0.0
        %vm3332 = vcmp.gt.f32.partialorder %v3047, 0.0
        %vm3333 = vcmp.gt.f32.partialorder %v2345, 0.0
        %vm3334 = vcmp.gt.f32.partialorder %v2347, 0.0
        %vm3335 = vcmp.gt.f32.partialorder %v3051, 0.0
        %vm3336 = vcmp.gt.f32.partialorder %v3053, 0.0
        %vm3337 = vcmp.gt.f32.partialorder %v2349, 0.0
        %vm3338 = vcmp.gt.f32.partialorder %v2351, 0.0
        %vm3339 = vcmp.gt.f32.partialorder %v3055, 0.0
        %vm3340 = vcmp.gt.f32.partialorder %v3057, 0.0
        %vm3341 = vcmp.gt.f32.partialorder %v2355, 0.0
        %vm3342 = vcmp.gt.f32.partialorder %v2357, 0.0
        %vm3343 = vcmp.gt.f32.partialorder %v3061, 0.0
        %vm3344 = vcmp.gt.f32.partialorder %v3063, 0.0
        %vm3345 = vcmp.gt.f32.partialorder %v2359, 0.0
        %vm3346 = vcmp.gt.f32.partialorder %v2361, 0.0
        %vm3347 = vcmp.gt.f32.partialorder %v3065, 0.0
        %vm3348 = vcmp.gt.f32.partialorder %v3067, 0.0
        %vm3349 = vcmp.gt.f32.partialorder %v2365, 0.0
        %vm3350 = vcmp.gt.f32.partialorder %v2367, 0.0
        %vm3351 = vcmp.gt.f32.partialorder %v3071, 0.0
        %vm3352 = vcmp.gt.f32.partialorder %v3073, 0.0
        %vm3353 = vcmp.gt.f32.partialorder %v2369, 0.0
        %vm3354 = vcmp.gt.f32.partialorder %v2371, 0.0
        %vm3355 = vcmp.gt.f32.partialorder %v3075, 0.0
        %vm3356 = vcmp.gt.f32.partialorder %v3077, 0.0
        %vm3357 = vcmp.gt.f32.partialorder %v2375, 0.0
        %vm3358 = vcmp.gt.f32.partialorder %v2377, 0.0
        %vm3359 = vcmp.gt.f32.partialorder %v3081, 0.0
        %vm3360 = vcmp.gt.f32.partialorder %v3083, 0.0
        %vm3361 = vcmp.gt.f32.partialorder %v2379, 0.0
        %vm3362 = vcmp.gt.f32.partialorder %v2381, 0.0
        %vm3363 = vcmp.gt.f32.partialorder %v3085, 0.0
        %vm3364 = vcmp.gt.f32.partialorder %v3087, 0.0
        %vm3365 = vcmp.gt.f32.partialorder %v2385, 0.0
        %vm3366 = vcmp.gt.f32.partialorder %v2387, 0.0
        %vm3367 = vcmp.gt.f32.partialorder %v3091, 0.0
        %vm3368 = vcmp.gt.f32.partialorder %v3093, 0.0
        %vm3369 = vcmp.gt.f32.partialorder %v2389, 0.0
        %vm3370 = vcmp.gt.f32.partialorder %v2391, 0.0
        %vm3371 = vcmp.gt.f32.partialorder %v3095, 0.0
        %vm3372 = vcmp.gt.f32.partialorder %v3097, 0.0
        %vm3373 = vcmp.gt.f32.partialorder %v2395, 0.0
        %vm3374 = vcmp.gt.f32.partialorder %v2397, 0.0
        %vm3375 = vcmp.gt.f32.partialorder %v3101, 0.0
        %vm3376 = vcmp.gt.f32.partialorder %v3103, 0.0
        %vm3377 = vcmp.gt.f32.partialorder %v2399, 0.0
        %vm3378 = vcmp.gt.f32.partialorder %v2401, 0.0
        %vm3379 = vcmp.gt.f32.partialorder %v3105, 0.0
        %vm3380 = vcmp.gt.f32.partialorder %v3107, 0.0
        %vm3381 = vcmp.gt.f32.partialorder %v2405, 0.0
        %vm3382 = vcmp.gt.f32.partialorder %v2407, 0.0
        %vm3383 = vcmp.gt.f32.partialorder %v3111, 0.0
        %vm3384 = vcmp.gt.f32.partialorder %v3113, 0.0
        %vm3385 = vcmp.gt.f32.partialorder %v2409, 0.0
        %vm3386 = vcmp.gt.f32.partialorder %v2411, 0.0
        %vm3387 = vcmp.gt.f32.partialorder %v3115, 0.0
        %vm3388 = vcmp.gt.f32.partialorder %v3117, 0.0
        %vm3389 = vcmp.gt.f32.partialorder %v2415, 0.0
        %vm3390 = vcmp.gt.f32.partialorder %v2417, 0.0
        %vm3391 = vcmp.gt.f32.partialorder %v3121, 0.0
        %vm3392 = vcmp.gt.f32.partialorder %v3123, 0.0
        %vm3393 = vcmp.gt.f32.partialorder %v2419, 0.0
        %vm3394 = vcmp.gt.f32.partialorder %v2421, 0.0
        %vm3395 = vcmp.gt.f32.partialorder %v3125, 0.0
        %vm3396 = vcmp.gt.f32.partialorder %v3127, 0.0
        %vm3397 = vcmp.gt.f32.partialorder %v2425, 0.0
        %vm3398 = vcmp.gt.f32.partialorder %v2427, 0.0
        %vm3399 = vcmp.gt.f32.partialorder %v3131, 0.0
        %vm3400 = vcmp.gt.f32.partialorder %v3133, 0.0
        %vm3401 = vcmp.gt.f32.partialorder %v2429, 0.0
        %vm3402 = vcmp.gt.f32.partialorder %v2431, 0.0
        %vm3403 = vcmp.gt.f32.partialorder %v3135, 0.0
        %vm3404 = vcmp.gt.f32.partialorder %v3137, 0.0
        %vm3405 = vcmp.gt.f32.partialorder %v2435, 0.0
        %vm3406 = vcmp.gt.f32.partialorder %v2437, 0.0
        %vm3407 = vcmp.gt.f32.partialorder %v3141, 0.0
        %vm3408 = vcmp.gt.f32.partialorder %v3143, 0.0
        %vm3409 = vcmp.gt.f32.partialorder %v2439, 0.0
        %vm3410 = vcmp.gt.f32.partialorder %v2441, 0.0
        %vm3411 = vcmp.gt.f32.partialorder %v3145, 0.0
        %vm3412 = vcmp.gt.f32.partialorder %v3147, 0.0
        %vm3413 = vcmp.gt.f32.partialorder %v2445, 0.0
        %vm3414 = vcmp.gt.f32.partialorder %v2447, 0.0
        %vm3415 = vcmp.gt.f32.partialorder %v3151, 0.0
        %vm3416 = vcmp.gt.f32.partialorder %v3153, 0.0
        %vm3417 = vcmp.gt.f32.partialorder %v2449, 0.0
        %vm3418 = vcmp.gt.f32.partialorder %v2451, 0.0
        %vm3419 = vcmp.gt.f32.partialorder %v3155, 0.0
        %vm3420 = vcmp.gt.f32.partialorder %v3157, 0.0
        %vm3421 = vcmp.gt.f32.partialorder %v2455, 0.0
        %vm3422 = vcmp.gt.f32.partialorder %v2457, 0.0
        %vm3423 = vcmp.gt.f32.partialorder %v3161, 0.0
        %vm3424 = vcmp.gt.f32.partialorder %v3163, 0.0
        %vm3425 = vcmp.gt.f32.partialorder %v2459, 0.0
        %vm3426 = vcmp.gt.f32.partialorder %v2461, 0.0
        %vm3427 = vcmp.gt.f32.partialorder %v3165, 0.0
        %vm3428 = vcmp.gt.f32.partialorder %v3167, 0.0
        %vm3429 = vcmp.gt.f32.partialorder %v2465, 0.0
        %vm3430 = vcmp.gt.f32.partialorder %v2467, 0.0
        %vm3431 = vcmp.gt.f32.partialorder %v3171, 0.0
        %vm3432 = vcmp.gt.f32.partialorder %v3173, 0.0
        %vm3433 = vcmp.gt.f32.partialorder %v2469, 0.0
        %vm3434 = vcmp.gt.f32.partialorder %v2471, 0.0
        %vm3435 = vcmp.gt.f32.partialorder %v3175, 0.0
        %vm3436 = vcmp.gt.f32.partialorder %v3177, 0.0
        %vm3437 = vcmp.gt.f32.partialorder %v2475, 0.0
        %vm3438 = vcmp.gt.f32.partialorder %v2477, 0.0
        %vm3439 = vcmp.gt.f32.partialorder %v3181, 0.0
        %vm3440 = vcmp.gt.f32.partialorder %v3183, 0.0
        %vm3441 = vcmp.gt.f32.partialorder %v2479, 0.0
        %vm3442 = vcmp.gt.f32.partialorder %v2481, 0.0
        %vm3443 = vcmp.gt.f32.partialorder %v3185, 0.0
        %vm3444 = vcmp.gt.f32.partialorder %v3187, 0.0
        %v3445 = vmul.f32 %v2165, 0.2
        %v3446 = vmul.f32 %v2167, 0.2
        %v3447 = vmul.f32 %v2871, 0.2
        %v3448 = vmul.f32 %v2873, 0.2
        %v3449 = vmul.f32 %v2169, 0.2
        %v3450 = vmul.f32 %v2171, 0.2
        %v3451 = vmul.f32 %v2875, 0.2
        %v3452 = vmul.f32 %v2877, 0.2
        %v3453 = vmul.f32 %v2175, 0.2
        %v3454 = vmul.f32 %v2177, 0.2
        %v3455 = vmul.f32 %v2881, 0.2
        %v3456 = vmul.f32 %v2883, 0.2
        %v3457 = vmul.f32 %v2179, 0.2
        %v3458 = vmul.f32 %v2181, 0.2
        %v3459 = vmul.f32 %v2885, 0.2
        %v3460 = vmul.f32 %v2887, 0.2
        %v3461 = vmul.f32 %v2185, 0.2
        %v3462 = vmul.f32 %v2187, 0.2
        %v3463 = vmul.f32 %v2891, 0.2
        %v3464 = vmul.f32 %v2893, 0.2
        %v3465 = vmul.f32 %v2189, 0.2
        %v3466 = vmul.f32 %v2191, 0.2
        %v3467 = vmul.f32 %v2895, 0.2
        %v3468 = vmul.f32 %v2897, 0.2
        %v3469 = vmul.f32 %v2195, 0.2
        %v3470 = vmul.f32 %v2197, 0.2
        %v3471 = vmul.f32 %v2901, 0.2
        %v3472 = vmul.f32 %v2903, 0.2
        %v3473 = vmul.f32 %v2199, 0.2
        %v3474 = vmul.f32 %v2201, 0.2
        %v3475 = vmul.f32 %v2905, 0.2
        %v3476 = vmul.f32 %v2907, 0.2
        %v3477 = vmul.f32 %v2205, 0.2
        %v3478 = vmul.f32 %v2207, 0.2
        %v3479 = vmul.f32 %v2911, 0.2
        %v3480 = vmul.f32 %v2913, 0.2
        %v3481 = vmul.f32 %v2209, 0.2
        %v3482 = vmul.f32 %v2211, 0.2
        %v3483 = vmul.f32 %v2915, 0.2
        %v3484 = vmul.f32 %v2917, 0.2
        %v3485 = vmul.f32 %v2215, 0.2
        %v3486 = vmul.f32 %v2217, 0.2
        %v3487 = vmul.f32 %v2921, 0.2
        %v3488 = vmul.f32 %v2923, 0.2
        %v3489 = vmul.f32 %v2219, 0.2
        %v3490 = vmul.f32 %v2221, 0.2
        %v3491 = vmul.f32 %v2925, 0.2
        %v3492 = vmul.f32 %v2927, 0.2
        %v3493 = vmul.f32 %v2225, 0.2
        %v3494 = vmul.f32 %v2227, 0.2
        %v3495 = vmul.f32 %v2931, 0.2
        %v3496 = vmul.f32 %v2933, 0.2
        %v3497 = vmul.f32 %v2229, 0.2
        %v3498 = vmul.f32 %v2231, 0.2
        %v3499 = vmul.f32 %v2935, 0.2
        %v3500 = vmul.f32 %v2937, 0.2
        %v3501 = vmul.f32 %v2235, 0.2
        %v3502 = vmul.f32 %v2237, 0.2
        %v3503 = vmul.f32 %v2941, 0.2
        %v3504 = vmul.f32 %v2943, 0.2
        %v3505 = vmul.f32 %v2239, 0.2
        %v3506 = vmul.f32 %v2241, 0.2
        %v3507 = vmul.f32 %v2945, 0.2
        %v3508 = vmul.f32 %v2947, 0.2
        %v3509 = vmul.f32 %v2245, 0.2
        %v3510 = vmul.f32 %v2247, 0.2
        %v3511 = vmul.f32 %v2951, 0.2
        %v3512 = vmul.f32 %v2953, 0.2
        %v3513 = vmul.f32 %v2249, 0.2
        %v3514 = vmul.f32 %v2251, 0.2
        %v3515 = vmul.f32 %v2955, 0.2
        %v3516 = vmul.f32 %v2957, 0.2
        %v3517 = vmul.f32 %v2255, 0.2
        %v3518 = vmul.f32 %v2257, 0.2
        %v3519 = vmul.f32 %v2961, 0.2
        %v3520 = vmul.f32 %v2963, 0.2
        %v3521 = vmul.f32 %v2259, 0.2
        %v3522 = vmul.f32 %v2261, 0.2
        %v3523 = vmul.f32 %v2965, 0.2
        %v3524 = vmul.f32 %v2967, 0.2
        %v3525 = vmul.f32 %v2265, 0.2
        %v3526 = vmul.f32 %v2267, 0.2
        %v3527 = vmul.f32 %v2971, 0.2
        %v3528 = vmul.f32 %v2973, 0.2
        %v3529 = vmul.f32 %v2269, 0.2
        %v3530 = vmul.f32 %v2271, 0.2
        %v3531 = vmul.f32 %v2975, 0.2
        %v3532 = vmul.f32 %v2977, 0.2
        %v3533 = vmul.f32 %v2275, 0.2
        %v3534 = vmul.f32 %v2277, 0.2
        %v3535 = vmul.f32 %v2981, 0.2
        %v3536 = vmul.f32 %v2983, 0.2
        %v3537 = vmul.f32 %v2279, 0.2
        %v3538 = vmul.f32 %v2281, 0.2
        %v3539 = vmul.f32 %v2985, 0.2
        %v3540 = vmul.f32 %v2987, 0.2
        %v3541 = vmul.f32 %v2285, 0.2
        %v3542 = vmul.f32 %v2287, 0.2
        %v3543 = vmul.f32 %v2991, 0.2
        %v3544 = vmul.f32 %v2993, 0.2
        %v3545 = vmul.f32 %v2289, 0.2
        %v3546 = vmul.f32 %v2291, 0.2
        %v3547 = vmul.f32 %v2995, 0.2
        %v3548 = vmul.f32 %v2997, 0.2
        %v3549 = vmul.f32 %v2295, 0.2
        %v3550 = vmul.f32 %v2297, 0.2
        %v3551 = vmul.f32 %v3001, 0.2
        %v3552 = vmul.f32 %v3003, 0.2
        %v3553 = vmul.f32 %v2299, 0.2
        %v3554 = vmul.f32 %v2301, 0.2
        %v3555 = vmul.f32 %v3005, 0.2
        %v3556 = vmul.f32 %v3007, 0.2
        %v3557 = vmul.f32 %v2305, 0.2
        %v3558 = vmul.f32 %v2307, 0.2
        %v3559 = vmul.f32 %v3011, 0.2
        %v3560 = vmul.f32 %v3013, 0.2
        %v3561 = vmul.f32 %v2309, 0.2
        %v3562 = vmul.f32 %v2311, 0.2
        %v3563 = vmul.f32 %v3015, 0.2
        %v3564 = vmul.f32 %v3017, 0.2
        %v3565 = vmul.f32 %v2315, 0.2
        %v3566 = vmul.f32 %v2317, 0.2
        %v3567 = vmul.f32 %v3021, 0.2
        %v3568 = vmul.f32 %v3023, 0.2
        %v3569 = vmul.f32 %v2319, 0.2
        %v3570 = vmul.f32 %v2321, 0.2
        %v3571 = vmul.f32 %v3025, 0.2
        %v3572 = vmul.f32 %v3027, 0.2
        %v3573 = vmul.f32 %v2325, 0.2
        %v3574 = vmul.f32 %v2327, 0.2
        %v3575 = vmul.f32 %v3031, 0.2
        %v3576 = vmul.f32 %v3033, 0.2
        %v3577 = vmul.f32 %v2329, 0.2
        %v3578 = vmul.f32 %v2331, 0.2
        %v3579 = vmul.f32 %v3035, 0.2
        %v3580 = vmul.f32 %v3037, 0.2
        %v3581 = vmul.f32 %v2335, 0.2
        %v3582 = vmul.f32 %v2337, 0.2
        %v3583 = vmul.f32 %v3041, 0.2
        %v3584 = vmul.f32 %v3043, 0.2
        %v3585 = vmul.f32 %v2339, 0.2
        %v3586 = vmul.f32 %v2341, 0.2
        %v3587 = vmul.f32 %v3045, 0.2
        %v3588 = vmul.f32 %v3047, 0.2
        %v3589 = vmul.f32 %v2345, 0.2
        %v3590 = vmul.f32 %v2347, 0.2
        %v3591 = vmul.f32 %v3051, 0.2
        %v3592 = vmul.f32 %v3053, 0.2
        %v3593 = vmul.f32 %v2349, 0.2
        %v3594 = vmul.f32 %v2351, 0.2
        %v3595 = vmul.f32 %v3055, 0.2
        %v3596 = vmul.f32 %v3057, 0.2
        %v3597 = vmul.f32 %v2355, 0.2
        %v3598 = vmul.f32 %v2357, 0.2
        %v3599 = vmul.f32 %v3061, 0.2
        %v3600 = vmul.f32 %v3063, 0.2
        %v3601 = vmul.f32 %v2359, 0.2
        %v3602 = vmul.f32 %v2361, 0.2
        %v3603 = vmul.f32 %v3065, 0.2
        %v3604 = vmul.f32 %v3067, 0.2
        %v3605 = vmul.f32 %v2365, 0.2
        %v3606 = vmul.f32 %v2367, 0.2
        %v3607 = vmul.f32 %v3071, 0.2
        %v3608 = vmul.f32 %v3073, 0.2
        %v3609 = vmul.f32 %v2369, 0.2
        %v3610 = vmul.f32 %v2371, 0.2
        %v3611 = vmul.f32 %v3075, 0.2
        %v3612 = vmul.f32 %v3077, 0.2
        %v3613 = vmul.f32 %v2375, 0.2
        %v3614 = vmul.f32 %v2377, 0.2
        %v3615 = vmul.f32 %v3081, 0.2
        %v3616 = vmul.f32 %v3083, 0.2
        %v3617 = vmul.f32 %v2379, 0.2
        %v3618 = vmul.f32 %v2381, 0.2
        %v3619 = vmul.f32 %v3085, 0.2
        %v3620 = vmul.f32 %v3087, 0.2
        %v3621 = vmul.f32 %v2385, 0.2
        %v3622 = vmul.f32 %v2387, 0.2
        %v3623 = vmul.f32 %v3091, 0.2
        %v3624 = vmul.f32 %v3093, 0.2
        %v3625 = vmul.f32 %v2389, 0.2
        %v3626 = vmul.f32 %v2391, 0.2
        %v3627 = vmul.f32 %v3095, 0.2
        %v3628 = vmul.f32 %v3097, 0.2
        %v3629 = vmul.f32 %v2395, 0.2
        %v3630 = vmul.f32 %v2397, 0.2
        %v3631 = vmul.f32 %v3101, 0.2
        %v3632 = vmul.f32 %v3103, 0.2
        %v3633 = vmul.f32 %v2399, 0.2
        %v3634 = vmul.f32 %v2401, 0.2
        %v3635 = vmul.f32 %v3105, 0.2
        %v3636 = vmul.f32 %v3107, 0.2
        %v3637 = vmul.f32 %v2405, 0.2
        %v3638 = vmul.f32 %v2407, 0.2
        %v3639 = vmul.f32 %v3111, 0.2
        %v3640 = vmul.f32 %v3113, 0.2
        %v3641 = vmul.f32 %v2409, 0.2
        %v3642 = vmul.f32 %v2411, 0.2
        %v3643 = vmul.f32 %v3115, 0.2
        %v3644 = vmul.f32 %v3117, 0.2
        %v3645 = vmul.f32 %v2415, 0.2
        %v3646 = vmul.f32 %v2417, 0.2
        %v3647 = vmul.f32 %v3121, 0.2
        %v3648 = vmul.f32 %v3123, 0.2
        %v3649 = vmul.f32 %v2419, 0.2
        %v3650 = vmul.f32 %v2421, 0.2
        %v3651 = vmul.f32 %v3125, 0.2
        %v3652 = vmul.f32 %v3127, 0.2
        %v3653 = vmul.f32 %v2425, 0.2
        %v3654 = vmul.f32 %v2427, 0.2
        %v3655 = vmul.f32 %v3131, 0.2
        %v3656 = vmul.f32 %v3133, 0.2
        %v3657 = vmul.f32 %v2429, 0.2
        %v3658 = vmul.f32 %v2431, 0.2
        %v3659 = vmul.f32 %v3135, 0.2
        %v3660 = vmul.f32 %v3137, 0.2
        %v3661 = vmul.f32 %v2435, 0.2
        %v3662 = vmul.f32 %v2437, 0.2
        %v3663 = vmul.f32 %v3141, 0.2
        %v3664 = vmul.f32 %v3143, 0.2
        %v3665 = vmul.f32 %v2439, 0.2
        %v3666 = vmul.f32 %v2441, 0.2
        %v3667 = vmul.f32 %v3145, 0.2
        %v3668 = vmul.f32 %v3147, 0.2
        %v3669 = vmul.f32 %v2445, 0.2
        %v3670 = vmul.f32 %v2447, 0.2
        %v3671 = vmul.f32 %v3151, 0.2
        %v3672 = vmul.f32 %v3153, 0.2
        %v3673 = vmul.f32 %v2449, 0.2
        %v3674 = vmul.f32 %v2451, 0.2
        %v3675 = vmul.f32 %v3155, 0.2
        %v3676 = vmul.f32 %v3157, 0.2
        %v3677 = vmul.f32 %v2455, 0.2
        %v3678 = vmul.f32 %v2457, 0.2
        %v3679 = vmul.f32 %v3161, 0.2
        %v3680 = vmul.f32 %v3163, 0.2
        %v3681 = vmul.f32 %v2459, 0.2
        %v3682 = vmul.f32 %v2461, 0.2
        %v3683 = vmul.f32 %v3165, 0.2
        %v3684 = vmul.f32 %v3167, 0.2
        %v3685 = vmul.f32 %v2465, 0.2
        %v3686 = vmul.f32 %v2467, 0.2
        %v3687 = vmul.f32 %v3171, 0.2
        %v3688 = vmul.f32 %v3173, 0.2
        %v3689 = vmul.f32 %v2469, 0.2
        %v3690 = vmul.f32 %v2471, 0.2
        %v3691 = vmul.f32 %v3175, 0.2
        %v3692 = vmul.f32 %v3177, 0.2
        %v3693 = vmul.f32 %v2475, 0.2
        %v3694 = vmul.f32 %v2477, 0.2
        %v3695 = vmul.f32 %v3181, 0.2
        %v3696 = vmul.f32 %v3183, 0.2
        %v3697 = vmul.f32 %v2479, 0.2
        %v3698 = vmul.f32 %v2481, 0.2
        %v3699 = vmul.f32 %v3185, 0.2
        %v3700 = vmul.f32 %v3187, 0.2
        %v3701 = vsel %vm3189, %v2165, %v3445
        %v3702 = vsel %vm3190, %v2167, %v3446
        %v3703 = vsel %vm3191, %v2871, %v3447
        %v3704 = vsel %vm3192, %v2873, %v3448
        %v3705 = vsel %vm3193, %v2169, %v3449
        %v3706 = vsel %vm3194, %v2171, %v3450
        %v3707 = vsel %vm3195, %v2875, %v3451
        %v3708 = vsel %vm3196, %v2877, %v3452
        %v3709 = vsel %vm3197, %v2175, %v3453
        %v3710 = vsel %vm3198, %v2177, %v3454
        %v3711 = vsel %vm3199, %v2881, %v3455
        %v3712 = vsel %vm3200, %v2883, %v3456
        %v3713 = vsel %vm3201, %v2179, %v3457
        %v3714 = vsel %vm3202, %v2181, %v3458
        %v3715 = vsel %vm3203, %v2885, %v3459
        %v3716 = vsel %vm3204, %v2887, %v3460
        %v3717 = vsel %vm3205, %v2185, %v3461
        %v3718 = vsel %vm3206, %v2187, %v3462
        %v3719 = vsel %vm3207, %v2891, %v3463
        %v3720 = vsel %vm3208, %v2893, %v3464
        %v3721 = vsel %vm3209, %v2189, %v3465
        %v3722 = vsel %vm3210, %v2191, %v3466
        %v3723 = vsel %vm3211, %v2895, %v3467
        %v3724 = vsel %vm3212, %v2897, %v3468
        %v3725 = vsel %vm3213, %v2195, %v3469
        %v3726 = vsel %vm3214, %v2197, %v3470
        %v3727 = vsel %vm3215, %v2901, %v3471
        %v3728 = vsel %vm3216, %v2903, %v3472
        %v3729 = vsel %vm3217, %v2199, %v3473
        %v3730 = vsel %vm3218, %v2201, %v3474
        %v3731 = vsel %vm3219, %v2905, %v3475
        %v3732 = vsel %vm3220, %v2907, %v3476
        %v3733 = vsel %vm3221, %v2205, %v3477
        %v3734 = vsel %vm3222, %v2207, %v3478
        %v3735 = vsel %vm3223, %v2911, %v3479
        %v3736 = vsel %vm3224, %v2913, %v3480
        %v3737 = vsel %vm3225, %v2209, %v3481
        %v3738 = vsel %vm3226, %v2211, %v3482
        %v3739 = vsel %vm3227, %v2915, %v3483
        %v3740 = vsel %vm3228, %v2917, %v3484
        %v3741 = vsel %vm3229, %v2215, %v3485
        %v3742 = vsel %vm3230, %v2217, %v3486
        %v3743 = vsel %vm3231, %v2921, %v3487
        %v3744 = vsel %vm3232, %v2923, %v3488
        %v3745 = vsel %vm3233, %v2219, %v3489
        %v3746 = vsel %vm3234, %v2221, %v3490
        %v3747 = vsel %vm3235, %v2925, %v3491
        %v3748 = vsel %vm3236, %v2927, %v3492
        %v3749 = vsel %vm3237, %v2225, %v3493
        %v3750 = vsel %vm3238, %v2227, %v3494
        %v3751 = vsel %vm3239, %v2931, %v3495
        %v3752 = vsel %vm3240, %v2933, %v3496
        %v3753 = vsel %vm3241, %v2229, %v3497
        %v3754 = vsel %vm3242, %v2231, %v3498
        %v3755 = vsel %vm3243, %v2935, %v3499
        %v3756 = vsel %vm3244, %v2937, %v3500
        %v3757 = vsel %vm3245, %v2235, %v3501
        %v3758 = vsel %vm3246, %v2237, %v3502
        %v3759 = vsel %vm3247, %v2941, %v3503
        %v3760 = vsel %vm3248, %v2943, %v3504
        %v3761 = vsel %vm3249, %v2239, %v3505
        %v3762 = vsel %vm3250, %v2241, %v3506
        %v3763 = vsel %vm3251, %v2945, %v3507
        %v3764 = vsel %vm3252, %v2947, %v3508
        %v3765 = vsel %vm3253, %v2245, %v3509
        %v3766 = vsel %vm3254, %v2247, %v3510
        %v3767 = vsel %vm3255, %v2951, %v3511
        %v3768 = vsel %vm3256, %v2953, %v3512
        %v3769 = vsel %vm3257, %v2249, %v3513
        %v3770 = vsel %vm3258, %v2251, %v3514
        %v3771 = vsel %vm3259, %v2955, %v3515
        %v3772 = vsel %vm3260, %v2957, %v3516
        %v3773 = vsel %vm3261, %v2255, %v3517
        %v3774 = vsel %vm3262, %v2257, %v3518
        %v3775 = vsel %vm3263, %v2961, %v3519
        %v3776 = vsel %vm3264, %v2963, %v3520
        %v3777 = vsel %vm3265, %v2259, %v3521
        %v3778 = vsel %vm3266, %v2261, %v3522
        %v3779 = vsel %vm3267, %v2965, %v3523
        %v3780 = vsel %vm3268, %v2967, %v3524
        %v3781 = vsel %vm3269, %v2265, %v3525
        %v3782 = vsel %vm3270, %v2267, %v3526
        %v3783 = vsel %vm3271, %v2971, %v3527
        %v3784 = vsel %vm3272, %v2973, %v3528
        %v3785 = vsel %vm3273, %v2269, %v3529
        %v3786 = vsel %vm3274, %v2271, %v3530
        %v3787 = vsel %vm3275, %v2975, %v3531
        %v3788 = vsel %vm3276, %v2977, %v3532
        %v3789 = vsel %vm3277, %v2275, %v3533
        %v3790 = vsel %vm3278, %v2277, %v3534
        %v3791 = vsel %vm3279, %v2981, %v3535
        %v3792 = vsel %vm3280, %v2983, %v3536
        %v3793 = vsel %vm3281, %v2279, %v3537
        %v3794 = vsel %vm3282, %v2281, %v3538
        %v3795 = vsel %vm3283, %v2985, %v3539
        %v3796 = vsel %vm3284, %v2987, %v3540
        %v3797 = vsel %vm3285, %v2285, %v3541
        %v3798 = vsel %vm3286, %v2287, %v3542
        %v3799 = vsel %vm3287, %v2991, %v3543
        %v3800 = vsel %vm3288, %v2993, %v3544
        %v3801 = vsel %vm3289, %v2289, %v3545
        %v3802 = vsel %vm3290, %v2291, %v3546
        %v3803 = vsel %vm3291, %v2995, %v3547
        %v3804 = vsel %vm3292, %v2997, %v3548
        %v3805 = vsel %vm3293, %v2295, %v3549
        %v3806 = vsel %vm3294, %v2297, %v3550
        %v3807 = vsel %vm3295, %v3001, %v3551
        %v3808 = vsel %vm3296, %v3003, %v3552
        %v3809 = vsel %vm3297, %v2299, %v3553
        %v3810 = vsel %vm3298, %v2301, %v3554
        %v3811 = vsel %vm3299, %v3005, %v3555
        %v3812 = vsel %vm3300, %v3007, %v3556
        %v3813 = vsel %vm3301, %v2305, %v3557
        %v3814 = vsel %vm3302, %v2307, %v3558
        %v3815 = vsel %vm3303, %v3011, %v3559
        %v3816 = vsel %vm3304, %v3013, %v3560
        %v3817 = vsel %vm3305, %v2309, %v3561
        %v3818 = vsel %vm3306, %v2311, %v3562
        %v3819 = vsel %vm3307, %v3015, %v3563
        %v3820 = vsel %vm3308, %v3017, %v3564
        %v3821 = vsel %vm3309, %v2315, %v3565
        %v3822 = vsel %vm3310, %v2317, %v3566
        %v3823 = vsel %vm3311, %v3021, %v3567
        %v3824 = vsel %vm3312, %v3023, %v3568
        %v3825 = vsel %vm3313, %v2319, %v3569
        %v3826 = vsel %vm3314, %v2321, %v3570
        %v3827 = vsel %vm3315, %v3025, %v3571
        %v3828 = vsel %vm3316, %v3027, %v3572
        %v3829 = vsel %vm3317, %v2325, %v3573
        %v3830 = vsel %vm3318, %v2327, %v3574
        %v3831 = vsel %vm3319, %v3031, %v3575
        %v3832 = vsel %vm3320, %v3033, %v3576
        %v3833 = vsel %vm3321, %v2329, %v3577
        %v3834 = vsel %vm3322, %v2331, %v3578
        %v3835 = vsel %vm3323, %v3035, %v3579
        %v3836 = vsel %vm3324, %v3037, %v3580
        %v3837 = vsel %vm3325, %v2335, %v3581
        %v3838 = vsel %vm3326, %v2337, %v3582
        %v3839 = vsel %vm3327, %v3041, %v3583
        %v3840 = vsel %vm3328, %v3043, %v3584
        %v3841 = vsel %vm3329, %v2339, %v3585
        %v3842 = vsel %vm3330, %v2341, %v3586
        %v3843 = vsel %vm3331, %v3045, %v3587
        %v3844 = vsel %vm3332, %v3047, %v3588
        %v3845 = vsel %vm3333, %v2345, %v3589
        %v3846 = vsel %vm3334, %v2347, %v3590
        %v3847 = vsel %vm3335, %v3051, %v3591
        %v3848 = vsel %vm3336, %v3053, %v3592
        %v3849 = vsel %vm3337, %v2349, %v3593
        %v3850 = vsel %vm3338, %v2351, %v3594
        %v3851 = vsel %vm3339, %v3055, %v3595
        %v3852 = vsel %vm3340, %v3057, %v3596
        %v3853 = vsel %vm3341, %v2355, %v3597
        %v3854 = vsel %vm3342, %v2357, %v3598
        %v3855 = vsel %vm3343, %v3061, %v3599
        %v3856 = vsel %vm3344, %v3063, %v3600
        %v3857 = vsel %vm3345, %v2359, %v3601
        %v3858 = vsel %vm3346, %v2361, %v3602
        %v3859 = vsel %vm3347, %v3065, %v3603
        %v3860 = vsel %vm3348, %v3067, %v3604
        %v3861 = vsel %vm3349, %v2365, %v3605
        %v3862 = vsel %vm3350, %v2367, %v3606
        %v3863 = vsel %vm3351, %v3071, %v3607
        %v3864 = vsel %vm3352, %v3073, %v3608
        %v3865 = vsel %vm3353, %v2369, %v3609
        %v3866 = vsel %vm3354, %v2371, %v3610
        %v3867 = vsel %vm3355, %v3075, %v3611
        %v3868 = vsel %vm3356, %v3077, %v3612
        %v3869 = vsel %vm3357, %v2375, %v3613
        %v3870 = vsel %vm3358, %v2377, %v3614
        %v3871 = vsel %vm3359, %v3081, %v3615
        %v3872 = vsel %vm3360, %v3083, %v3616
        %v3873 = vsel %vm3361, %v2379, %v3617
        %v3874 = vsel %vm3362, %v2381, %v3618
        %v3875 = vsel %vm3363, %v3085, %v3619
        %v3876 = vsel %vm3364, %v3087, %v3620
        %v3877 = vsel %vm3365, %v2385, %v3621
        %v3878 = vsel %vm3366, %v2387, %v3622
        %v3879 = vsel %vm3367, %v3091, %v3623
        %v3880 = vsel %vm3368, %v3093, %v3624
        %v3881 = vsel %vm3369, %v2389, %v3625
        %v3882 = vsel %vm3370, %v2391, %v3626
        %v3883 = vsel %vm3371, %v3095, %v3627
        %v3884 = vsel %vm3372, %v3097, %v3628
        %v3885 = vsel %vm3373, %v2395, %v3629
        %v3886 = vsel %vm3374, %v2397, %v3630
        %v3887 = vsel %vm3375, %v3101, %v3631
        %v3888 = vsel %vm3376, %v3103, %v3632
        %v3889 = vsel %vm3377, %v2399, %v3633
        %v3890 = vsel %vm3378, %v2401, %v3634
        %v3891 = vsel %vm3379, %v3105, %v3635
        %v3892 = vsel %vm3380, %v3107, %v3636
        %v3893 = vsel %vm3381, %v2405, %v3637
        %v3894 = vsel %vm3382, %v2407, %v3638
        %v3895 = vsel %vm3383, %v3111, %v3639
        %v3896 = vsel %vm3384, %v3113, %v3640
        %v3897 = vsel %vm3385, %v2409, %v3641
        %v3898 = vsel %vm3386, %v2411, %v3642
        %v3899 = vsel %vm3387, %v3115, %v3643
        %v3900 = vsel %vm3388, %v3117, %v3644
        %v3901 = vsel %vm3389, %v2415, %v3645
        %v3902 = vsel %vm3390, %v2417, %v3646
        %v3903 = vsel %vm3391, %v3121, %v3647
        %v3904 = vsel %vm3392, %v3123, %v3648
        %v3905 = vsel %vm3393, %v2419, %v3649
        %v3906 = vsel %vm3394, %v2421, %v3650
        %v3907 = vsel %vm3395, %v3125, %v3651
        %v3908 = vsel %vm3396, %v3127, %v3652
        %v3909 = vsel %vm3397, %v2425, %v3653
        %v3910 = vsel %vm3398, %v2427, %v3654
        %v3911 = vsel %vm3399, %v3131, %v3655
        %v3912 = vsel %vm3400, %v3133, %v3656
        %v3913 = vsel %vm3401, %v2429, %v3657
        %v3914 = vsel %vm3402, %v2431, %v3658
        %v3915 = vsel %vm3403, %v3135, %v3659
        %v3916 = vsel %vm3404, %v3137, %v3660
        %v3917 = vsel %vm3405, %v2435, %v3661
        %v3918 = vsel %vm3406, %v2437, %v3662
        %v3919 = vsel %vm3407, %v3141, %v3663
        %v3920 = vsel %vm3408, %v3143, %v3664
        %v3921 = vsel %vm3409, %v2439, %v3665
        %v3922 = vsel %vm3410, %v2441, %v3666
        %v3923 = vsel %vm3411, %v3145, %v3667
        %v3924 = vsel %vm3412, %v3147, %v3668
        %v3925 = vsel %vm3413, %v2445, %v3669
        %v3926 = vsel %vm3414, %v2447, %v3670
        %v3927 = vsel %vm3415, %v3151, %v3671
        %v3928 = vsel %vm3416, %v3153, %v3672
        %v3929 = vsel %vm3417, %v2449, %v3673
        %v3930 = vsel %vm3418, %v2451, %v3674
        %v3931 = vsel %vm3419, %v3155, %v3675
        %v3932 = vsel %vm3420, %v3157, %v3676
        %v3933 = vsel %vm3421, %v2455, %v3677
        %v3934 = vsel %vm3422, %v2457, %v3678
        %v3935 = vsel %vm3423, %v3161, %v3679
        %v3936 = vsel %vm3424, %v3163, %v3680
        %v3937 = vsel %vm3425, %v2459, %v3681
        %v3938 = vsel %vm3426, %v2461, %v3682
        %v3939 = vsel %vm3427, %v3165, %v3683
        %v3940 = vsel %vm3428, %v3167, %v3684
        %v3941 = vsel %vm3429, %v2465, %v3685
        %v3942 = vsel %vm3430, %v2467, %v3686
        %v3943 = vsel %vm3431, %v3171, %v3687
        %v3944 = vsel %vm3432, %v3173, %v3688
        %v3945 = vsel %vm3433, %v2469, %v3689
        %v3946 = vsel %vm3434, %v2471, %v3690
        %v3947 = vsel %vm3435, %v3175, %v3691
        %v3948 = vsel %vm3436, %v3177, %v3692
        %v3949 = vsel %vm3437, %v2475, %v3693
        %v3950 = vsel %vm3438, %v2477, %v3694
        %v3951 = vsel %vm3439, %v3181, %v3695
        %v3952 = vsel %vm3440, %v3183, %v3696
        %v3953 = vsel %vm3441, %v2479, %v3697
        %v3954 = vsel %vm3442, %v2481, %v3698
        %v3955 = vsel %vm3443, %v3185, %v3699
        %v3956 = vsel %vm3444, %v3187, %v3700
        %3957 = vst [vmem:[%s216] sm:$0xff] %v3701
        %3958 = vst [vmem:[%s216 + $0x8] sm:$0xff] %v3702
        %3959 = vst [vmem:[%s216 + $0x10] sm:$0xff] %v3703
        %3960 = vst [vmem:[%s216 + $0x18] sm:$0xff] %v3704
        %3961 = vst [vmem:[%s216 + $0x20] sm:$0xff] %v3705
        %3962 = vst [vmem:[%s216 + $0x28] sm:$0xff] %v3706
        %3963 = vst [vmem:[%s216 + $0x30] sm:$0xff] %v3707
        %3964 = vst [vmem:[%s216 + $0x38] sm:$0xff] %v3708
        %3965 = vst [vmem:[%s216 + $0x40] sm:$0xff] %v3709
        %3966 = vst [vmem:[%s216 + $0x48] sm:$0xff] %v3710
        %3967 = vst [vmem:[%s216 + $0x50] sm:$0xff] %v3711
        %3968 = vst [vmem:[%s216 + $0x58] sm:$0xff] %v3712
        %3969 = vst [vmem:[%s216 + $0x60] sm:$0xff] %v3713
        %3970 = vst [vmem:[%s216 + $0x68] sm:$0xff] %v3714
        %3971 = vst [vmem:[%s216 + $0x70] sm:$0xff] %v3715
        %3972 = vst [vmem:[%s216 + $0x78] sm:$0xff] %v3716
        %3973 = vst [vmem:[%s216 + $0x80] sm:$0xff] %v3717
        %3974 = vst [vmem:[%s216 + $0x88] sm:$0xff] %v3718
        %3975 = vst [vmem:[%s216 + $0x90] sm:$0xff] %v3719
        %3976 = vst [vmem:[%s216 + $0x98] sm:$0xff] %v3720
        %3977 = vst [vmem:[%s216 + $0xa0] sm:$0xff] %v3721
        %3978 = vst [vmem:[%s216 + $0xa8] sm:$0xff] %v3722
        %3979 = vst [vmem:[%s216 + $0xb0] sm:$0xff] %v3723
        %3980 = vst [vmem:[%s216 + $0xb8] sm:$0xff] %v3724
        %3981 = vst [vmem:[%s216 + $0xc0] sm:$0xff] %v3725
        %3982 = vst [vmem:[%s216 + $0xc8] sm:$0xff] %v3726
        %3983 = vst [vmem:[%s216 + $0xd0] sm:$0xff] %v3727
        %3984 = vst [vmem:[%s216 + $0xd8] sm:$0xff] %v3728
        %3985 = vst [vmem:[%s216 + $0xe0] sm:$0xff] %v3729
        %3986 = vst [vmem:[%s216 + $0xe8] sm:$0xff] %v3730
        %3987 = vst [vmem:[%s216 + $0xf0] sm:$0xff] %v3731
        %3988 = vst [vmem:[%s216 + $0xf8] sm:$0xff] %v3732
        %3989 = vst [vmem:[%s216 + $0x100] sm:$0xff] %v3733
        %3990 = vst [vmem:[%s216 + $0x108] sm:$0xff] %v3734
        %3991 = vst [vmem:[%s216 + $0x110] sm:$0xff] %v3735
        %3992 = vst [vmem:[%s216 + $0x118] sm:$0xff] %v3736
        %3993 = vst [vmem:[%s216 + $0x120] sm:$0xff] %v3737
        %3994 = vst [vmem:[%s216 + $0x128] sm:$0xff] %v3738
        %3995 = vst [vmem:[%s216 + $0x130] sm:$0xff] %v3739
        %3996 = vst [vmem:[%s216 + $0x138] sm:$0xff] %v3740
        %3997 = vst [vmem:[%s216 + $0x140] sm:$0xff] %v3741
        %3998 = vst [vmem:[%s216 + $0x148] sm:$0xff] %v3742
        %3999 = vst [vmem:[%s216 + $0x150] sm:$0xff] %v3743
        %4000 = vst [vmem:[%s216 + $0x158] sm:$0xff] %v3744
        %4001 = vst [vmem:[%s216 + $0x160] sm:$0xff] %v3745
        %4002 = vst [vmem:[%s216 + $0x168] sm:$0xff] %v3746
        %4003 = vst [vmem:[%s216 + $0x170] sm:$0xff] %v3747
        %4004 = vst [vmem:[%s216 + $0x178] sm:$0xff] %v3748
        %4005 = vst [vmem:[%s216 + $0x180] sm:$0xff] %v3749
        %4006 = vst [vmem:[%s216 + $0x188] sm:$0xff] %v3750
        %4007 = vst [vmem:[%s216 + $0x190] sm:$0xff] %v3751
        %4008 = vst [vmem:[%s216 + $0x198] sm:$0xff] %v3752
        %4009 = vst [vmem:[%s216 + $0x1a0] sm:$0xff] %v3753
        %4010 = vst [vmem:[%s216 + $0x1a8] sm:$0xff] %v3754
        %4011 = vst [vmem:[%s216 + $0x1b0] sm:$0xff] %v3755
        %4012 = vst [vmem:[%s216 + $0x1b8] sm:$0xff] %v3756
        %4013 = vst [vmem:[%s216 + $0x1c0] sm:$0xff] %v3757
        %4014 = vst [vmem:[%s216 + $0x1c8] sm:$0xff] %v3758
        %4015 = vst [vmem:[%s216 + $0x1d0] sm:$0xff] %v3759
        %4016 = vst [vmem:[%s216 + $0x1d8] sm:$0xff] %v3760
        %4017 = vst [vmem:[%s216 + $0x1e0] sm:$0xff] %v3761
        %4018 = vst [vmem:[%s216 + $0x1e8] sm:$0xff] %v3762
        %4019 = vst [vmem:[%s216 + $0x1f0] sm:$0xff] %v3763
        %4020 = vst [vmem:[%s216 + $0x1f8] sm:$0xff] %v3764
        %4021 = vst [vmem:[%s216 + $0x200] sm:$0xff] %v3765
        %4022 = vst [vmem:[%s216 + $0x208] sm:$0xff] %v3766
        %4023 = vst [vmem:[%s216 + $0x210] sm:$0xff] %v3767
        %4024 = vst [vmem:[%s216 + $0x218] sm:$0xff] %v3768
        %4025 = vst [vmem:[%s216 + $0x220] sm:$0xff] %v3769
        %4026 = vst [vmem:[%s216 + $0x228] sm:$0xff] %v3770
        %4027 = vst [vmem:[%s216 + $0x230] sm:$0xff] %v3771
        %4028 = vst [vmem:[%s216 + $0x238] sm:$0xff] %v3772
        %4029 = vst [vmem:[%s216 + $0x240] sm:$0xff] %v3773
        %4030 = vst [vmem:[%s216 + $0x248] sm:$0xff] %v3774
        %4031 = vst [vmem:[%s216 + $0x250] sm:$0xff] %v3775
        %4032 = vst [vmem:[%s216 + $0x258] sm:$0xff] %v3776
        %4033 = vst [vmem:[%s216 + $0x260] sm:$0xff] %v3777
        %4034 = vst [vmem:[%s216 + $0x268] sm:$0xff] %v3778
        %4035 = vst [vmem:[%s216 + $0x270] sm:$0xff] %v3779
        %4036 = vst [vmem:[%s216 + $0x278] sm:$0xff] %v3780
        %4037 = vst [vmem:[%s216 + $0x280] sm:$0xff] %v3781
        %4038 = vst [vmem:[%s216 + $0x288] sm:$0xff] %v3782
        %4039 = vst [vmem:[%s216 + $0x290] sm:$0xff] %v3783
        %4040 = vst [vmem:[%s216 + $0x298] sm:$0xff] %v3784
        %4041 = vst [vmem:[%s216 + $0x2a0] sm:$0xff] %v3785
        %4042 = vst [vmem:[%s216 + $0x2a8] sm:$0xff] %v3786
        %4043 = vst [vmem:[%s216 + $0x2b0] sm:$0xff] %v3787
        %4044 = vst [vmem:[%s216 + $0x2b8] sm:$0xff] %v3788
        %4045 = vst [vmem:[%s216 + $0x2c0] sm:$0xff] %v3789
        %4046 = vst [vmem:[%s216 + $0x2c8] sm:$0xff] %v3790
        %4047 = vst [vmem:[%s216 + $0x2d0] sm:$0xff] %v3791
        %4048 = vst [vmem:[%s216 + $0x2d8] sm:$0xff] %v3792
        %4049 = vst [vmem:[%s216 + $0x2e0] sm:$0xff] %v3793
        %4050 = vst [vmem:[%s216 + $0x2e8] sm:$0xff] %v3794
        %4051 = vst [vmem:[%s216 + $0x2f0] sm:$0xff] %v3795
        %4052 = vst [vmem:[%s216 + $0x2f8] sm:$0xff] %v3796
        %4053 = vst [vmem:[%s216 + $0x300] sm:$0xff] %v3797
        %4054 = vst [vmem:[%s216 + $0x308] sm:$0xff] %v3798
        %4055 = vst [vmem:[%s216 + $0x310] sm:$0xff] %v3799
        %4056 = vst [vmem:[%s216 + $0x318] sm:$0xff] %v3800
        %4057 = vst [vmem:[%s216 + $0x320] sm:$0xff] %v3801
        %4058 = vst [vmem:[%s216 + $0x328] sm:$0xff] %v3802
        %4059 = vst [vmem:[%s216 + $0x330] sm:$0xff] %v3803
        %4060 = vst [vmem:[%s216 + $0x338] sm:$0xff] %v3804
        %4061 = vst [vmem:[%s216 + $0x340] sm:$0xff] %v3805
        %4062 = vst [vmem:[%s216 + $0x348] sm:$0xff] %v3806
        %4063 = vst [vmem:[%s216 + $0x350] sm:$0xff] %v3807
        %4064 = vst [vmem:[%s216 + $0x358] sm:$0xff] %v3808
        %4065 = vst [vmem:[%s216 + $0x360] sm:$0xff] %v3809
        %4066 = vst [vmem:[%s216 + $0x368] sm:$0xff] %v3810
        %4067 = vst [vmem:[%s216 + $0x370] sm:$0xff] %v3811
        %4068 = vst [vmem:[%s216 + $0x378] sm:$0xff] %v3812
        %4069 = vst [vmem:[%s216 + $0x380] sm:$0xff] %v3813
        %4070 = vst [vmem:[%s216 + $0x388] sm:$0xff] %v3814
        %4071 = vst [vmem:[%s216 + $0x390] sm:$0xff] %v3815
        %4072 = vst [vmem:[%s216 + $0x398] sm:$0xff] %v3816
        %4073 = vst [vmem:[%s216 + $0x3a0] sm:$0xff] %v3817
        %4074 = vst [vmem:[%s216 + $0x3a8] sm:$0xff] %v3818
        %4075 = vst [vmem:[%s216 + $0x3b0] sm:$0xff] %v3819
        %4076 = vst [vmem:[%s216 + $0x3b8] sm:$0xff] %v3820
        %4077 = vst [vmem:[%s216 + $0x3c0] sm:$0xff] %v3821
        %4078 = vst [vmem:[%s216 + $0x3c8] sm:$0xff] %v3822
        %4079 = vst [vmem:[%s216 + $0x3d0] sm:$0xff] %v3823
        %4080 = vst [vmem:[%s216 + $0x3d8] sm:$0xff] %v3824
        %4081 = vst [vmem:[%s216 + $0x3e0] sm:$0xff] %v3825
        %4082 = vst [vmem:[%s216 + $0x3e8] sm:$0xff] %v3826
        %4083 = vst [vmem:[%s216 + $0x3f0] sm:$0xff] %v3827
        %4084 = vst [vmem:[%s216 + $0x3f8] sm:$0xff] %v3828
        %4085 = vst [vmem:[%s216 + $0x400] sm:$0xff] %v3829
        %4086 = vst [vmem:[%s216 + $0x408] sm:$0xff] %v3830
        %4087 = vst [vmem:[%s216 + $0x410] sm:$0xff] %v3831
        %4088 = vst [vmem:[%s216 + $0x418] sm:$0xff] %v3832
        %4089 = vst [vmem:[%s216 + $0x420] sm:$0xff] %v3833
        %4090 = vst [vmem:[%s216 + $0x428] sm:$0xff] %v3834
        %4091 = vst [vmem:[%s216 + $0x430] sm:$0xff] %v3835
        %4092 = vst [vmem:[%s216 + $0x438] sm:$0xff] %v3836
        %4093 = vst [vmem:[%s216 + $0x440] sm:$0xff] %v3837
        %4094 = vst [vmem:[%s216 + $0x448] sm:$0xff] %v3838
        %4095 = vst [vmem:[%s216 + $0x450] sm:$0xff] %v3839
        %4096 = vst [vmem:[%s216 + $0x458] sm:$0xff] %v3840
        %4097 = vst [vmem:[%s216 + $0x460] sm:$0xff] %v3841
        %4098 = vst [vmem:[%s216 + $0x468] sm:$0xff] %v3842
        %4099 = vst [vmem:[%s216 + $0x470] sm:$0xff] %v3843
        %4100 = vst [vmem:[%s216 + $0x478] sm:$0xff] %v3844
        %4101 = vst [vmem:[%s216 + $0x480] sm:$0xff] %v3845
        %4102 = vst [vmem:[%s216 + $0x488] sm:$0xff] %v3846
        %4103 = vst [vmem:[%s216 + $0x490] sm:$0xff] %v3847
        %4104 = vst [vmem:[%s216 + $0x498] sm:$0xff] %v3848
        %4105 = vst [vmem:[%s216 + $0x4a0] sm:$0xff] %v3849
        %4106 = vst [vmem:[%s216 + $0x4a8] sm:$0xff] %v3850
        %4107 = vst [vmem:[%s216 + $0x4b0] sm:$0xff] %v3851
        %4108 = vst [vmem:[%s216 + $0x4b8] sm:$0xff] %v3852
        %4109 = vst [vmem:[%s216 + $0x4c0] sm:$0xff] %v3853
        %4110 = vst [vmem:[%s216 + $0x4c8] sm:$0xff] %v3854
        %4111 = vst [vmem:[%s216 + $0x4d0] sm:$0xff] %v3855
        %4112 = vst [vmem:[%s216 + $0x4d8] sm:$0xff] %v3856
        %4113 = vst [vmem:[%s216 + $0x4e0] sm:$0xff] %v3857
        %4114 = vst [vmem:[%s216 + $0x4e8] sm:$0xff] %v3858
        %4115 = vst [vmem:[%s216 + $0x4f0] sm:$0xff] %v3859
        %4116 = vst [vmem:[%s216 + $0x4f8] sm:$0xff] %v3860
        %4117 = vst [vmem:[%s216 + $0x500] sm:$0xff] %v3861
        %4118 = vst [vmem:[%s216 + $0x508] sm:$0xff] %v3862
        %4119 = vst [vmem:[%s216 + $0x510] sm:$0xff] %v3863
        %4120 = vst [vmem:[%s216 + $0x518] sm:$0xff] %v3864
        %4121 = vst [vmem:[%s216 + $0x520] sm:$0xff] %v3865
        %4122 = vst [vmem:[%s216 + $0x528] sm:$0xff] %v3866
        %4123 = vst [vmem:[%s216 + $0x530] sm:$0xff] %v3867
        %4124 = vst [vmem:[%s216 + $0x538] sm:$0xff] %v3868
        %4125 = vst [vmem:[%s216 + $0x540] sm:$0xff] %v3869
        %4126 = vst [vmem:[%s216 + $0x548] sm:$0xff] %v3870
        %4127 = vst [vmem:[%s216 + $0x550] sm:$0xff] %v3871
        %4128 = vst [vmem:[%s216 + $0x558] sm:$0xff] %v3872
        %4129 = vst [vmem:[%s216 + $0x560] sm:$0xff] %v3873
        %4130 = vst [vmem:[%s216 + $0x568] sm:$0xff] %v3874
        %4131 = vst [vmem:[%s216 + $0x570] sm:$0xff] %v3875
        %4132 = vst [vmem:[%s216 + $0x578] sm:$0xff] %v3876
        %4133 = vst [vmem:[%s216 + $0x580] sm:$0xff] %v3877
        %4134 = vst [vmem:[%s216 + $0x588] sm:$0xff] %v3878
        %4135 = vst [vmem:[%s216 + $0x590] sm:$0xff] %v3879
        %4136 = vst [vmem:[%s216 + $0x598] sm:$0xff] %v3880
        %4137 = vst [vmem:[%s216 + $0x5a0] sm:$0xff] %v3881
        %4138 = vst [vmem:[%s216 + $0x5a8] sm:$0xff] %v3882
        %4139 = vst [vmem:[%s216 + $0x5b0] sm:$0xff] %v3883
        %4140 = vst [vmem:[%s216 + $0x5b8] sm:$0xff] %v3884
        %4141 = vst [vmem:[%s216 + $0x5c0] sm:$0xff] %v3885
        %4142 = vst [vmem:[%s216 + $0x5c8] sm:$0xff] %v3886
        %4143 = vst [vmem:[%s216 + $0x5d0] sm:$0xff] %v3887
        %4144 = vst [vmem:[%s216 + $0x5d8] sm:$0xff] %v3888
        %4145 = vst [vmem:[%s216 + $0x5e0] sm:$0xff] %v3889
        %4146 = vst [vmem:[%s216 + $0x5e8] sm:$0xff] %v3890
        %4147 = vst [vmem:[%s216 + $0x5f0] sm:$0xff] %v3891
        %4148 = vst [vmem:[%s216 + $0x5f8] sm:$0xff] %v3892
        %4149 = vst [vmem:[%s216 + $0x600] sm:$0xff] %v3893
        %4150 = vst [vmem:[%s216 + $0x608] sm:$0xff] %v3894
        %4151 = vst [vmem:[%s216 + $0x610] sm:$0xff] %v3895
        %4152 = vst [vmem:[%s216 + $0x618] sm:$0xff] %v3896
        %4153 = vst [vmem:[%s216 + $0x620] sm:$0xff] %v3897
        %4154 = vst [vmem:[%s216 + $0x628] sm:$0xff] %v3898
        %4155 = vst [vmem:[%s216 + $0x630] sm:$0xff] %v3899
        %4156 = vst [vmem:[%s216 + $0x638] sm:$0xff] %v3900
        %4157 = vst [vmem:[%s216 + $0x640] sm:$0xff] %v3901
        %4158 = vst [vmem:[%s216 + $0x648] sm:$0xff] %v3902
        %4159 = vst [vmem:[%s216 + $0x650] sm:$0xff] %v3903
        %4160 = vst [vmem:[%s216 + $0x658] sm:$0xff] %v3904
        %4161 = vst [vmem:[%s216 + $0x660] sm:$0xff] %v3905
        %4162 = vst [vmem:[%s216 + $0x668] sm:$0xff] %v3906
        %4163 = vst [vmem:[%s216 + $0x670] sm:$0xff] %v3907
        %4164 = vst [vmem:[%s216 + $0x678] sm:$0xff] %v3908
        %4165 = vst [vmem:[%s216 + $0x680] sm:$0xff] %v3909
        %4166 = vst [vmem:[%s216 + $0x688] sm:$0xff] %v3910
        %4167 = vst [vmem:[%s216 + $0x690] sm:$0xff] %v3911
        %4168 = vst [vmem:[%s216 + $0x698] sm:$0xff] %v3912
        %4169 = vst [vmem:[%s216 + $0x6a0] sm:$0xff] %v3913
        %4170 = vst [vmem:[%s216 + $0x6a8] sm:$0xff] %v3914
        %4171 = vst [vmem:[%s216 + $0x6b0] sm:$0xff] %v3915
        %4172 = vst [vmem:[%s216 + $0x6b8] sm:$0xff] %v3916
        %4173 = vst [vmem:[%s216 + $0x6c0] sm:$0xff] %v3917
        %4174 = vst [vmem:[%s216 + $0x6c8] sm:$0xff] %v3918
        %4175 = vst [vmem:[%s216 + $0x6d0] sm:$0xff] %v3919
        %4176 = vst [vmem:[%s216 + $0x6d8] sm:$0xff] %v3920
        %4177 = vst [vmem:[%s216 + $0x6e0] sm:$0xff] %v3921
        %4178 = vst [vmem:[%s216 + $0x6e8] sm:$0xff] %v3922
        %4179 = vst [vmem:[%s216 + $0x6f0] sm:$0xff] %v3923
        %4180 = vst [vmem:[%s216 + $0x6f8] sm:$0xff] %v3924
        %4181 = vst [vmem:[%s216 + $0x700] sm:$0xff] %v3925
        %4182 = vst [vmem:[%s216 + $0x708] sm:$0xff] %v3926
        %4183 = vst [vmem:[%s216 + $0x710] sm:$0xff] %v3927
        %4184 = vst [vmem:[%s216 + $0x718] sm:$0xff] %v3928
        %4185 = vst [vmem:[%s216 + $0x720] sm:$0xff] %v3929
        %4186 = vst [vmem:[%s216 + $0x728] sm:$0xff] %v3930
        %4187 = vst [vmem:[%s216 + $0x730] sm:$0xff] %v3931
        %4188 = vst [vmem:[%s216 + $0x738] sm:$0xff] %v3932
        %4189 = vst [vmem:[%s216 + $0x740] sm:$0xff] %v3933
        %4190 = vst [vmem:[%s216 + $0x748] sm:$0xff] %v3934
        %4191 = vst [vmem:[%s216 + $0x750] sm:$0xff] %v3935
        %4192 = vst [vmem:[%s216 + $0x758] sm:$0xff] %v3936
        %4193 = vst [vmem:[%s216 + $0x760] sm:$0xff] %v3937
        %4194 = vst [vmem:[%s216 + $0x768] sm:$0xff] %v3938
        %4195 = vst [vmem:[%s216 + $0x770] sm:$0xff] %v3939
        %4196 = vst [vmem:[%s216 + $0x778] sm:$0xff] %v3940
        %4197 = vst [vmem:[%s216 + $0x780] sm:$0xff] %v3941
        %4198 = vst [vmem:[%s216 + $0x788] sm:$0xff] %v3942
        %4199 = vst [vmem:[%s216 + $0x790] sm:$0xff] %v3943
        %4200 = vst [vmem:[%s216 + $0x798] sm:$0xff] %v3944
        %4201 = vst [vmem:[%s216 + $0x7a0] sm:$0xff] %v3945
        %4202 = vst [vmem:[%s216 + $0x7a8] sm:$0xff] %v3946
        %4203 = vst [vmem:[%s216 + $0x7b0] sm:$0xff] %v3947
        %4204 = vst [vmem:[%s216 + $0x7b8] sm:$0xff] %v3948
        %4205 = vst [vmem:[%s216 + $0x7c0] sm:$0xff] %v3949
        %4206 = vst [vmem:[%s216 + $0x7c8] sm:$0xff] %v3950
        %4207 = vst [vmem:[%s216 + $0x7d0] sm:$0xff] %v3951
        %4208 = vst [vmem:[%s216 + $0x7d8] sm:$0xff] %v3952
        %4209 = vst [vmem:[%s216 + $0x7e0] sm:$0xff] %v3953
        %4210 = vst [vmem:[%s216 + $0x7e8] sm:$0xff] %v3954
        %4211 = vst [vmem:[%s216 + $0x7f0] sm:$0xff] %v3955
        %4212 = vst [vmem:[%s216 + $0x7f8] sm:$0xff] %v3956
        %s4213 = sand.u32 %s97, 1
        %s4214 = scalar_lea.sflag [#allocation4], %s4213
        %s4215 = sand.u32 %s97, 1
        %s4216 = smul.addr %s4215, 2048
        %s4217 = scalar_lea.vmem [#allocation8], %s4216
        // Predicated region
        $region45: #{tpu_custom_call.1} parent=31 // pred_check
          %p4218 = pneg %p107
        $region46: #{tpu_custom_call.1} parent=31 // pred_check_branch
          %4220 = sbr.rel (%p4218) target = $region48
        $region47: #{tpu_custom_call.1} parent=31 // pred_region
          %s4221 = smul.u32 64, %s21
          %s4223 = ssub.s32 32768, 32768
          %4224 = vsyncadd %s4214, %s4223
          %s4225 = smul.addr %s4221, 4
          %s4226 = smul.addr %s4225, 128
          %s4227 = scalar_lea.hbm %s3, %s4226
          %s4228 = sshll.u32 %s4217, 4
          %s4229 = int_to_ptr.vmem [resolvable:$true] %s4228
          %4234 = dma.vmem_to_hbm [thread:$0]  %s4229, 32768, %s4227, %s4214, 512, 512, 32
        $region48: #{tpu_custom_call.1} parent=31 // pred_fallthru
          _
      $region32: #{tpu_custom_call.1} parent=5 // pred_fallthru
        _
      %p4235 = scmp.le.s32.totalorder 2, %s16
      // Predicated region
      $region49: #{tpu_custom_call.1} parent=5 // pred_check
        %p4236 = pneg %p4235
      $region50: #{tpu_custom_call.1} parent=5 // pred_check_branch
        %4238 = sbr.rel (%p4236) target = $region52
      $region51: #{tpu_custom_call.1} parent=5 // pred_region
        %s4239 = ssub.s32 %s16, 2
        // Predicated region
        $region53: #{tpu_custom_call.1} parent=51 // pred_check
          %p4240 = pneg %p113
        $region54: #{tpu_custom_call.1} parent=51 // pred_check_branch
          %4242 = sbr.rel (%p4240) target = $region56
        $region55: #{tpu_custom_call.1} parent=51 // pred_region
          %s4243 = sand.u32 %s98, 1
          %s4244 = scalar_lea.sflag [#allocation4], %s4243
          %s4245 = sand.u32 %s98, 1
          %s4246 = smul.addr %s4245, 2048
          %s4247 = scalar_lea.vmem [#allocation8], %s4246
          %4248 = dma.done %s4244, 32768
        $region56: #{tpu_custom_call.1} parent=51 // pred_fallthru
          _
      $region52: #{tpu_custom_call.1} parent=5 // pred_fallthru
        _
    $region6: #{tpu_custom_call.1} parent=1 // loop_footer
      %s20 = sadd.s32 1, %s16
    $region7: #{tpu_custom_call.1} parent=1 // loop_footer_branch
      %15 = sbr.rel target = $region3
    $region8: #{tpu_custom_call.1} parent=1 // loop_exit
      _
    %4249 = vsyncpa [#allocation3], 1
    %s4250 = scalar_lea.sflag [#allocation3], 1
    %4251 = vsyncpa %s4250, 1
    %4252 = vsyncpa [#allocation6], 1
    %4253 = vsyncpa [#allocation4], 1
    %s4254 = scalar_lea.sflag [#allocation4], 1
    %4255 = vsyncpa %s4254, 1

</llo_original>
